<compile_context>
chip_gen: v7x
topology: tpu7x:2x2x1
jax: 0.10.0
libtpu: 0.0.40
codegen_flags: <defaults>
</compile_context>

<pallas_src>
import functools

import jax
import jax.numpy as jnp
from jax.experimental import pallas as pl
from jax.experimental.pallas import tpu as pltpu


BN_EPS = 1e-5


def _round_up(x, m):
    return ((x + m - 1) // m) * m


def _conv_image(x_ref, w_ref, *, kh, kw, stride, oh, ow, c):
    """Implicit-GEMM conv for one image.

    x_ref : (1, Hq, S, Wq, S*C) bf16 block (stride-split padded NHWC image)
    w_ref : (KH*KW, C, OCp)     bf16 per-tap weight matrices
    returns (OH*OW, OCp) f32 accumulator.
    """
    xv = x_ref[0]                                     # (Hq, S, Wq, S*C)
    ocp = w_ref.shape[-1]
    acc = jnp.zeros((oh * ow, ocp), jnp.float32)
    for i in range(kh):                               # unrolled at trace time
        ai, bi = divmod(i, stride)
        for j in range(kw):
            aj, bj = divmod(j, stride)
            # tap[r, q, :] == x_padded[r*stride + i, q*stride + j, :]
            tap = xv[ai:ai + oh, bi, aj:aj + ow, bj * c:(bj + 1) * c]
            acc = acc + jnp.dot(tap.reshape(oh * ow, c),
                                w_ref[i * kw + j],
                                preferred_element_type=jnp.float32)
    return acc


def _stats_kernel(x_ref, w_ref, stats_ref, *, kh, kw, stride, oh, ow, c):
    """Pass 1: per-image packed BN partials (sum, centered 2nd moment)."""
    acc = _conv_image(x_ref, w_ref, kh=kh, kw=kw, stride=stride,
                      oh=oh, ow=ow, c=c)                        # (M, OCp) f32
    csum = jnp.sum(acc, axis=0, keepdims=True)                  # (1, OCp)
    d = acc - csum * (1.0 / (oh * ow))                          # center locally
    m2 = jnp.sum(d * d, axis=0, keepdims=True)                  # (1, OCp)
    stats_ref[0, 0:1, :] = csum
    stats_ref[0, 1:2, :] = m2


def _conv_bn_relu_kernel(x_ref, w_ref, scale_ref, shift_ref, o_ref, *,
                         kh, kw, stride, oh, ow, c, oc):
    """Pass 2: recompute conv, fuse y = scale*x + shift, ReLU, store NCHW tile."""
    acc = _conv_image(x_ref, w_ref, kh=kh, kw=kw, stride=stride,
                      oh=oh, ow=ow, c=c)                        # (M, OCp) f32
    y = jnp.maximum(acc * scale_ref[...] + shift_ref[...], 0.0)
    # Transpose in-kernel so the HBM write is a lane-dense (OC, OH*OW) block
    # and the final NCHW reshape outside is free (no XLA transpose pass).
    o_ref[0] = jnp.transpose(y[:, :oc])


@functools.partial(jax.jit, static_argnames=("kernel_size", "stride", "padding"))
def convolution_block(x_nchw, weight, bias, gamma, beta, *,
                      kernel_size, stride=1, padding=0):
    """Pallas implementation of ConvolutionBlock.forward (train-mode BN).

    x_nchw : (N, C, H, W) f32
    weight : (OC, C, KH, KW)  (PyTorch Conv2d layout)
    bias   : (OC,)  -- unused: cancels exactly under train-mode BatchNorm
    gamma, beta : (OC,) BatchNorm affine params
    returns (N, OC, OH, OW) f32
    """
    del bias  # exact no-op: batch-mean subtraction removes per-channel constants
    n, c, h, w = x_nchw.shape
    oc = weight.shape[0]
    kh = kw = kernel_size
    s = stride
    hp, wp = h + 2 * padding, w + 2 * padding
    oh = (hp - kh) // s + 1
    ow = (wp - kw) // s + 1
    ohw = oh * ow
    hq, wq = -(-hp // s), -(-wp // s)
    # 256-lane padding only when OC is large enough to use a 2x256 MXU tile.
    ocp = _round_up(oc, 256 if oc > 128 else 128)

    # ---- glue: single zero-padded NHWC copy, stride-split layout, bf16 ----
    x_nhwc = jnp.transpose(x_nchw, (0, 2, 3, 1))
    xp = jnp.pad(x_nhwc, ((0, 0),
                          (padding, hq * s - hp + padding),
                          (padding, wq * s - wp + padding),
                          (0, 0))).astype(jnp.bfloat16)
    x5 = xp.reshape(n, hq, s, wq, s * c)              # pure reshape (free)

    w_t = jnp.transpose(weight, (2, 3, 1, 0)).reshape(kh * kw, c, oc)
    w_t = jnp.pad(w_t, ((0, 0), (0, 0), (0, ocp - oc))).astype(jnp.bfloat16)

    # ---- VMEM budget (per grid step, double-buffered streaming blocks) ----
    x_blk = hq * s * wq * s * c * 2
    w_bytes = kh * kw * c * ocp * 2
    out_blk = oc * ohw * 4
    acc_bytes = ohw * ocp * 4
    step_bytes = 2 * (x_blk + w_bytes + out_blk + acc_bytes)
    vmem_limit = int(min(64 << 20, max(32 << 20, 2 * step_bytes)))
    cparams = pltpu.CompilerParams(dimension_semantics=("parallel",),
                                   vmem_limit_bytes=vmem_limit)
    flops = 2 * n * ohw * kh * kw * c * oc
    in_bytes = x5.size * 2 + w_t.size * 2

    # ---- pass 1: per-image packed BN partials (implicit-GEMM conv) ----
    stats = pl.pallas_call(
        functools.partial(_stats_kernel, kh=kh, kw=kw, stride=s,
                          oh=oh, ow=ow, c=c),
        out_shape=jax.ShapeDtypeStruct((n, 2, ocp), jnp.float32),
        grid=(n,),
        in_specs=[
            pl.BlockSpec((1, hq, s, wq, s * c), lambda i: (i, 0, 0, 0, 0)),
            pl.BlockSpec((kh * kw, c, ocp), lambda i: (0, 0, 0)),
        ],
        out_specs=pl.BlockSpec((1, 2, ocp), lambda i: (i, 0, 0)),
        compiler_params=cparams,
        cost_estimate=pl.CostEstimate(
            flops=flops, transcendentals=0,
            bytes_accessed=in_bytes + n * 2 * ocp * 4),
    )(x5, w_t)

    # ---- glue: combine per-image moments (Chan), fold BN into scale/shift ----
    m_img = float(ohw)
    m_tot = float(n * ohw)
    sum_n = stats[:, 0, :]                              # (N, OCp)
    m2_n = stats[:, 1, :]                               # (N, OCp)
    mean = jnp.sum(sum_n, axis=0) / m_tot               # (OCp,)
    mean_n = sum_n / m_img
    m2 = jnp.sum(m2_n, axis=0) + m_img * jnp.sum((mean_n - mean) ** 2, axis=0)
    var = m2 / m_tot                                    # biased (train-mode BN)
    inv_std = jax.lax.rsqrt(var + BN_EPS)
    gamma_p = jnp.pad(gamma.astype(jnp.float32), (0, ocp - oc))
    beta_p = jnp.pad(beta.astype(jnp.float32), (0, ocp - oc))
    scale = (gamma_p * inv_std).reshape(1, ocp)
    shift = (beta_p - mean * gamma_p * inv_std).reshape(1, ocp)

    # ---- pass 2: recompute conv, fused scale/shift + ReLU, NCHW store ----
    out = pl.pallas_call(
        functools.partial(_conv_bn_relu_kernel, kh=kh, kw=kw, stride=s,
                          oh=oh, ow=ow, c=c, oc=oc),
        out_shape=jax.ShapeDtypeStruct((n, oc, ohw), jnp.float32),
        grid=(n,),
        in_specs=[
            pl.BlockSpec((1, hq, s, wq, s * c), lambda i: (i, 0, 0, 0, 0)),
            pl.BlockSpec((kh * kw, c, ocp), lambda i: (0, 0, 0)),
            pl.BlockSpec((1, ocp), lambda i: (0, 0)),
            pl.BlockSpec((1, ocp), lambda i: (0, 0)),
        ],
        out_specs=pl.BlockSpec((1, oc, ohw), lambda i: (i, 0, 0)),
        compiler_params=cparams,
        cost_estimate=pl.CostEstimate(
            flops=flops, transcendentals=0,
            bytes_accessed=in_bytes + 2 * ocp * 4 + n * oc * ohw * 4),
    )(x5, w_t, scale, shift)

    return out.reshape(n, oc, oh, ow)                   # free reshape (NCHW)


def _reference(x, weight, bias, gamma, beta, *, stride, padding,
               conv_dtype=jnp.float32):
    """Pure-JAX reference: conv + train-mode BN + ReLU."""
    conv = jax.lax.conv_general_dilated(
        x.astype(conv_dtype), weight.astype(conv_dtype),
        window_strides=(stride, stride),
        padding=[(padding, padding), (padding, padding)],
        dimension_numbers=("NCHW", "OIHW", "NCHW"),
        preferred_element_type=jnp.float32)
    conv = conv + bias[None, :, None, None]
    mean = jnp.mean(conv, axis=(0, 2, 3), keepdims=True)
    var = jnp.mean((conv - mean) ** 2, axis=(0, 2, 3), keepdims=True)
    y = (conv - mean) * jax.lax.rsqrt(var + BN_EPS)
    y = y * gamma[None, :, None, None] + beta[None, :, None, None]
    return jnp.maximum(y, 0.0)


if __name__ == "__main__":
    # ConvolutionBlock(in_channels=4, out_channels=8, kernel_size=3, padding=1)
    N, C_IN, H, W = 2, 4, 16, 16
    C_OUT, KSIZE = 8, 3

    key = jax.random.PRNGKey(0)
    kx, kw_, kb = jax.random.split(key, 3)

    x = jax.random.normal(kx, (N, C_IN, H, W), dtype=jnp.float32)
    fan_in = C_IN * KSIZE * KSIZE
    bound = 1.0 / (fan_in ** 0.5)
    weight = jax.random.uniform(kw_, (C_OUT, C_IN, KSIZE, KSIZE),
                                minval=-bound, maxval=bound, dtype=jnp.float32)
    bias = jax.random.uniform(kb, (C_OUT,), minval=-bound, maxval=bound,
                              dtype=jnp.float32)
    gamma = jnp.ones((C_OUT,), jnp.float32)    # BatchNorm2d init: weight=1
    beta = jnp.zeros((C_OUT,), jnp.float32)    # BatchNorm2d init: bias=0

    for stride, padding in ((1, 1), (2, 1)):
        out = convolution_block(x, weight, bias, gamma, beta,
                                kernel_size=KSIZE, stride=stride,
                                padding=padding)
        out = jax.block_until_ready(out)
        oh = (H + 2 * padding - KSIZE) // stride + 1
        assert out.shape == (N, C_OUT, oh, oh), out.shape

        # Tight check vs a reference that also does the conv with bf16 operands
        # (apples-to-apples with the bf16 MXU inputs), plus a looser sanity
        # check vs pure f32.
        ref_bf16 = _reference(x, weight, bias, gamma, beta,
                              stride=stride, padding=padding,
                              conv_dtype=jnp.bfloat16)
        assert jnp.allclose(out, ref_bf16, atol=2e-3, rtol=2e-3), \
            f"mismatch vs bf16 ref (stride={stride})"
        ref_f32 = _reference(x, weight, bias, gamma, beta,
                             stride=stride, padding=padding)
        assert jnp.allclose(out, ref_f32, atol=5e-2, rtol=5e-2), \
            f"mismatch vs f32 ref (stride={stride})"

    print("KERNEL_OK")
</pallas_src>

<mosaic_0001>
module attributes {stable_mosaic.version = 11 : i64} {
  func.func @_stats_kernel(%arg0: i32, %arg1: memref<1x18x1x18x4xbf16, #tpu.memory_space<vmem>>, %arg2: memref<9x4x128xbf16, #tpu.memory_space<vmem>>, %arg3: memref<1x2x128xf32, #tpu.memory_space<vmem>>) attributes {dimension_semantics = [#tpu.dimension_semantics<parallel>], iteration_bounds = array<i64: 2>, scalar_prefetch = 0 : i64, scratch_operands = 0 : i64, tpu.core_type = #tpu.core_type<tc>, window_params = [{transform_indices = @transform_0, window_bounds = array<i64: 1, 18, 1, 18, 4>}, {pipeline_mode = #tpu.pipeline_mode<synchronous>, transform_indices = @transform_1, window_bounds = array<i64: 9, 4, 128>}, {transform_indices = @transform_2, window_bounds = array<i64: 1, 2, 128>}]} {
    %c0 = arith.constant 0 : index
    %c0_0 = arith.constant 0 : index
    %c0_1 = arith.constant 0 : index
    %c0_2 = arith.constant 0 : index
    %c0_3 = arith.constant 0 : index
    %0 = vector.load %arg1[%c0, %c0_0, %c0_1, %c0_2, %c0_3] : memref<1x18x1x18x4xbf16, #tpu.memory_space<vmem>>, vector<1x18x1x18x4xbf16>
    %1 = vector.shape_cast %0 : vector<1x18x1x18x4xbf16> to vector<18x1x18x4xbf16>
    %cst = arith.constant 0.000000e+00 : f32
    %2 = vector.broadcast %cst : f32 to vector<256x128xf32>
    %3 = vector.extract_strided_slice %1 {offsets = [0, 0, 0, 0], sizes = [16, 1, 16, 4], strides = [1, 1, 1, 1]} : vector<18x1x18x4xbf16> to vector<16x1x16x4xbf16>
    %4 = vector.shape_cast %3 : vector<16x1x16x4xbf16> to vector<16x16x4xbf16>
    %5 = vector.shape_cast %4 : vector<16x16x4xbf16> to vector<256x4xbf16>
    %c0_4 = arith.constant 0 : index
    %c0_5 = arith.constant 0 : index
    %c0_6 = arith.constant 0 : index
    %6 = vector.load %arg2[%c0_4, %c0_5, %c0_6] : memref<9x4x128xbf16, #tpu.memory_space<vmem>>, vector<1x4x128xbf16>
    %7 = vector.shape_cast %6 : vector<1x4x128xbf16> to vector<4x128xbf16>
    %cst_7 = arith.constant dense<0.000000e+00> : vector<256x128xf32>
    %8 = tpu.matmul %5, %7, %cst_7 {dimension_numbers = #tpu.dot_dimension_numbers<[1], [0], [0], [1], [0, 0, 1, 1], [], []>} : vector<256x4xbf16>, vector<4x128xbf16>, vector<256x128xf32> -> vector<256x128xf32>
    %9 = arith.addf %2, %8 : vector<256x128xf32>
    %10 = vector.extract_strided_slice %1 {offsets = [0, 0, 1, 0], sizes = [16, 1, 16, 4], strides = [1, 1, 1, 1]} : vector<18x1x18x4xbf16> to vector<16x1x16x4xbf16>
    %11 = vector.shape_cast %10 : vector<16x1x16x4xbf16> to vector<16x16x4xbf16>
    %12 = vector.shape_cast %11 : vector<16x16x4xbf16> to vector<256x4xbf16>
    %c1 = arith.constant 1 : index
    %c0_8 = arith.constant 0 : index
    %c0_9 = arith.constant 0 : index
    %13 = vector.load %arg2[%c1, %c0_8, %c0_9] : memref<9x4x128xbf16, #tpu.memory_space<vmem>>, vector<1x4x128xbf16>
    %14 = vector.shape_cast %13 : vector<1x4x128xbf16> to vector<4x128xbf16>
    %cst_10 = arith.constant dense<0.000000e+00> : vector<256x128xf32>
    %15 = tpu.matmul %12, %14, %cst_10 {dimension_numbers = #tpu.dot_dimension_numbers<[1], [0], [0], [1], [0, 0, 1, 1], [], []>} : vector<256x4xbf16>, vector<4x128xbf16>, vector<256x128xf32> -> vector<256x128xf32>
    %16 = arith.addf %9, %15 : vector<256x128xf32>
    %17 = vector.extract_strided_slice %1 {offsets = [0, 0, 2, 0], sizes = [16, 1, 16, 4], strides = [1, 1, 1, 1]} : vector<18x1x18x4xbf16> to vector<16x1x16x4xbf16>
    %18 = vector.shape_cast %17 : vector<16x1x16x4xbf16> to vector<16x16x4xbf16>
    %19 = vector.shape_cast %18 : vector<16x16x4xbf16> to vector<256x4xbf16>
    %c2 = arith.constant 2 : index
    %c0_11 = arith.constant 0 : index
    %c0_12 = arith.constant 0 : index
    %20 = vector.load %arg2[%c2, %c0_11, %c0_12] : memref<9x4x128xbf16, #tpu.memory_space<vmem>>, vector<1x4x128xbf16>
    %21 = vector.shape_cast %20 : vector<1x4x128xbf16> to vector<4x128xbf16>
    %cst_13 = arith.constant dense<0.000000e+00> : vector<256x128xf32>
    %22 = tpu.matmul %19, %21, %cst_13 {dimension_numbers = #tpu.dot_dimension_numbers<[1], [0], [0], [1], [0, 0, 1, 1], [], []>} : vector<256x4xbf16>, vector<4x128xbf16>, vector<256x128xf32> -> vector<256x128xf32>
    %23 = arith.addf %16, %22 : vector<256x128xf32>
    %24 = vector.extract_strided_slice %1 {offsets = [1, 0, 0, 0], sizes = [16, 1, 16, 4], strides = [1, 1, 1, 1]} : vector<18x1x18x4xbf16> to vector<16x1x16x4xbf16>
    %25 = vector.shape_cast %24 : vector<16x1x16x4xbf16> to vector<16x16x4xbf16>
    %26 = vector.shape_cast %25 : vector<16x16x4xbf16> to vector<256x4xbf16>
    %c3 = arith.constant 3 : index
    %c0_14 = arith.constant 0 : index
    %c0_15 = arith.constant 0 : index
    %27 = vector.load %arg2[%c3, %c0_14, %c0_15] : memref<9x4x128xbf16, #tpu.memory_space<vmem>>, vector<1x4x128xbf16>
    %28 = vector.shape_cast %27 : vector<1x4x128xbf16> to vector<4x128xbf16>
    %cst_16 = arith.constant dense<0.000000e+00> : vector<256x128xf32>
    %29 = tpu.matmul %26, %28, %cst_16 {dimension_numbers = #tpu.dot_dimension_numbers<[1], [0], [0], [1], [0, 0, 1, 1], [], []>} : vector<256x4xbf16>, vector<4x128xbf16>, vector<256x128xf32> -> vector<256x128xf32>
    %30 = arith.addf %23, %29 : vector<256x128xf32>
    %31 = vector.extract_strided_slice %1 {offsets = [1, 0, 1, 0], sizes = [16, 1, 16, 4], strides = [1, 1, 1, 1]} : vector<18x1x18x4xbf16> to vector<16x1x16x4xbf16>
    %32 = vector.shape_cast %31 : vector<16x1x16x4xbf16> to vector<16x16x4xbf16>
    %33 = vector.shape_cast %32 : vector<16x16x4xbf16> to vector<256x4xbf16>
    %c4 = arith.constant 4 : index
    %c0_17 = arith.constant 0 : index
    %c0_18 = arith.constant 0 : index
    %34 = vector.load %arg2[%c4, %c0_17, %c0_18] : memref<9x4x128xbf16, #tpu.memory_space<vmem>>, vector<1x4x128xbf16>
    %35 = vector.shape_cast %34 : vector<1x4x128xbf16> to vector<4x128xbf16>
    %cst_19 = arith.constant dense<0.000000e+00> : vector<256x128xf32>
    %36 = tpu.matmul %33, %35, %cst_19 {dimension_numbers = #tpu.dot_dimension_numbers<[1], [0], [0], [1], [0, 0, 1, 1], [], []>} : vector<256x4xbf16>, vector<4x128xbf16>, vector<256x128xf32> -> vector<256x128xf32>
    %37 = arith.addf %30, %36 : vector<256x128xf32>
    %38 = vector.extract_strided_slice %1 {offsets = [1, 0, 2, 0], sizes = [16, 1, 16, 4], strides = [1, 1, 1, 1]} : vector<18x1x18x4xbf16> to vector<16x1x16x4xbf16>
    %39 = vector.shape_cast %38 : vector<16x1x16x4xbf16> to vector<16x16x4xbf16>
    %40 = vector.shape_cast %39 : vector<16x16x4xbf16> to vector<256x4xbf16>
    %c5 = arith.constant 5 : index
    %c0_20 = arith.constant 0 : index
    %c0_21 = arith.constant 0 : index
    %41 = vector.load %arg2[%c5, %c0_20, %c0_21] : memref<9x4x128xbf16, #tpu.memory_space<vmem>>, vector<1x4x128xbf16>
    %42 = vector.shape_cast %41 : vector<1x4x128xbf16> to vector<4x128xbf16>
    %cst_22 = arith.constant dense<0.000000e+00> : vector<256x128xf32>
    %43 = tpu.matmul %40, %42, %cst_22 {dimension_numbers = #tpu.dot_dimension_numbers<[1], [0], [0], [1], [0, 0, 1, 1], [], []>} : vector<256x4xbf16>, vector<4x128xbf16>, vector<256x128xf32> -> vector<256x128xf32>
    %44 = arith.addf %37, %43 : vector<256x128xf32>
    %45 = vector.extract_strided_slice %1 {offsets = [2, 0, 0, 0], sizes = [16, 1, 16, 4], strides = [1, 1, 1, 1]} : vector<18x1x18x4xbf16> to vector<16x1x16x4xbf16>
    %46 = vector.shape_cast %45 : vector<16x1x16x4xbf16> to vector<16x16x4xbf16>
    %47 = vector.shape_cast %46 : vector<16x16x4xbf16> to vector<256x4xbf16>
    %c6 = arith.constant 6 : index
    %c0_23 = arith.constant 0 : index
    %c0_24 = arith.constant 0 : index
    %48 = vector.load %arg2[%c6, %c0_23, %c0_24] : memref<9x4x128xbf16, #tpu.memory_space<vmem>>, vector<1x4x128xbf16>
    %49 = vector.shape_cast %48 : vector<1x4x128xbf16> to vector<4x128xbf16>
    %cst_25 = arith.constant dense<0.000000e+00> : vector<256x128xf32>
    %50 = tpu.matmul %47, %49, %cst_25 {dimension_numbers = #tpu.dot_dimension_numbers<[1], [0], [0], [1], [0, 0, 1, 1], [], []>} : vector<256x4xbf16>, vector<4x128xbf16>, vector<256x128xf32> -> vector<256x128xf32>
    %51 = arith.addf %44, %50 : vector<256x128xf32>
    %52 = vector.extract_strided_slice %1 {offsets = [2, 0, 1, 0], sizes = [16, 1, 16, 4], strides = [1, 1, 1, 1]} : vector<18x1x18x4xbf16> to vector<16x1x16x4xbf16>
    %53 = vector.shape_cast %52 : vector<16x1x16x4xbf16> to vector<16x16x4xbf16>
    %54 = vector.shape_cast %53 : vector<16x16x4xbf16> to vector<256x4xbf16>
    %c7 = arith.constant 7 : index
    %c0_26 = arith.constant 0 : index
    %c0_27 = arith.constant 0 : index
    %55 = vector.load %arg2[%c7, %c0_26, %c0_27] : memref<9x4x128xbf16, #tpu.memory_space<vmem>>, vector<1x4x128xbf16>
    %56 = vector.shape_cast %55 : vector<1x4x128xbf16> to vector<4x128xbf16>
    %cst_28 = arith.constant dense<0.000000e+00> : vector<256x128xf32>
    %57 = tpu.matmul %54, %56, %cst_28 {dimension_numbers = #tpu.dot_dimension_numbers<[1], [0], [0], [1], [0, 0, 1, 1], [], []>} : vector<256x4xbf16>, vector<4x128xbf16>, vector<256x128xf32> -> vector<256x128xf32>
    %58 = arith.addf %51, %57 : vector<256x128xf32>
    %59 = vector.extract_strided_slice %1 {offsets = [2, 0, 2, 0], sizes = [16, 1, 16, 4], strides = [1, 1, 1, 1]} : vector<18x1x18x4xbf16> to vector<16x1x16x4xbf16>
    %60 = vector.shape_cast %59 : vector<16x1x16x4xbf16> to vector<16x16x4xbf16>
    %61 = vector.shape_cast %60 : vector<16x16x4xbf16> to vector<256x4xbf16>
    %c8 = arith.constant 8 : index
    %c0_29 = arith.constant 0 : index
    %c0_30 = arith.constant 0 : index
    %62 = vector.load %arg2[%c8, %c0_29, %c0_30] : memref<9x4x128xbf16, #tpu.memory_space<vmem>>, vector<1x4x128xbf16>
    %63 = vector.shape_cast %62 : vector<1x4x128xbf16> to vector<4x128xbf16>
    %cst_31 = arith.constant dense<0.000000e+00> : vector<256x128xf32>
    %64 = tpu.matmul %61, %63, %cst_31 {dimension_numbers = #tpu.dot_dimension_numbers<[1], [0], [0], [1], [0, 0, 1, 1], [], []>} : vector<256x4xbf16>, vector<4x128xbf16>, vector<256x128xf32> -> vector<256x128xf32>
    %65 = arith.addf %58, %64 : vector<256x128xf32>
    %cst_32 = arith.constant dense<0.000000e+00> : vector<128xf32>
    %66 = vector.multi_reduction <add>, %65, %cst_32 [0] : vector<256x128xf32> to vector<128xf32>
    %67 = vector.shape_cast %66 : vector<128xf32> to vector<1x128xf32>
    %cst_33 = arith.constant 3.906250e-03 : f32
    %68 = vector.broadcast %cst_33 : f32 to vector<1x128xf32>
    %69 = arith.mulf %67, %68 : vector<1x128xf32>
    %70 = vector.broadcast %69 : vector<1x128xf32> to vector<256x128xf32>
    %71 = arith.subf %65, %70 : vector<256x128xf32>
    %72 = arith.mulf %71, %71 : vector<256x128xf32>
    %cst_34 = arith.constant dense<0.000000e+00> : vector<128xf32>
    %73 = vector.multi_reduction <add>, %72, %cst_34 [0] : vector<256x128xf32> to vector<128xf32>
    %74 = vector.shape_cast %73 : vector<128xf32> to vector<1x128xf32>
    %c0_35 = arith.constant 0 : index
    %c0_36 = arith.constant 0 : index
    %c0_37 = arith.constant 0 : index
    %75 = vector.load %arg3[%c0_35, %c0_36, %c0_37] : memref<1x2x128xf32, #tpu.memory_space<vmem>>, vector<1x1x128xf32>
    %76 = vector.shape_cast %75 : vector<1x1x128xf32> to vector<1x128xf32>
    %77 = vector.shape_cast %67 : vector<1x128xf32> to vector<1x1x128xf32>
    tpu.vector_store %arg3[%c0_35, %c0_36, %c0_37], %77 {strides = array<i32>} : memref<1x2x128xf32, #tpu.memory_space<vmem>>, vector<1x1x128xf32>,
    %c0_38 = arith.constant 0 : index
    %c1_39 = arith.constant 1 : index
    %c0_40 = arith.constant 0 : index
    %78 = vector.load %arg3[%c0_38, %c1_39, %c0_40] : memref<1x2x128xf32, #tpu.memory_space<vmem>>, vector<1x1x128xf32>
    %79 = vector.shape_cast %78 : vector<1x1x128xf32> to vector<1x128xf32>
    %80 = vector.shape_cast %74 : vector<1x128xf32> to vector<1x1x128xf32>
    tpu.vector_store %arg3[%c0_38, %c1_39, %c0_40], %80 {strides = array<i32>} : memref<1x2x128xf32, #tpu.memory_space<vmem>>, vector<1x1x128xf32>,
    return
  }
  func.func @transform_0(%arg0: i32) -> (i32, i32, i32, i32, i32) {
    %c0_i32 = arith.constant 0 : i32
    %c0_i32_0 = arith.constant 0 : i32
    %c0_i32_1 = arith.constant 0 : i32
    %c0_i32_2 = arith.constant 0 : i32
    %c0_i32_3 = arith.constant 0 : i32
    return %arg0, %c0_i32, %c0_i32_0, %c0_i32_1, %c0_i32_2 : i32, i32, i32, i32, i32
  }
  func.func @transform_1(%arg0: i32) -> (i32, i32, i32) {
    %c0_i32 = arith.constant 0 : i32
    %c0_i32_0 = arith.constant 0 : i32
    %c0_i32_1 = arith.constant 0 : i32
    %c0_i32_2 = arith.constant 0 : i32
    return %c0_i32, %c0_i32_0, %c0_i32_1 : i32, i32, i32
  }
  func.func @transform_2(%arg0: i32) -> (i32, i32, i32) {
    %c0_i32 = arith.constant 0 : i32
    %c0_i32_0 = arith.constant 0 : i32
    %c0_i32_1 = arith.constant 0 : i32
    return %arg0, %c0_i32, %c0_i32_0 : i32, i32, i32
  }
}

module attributes {stable_mosaic.version = 11 : i64} {
  func.func @_conv_bn_relu_kernel(%arg0: i32, %arg1: memref<1x18x1x18x4xbf16, #tpu.memory_space<vmem>>, %arg2: memref<9x4x128xbf16, #tpu.memory_space<vmem>>, %arg3: memref<1x128xf32, #tpu.memory_space<vmem>>, %arg4: memref<1x128xf32, #tpu.memory_space<vmem>>, %arg5: memref<1x8x256xf32, #tpu.memory_space<vmem>>) attributes {dimension_semantics = [#tpu.dimension_semantics<parallel>], iteration_bounds = array<i64: 2>, scalar_prefetch = 0 : i64, scratch_operands = 0 : i64, tpu.core_type = #tpu.core_type<tc>, window_params = [{transform_indices = @transform_0, window_bounds = array<i64: 1, 18, 1, 18, 4>}, {pipeline_mode = #tpu.pipeline_mode<synchronous>, transform_indices = @transform_1, window_bounds = array<i64: 9, 4, 128>}, {pipeline_mode = #tpu.pipeline_mode<synchronous>, transform_indices = @transform_2, window_bounds = array<i64: 1, 128>}, {pipeline_mode = #tpu.pipeline_mode<synchronous>, transform_indices = @transform_3, window_bounds = array<i64: 1, 128>}, {transform_indices = @transform_4, window_bounds = array<i64: 1, 8, 256>}]} {
    %c0 = arith.constant 0 : index
    %c0_0 = arith.constant 0 : index
    %c0_1 = arith.constant 0 : index
    %c0_2 = arith.constant 0 : index
    %c0_3 = arith.constant 0 : index
    %0 = vector.load %arg1[%c0, %c0_0, %c0_1, %c0_2, %c0_3] : memref<1x18x1x18x4xbf16, #tpu.memory_space<vmem>>, vector<1x18x1x18x4xbf16>
    %1 = vector.shape_cast %0 : vector<1x18x1x18x4xbf16> to vector<18x1x18x4xbf16>
    %cst = arith.constant 0.000000e+00 : f32
    %2 = vector.broadcast %cst : f32 to vector<256x128xf32>
    %3 = vector.extract_strided_slice %1 {offsets = [0, 0, 0, 0], sizes = [16, 1, 16, 4], strides = [1, 1, 1, 1]} : vector<18x1x18x4xbf16> to vector<16x1x16x4xbf16>
    %4 = vector.shape_cast %3 : vector<16x1x16x4xbf16> to vector<16x16x4xbf16>
    %5 = vector.shape_cast %4 : vector<16x16x4xbf16> to vector<256x4xbf16>
    %c0_4 = arith.constant 0 : index
    %c0_5 = arith.constant 0 : index
    %c0_6 = arith.constant 0 : index
    %6 = vector.load %arg2[%c0_4, %c0_5, %c0_6] : memref<9x4x128xbf16, #tpu.memory_space<vmem>>, vector<1x4x128xbf16>
    %7 = vector.shape_cast %6 : vector<1x4x128xbf16> to vector<4x128xbf16>
    %cst_7 = arith.constant dense<0.000000e+00> : vector<256x128xf32>
    %8 = tpu.matmul %5, %7, %cst_7 {dimension_numbers = #tpu.dot_dimension_numbers<[1], [0], [0], [1], [0, 0, 1, 1], [], []>} : vector<256x4xbf16>, vector<4x128xbf16>, vector<256x128xf32> -> vector<256x128xf32>
    %9 = arith.addf %2, %8 : vector<256x128xf32>
    %10 = vector.extract_strided_slice %1 {offsets = [0, 0, 1, 0], sizes = [16, 1, 16, 4], strides = [1, 1, 1, 1]} : vector<18x1x18x4xbf16> to vector<16x1x16x4xbf16>
    %11 = vector.shape_cast %10 : vector<16x1x16x4xbf16> to vector<16x16x4xbf16>
    %12 = vector.shape_cast %11 : vector<16x16x4xbf16> to vector<256x4xbf16>
    %c1 = arith.constant 1 : index
    %c0_8 = arith.constant 0 : index
    %c0_9 = arith.constant 0 : index
    %13 = vector.load %arg2[%c1, %c0_8, %c0_9] : memref<9x4x128xbf16, #tpu.memory_space<vmem>>, vector<1x4x128xbf16>
    %14 = vector.shape_cast %13 : vector<1x4x128xbf16> to vector<4x128xbf16>
    %cst_10 = arith.constant dense<0.000000e+00> : vector<256x128xf32>
    %15 = tpu.matmul %12, %14, %cst_10 {dimension_numbers = #tpu.dot_dimension_numbers<[1], [0], [0], [1], [0, 0, 1, 1], [], []>} : vector<256x4xbf16>, vector<4x128xbf16>, vector<256x128xf32> -> vector<256x128xf32>
    %16 = arith.addf %9, %15 : vector<256x128xf32>
    %17 = vector.extract_strided_slice %1 {offsets = [0, 0, 2, 0], sizes = [16, 1, 16, 4], strides = [1, 1, 1, 1]} : vector<18x1x18x4xbf16> to vector<16x1x16x4xbf16>
    %18 = vector.shape_cast %17 : vector<16x1x16x4xbf16> to vector<16x16x4xbf16>
    %19 = vector.shape_cast %18 : vector<16x16x4xbf16> to vector<256x4xbf16>
    %c2 = arith.constant 2 : index
    %c0_11 = arith.constant 0 : index
    %c0_12 = arith.constant 0 : index
    %20 = vector.load %arg2[%c2, %c0_11, %c0_12] : memref<9x4x128xbf16, #tpu.memory_space<vmem>>, vector<1x4x128xbf16>
    %21 = vector.shape_cast %20 : vector<1x4x128xbf16> to vector<4x128xbf16>
    %cst_13 = arith.constant dense<0.000000e+00> : vector<256x128xf32>
    %22 = tpu.matmul %19, %21, %cst_13 {dimension_numbers = #tpu.dot_dimension_numbers<[1], [0], [0], [1], [0, 0, 1, 1], [], []>} : vector<256x4xbf16>, vector<4x128xbf16>, vector<256x128xf32> -> vector<256x128xf32>
    %23 = arith.addf %16, %22 : vector<256x128xf32>
    %24 = vector.extract_strided_slice %1 {offsets = [1, 0, 0, 0], sizes = [16, 1, 16, 4], strides = [1, 1, 1, 1]} : vector<18x1x18x4xbf16> to vector<16x1x16x4xbf16>
    %25 = vector.shape_cast %24 : vector<16x1x16x4xbf16> to vector<16x16x4xbf16>
    %26 = vector.shape_cast %25 : vector<16x16x4xbf16> to vector<256x4xbf16>
    %c3 = arith.constant 3 : index
    %c0_14 = arith.constant 0 : index
    %c0_15 = arith.constant 0 : index
    %27 = vector.load %arg2[%c3, %c0_14, %c0_15] : memref<9x4x128xbf16, #tpu.memory_space<vmem>>, vector<1x4x128xbf16>
    %28 = vector.shape_cast %27 : vector<1x4x128xbf16> to vector<4x128xbf16>
    %cst_16 = arith.constant dense<0.000000e+00> : vector<256x128xf32>
    %29 = tpu.matmul %26, %28, %cst_16 {dimension_numbers = #tpu.dot_dimension_numbers<[1], [0], [0], [1], [0, 0, 1, 1], [], []>} : vector<256x4xbf16>, vector<4x128xbf16>, vector<256x128xf32> -> vector<256x128xf32>
    %30 = arith.addf %23, %29 : vector<256x128xf32>
    %31 = vector.extract_strided_slice %1 {offsets = [1, 0, 1, 0], sizes = [16, 1, 16, 4], strides = [1, 1, 1, 1]} : vector<18x1x18x4xbf16> to vector<16x1x16x4xbf16>
    %32 = vector.shape_cast %31 : vector<16x1x16x4xbf16> to vector<16x16x4xbf16>
    %33 = vector.shape_cast %32 : vector<16x16x4xbf16> to vector<256x4xbf16>
    %c4 = arith.constant 4 : index
    %c0_17 = arith.constant 0 : index
    %c0_18 = arith.constant 0 : index
    %34 = vector.load %arg2[%c4, %c0_17, %c0_18] : memref<9x4x128xbf16, #tpu.memory_space<vmem>>, vector<1x4x128xbf16>
    %35 = vector.shape_cast %34 : vector<1x4x128xbf16> to vector<4x128xbf16>
    %cst_19 = arith.constant dense<0.000000e+00> : vector<256x128xf32>
    %36 = tpu.matmul %33, %35, %cst_19 {dimension_numbers = #tpu.dot_dimension_numbers<[1], [0], [0], [1], [0, 0, 1, 1], [], []>} : vector<256x4xbf16>, vector<4x128xbf16>, vector<256x128xf32> -> vector<256x128xf32>
    %37 = arith.addf %30, %36 : vector<256x128xf32>
    %38 = vector.extract_strided_slice %1 {offsets = [1, 0, 2, 0], sizes = [16, 1, 16, 4], strides = [1, 1, 1, 1]} : vector<18x1x18x4xbf16> to vector<16x1x16x4xbf16>
    %39 = vector.shape_cast %38 : vector<16x1x16x4xbf16> to vector<16x16x4xbf16>
    %40 = vector.shape_cast %39 : vector<16x16x4xbf16> to vector<256x4xbf16>
    %c5 = arith.constant 5 : index
    %c0_20 = arith.constant 0 : index
    %c0_21 = arith.constant 0 : index
    %41 = vector.load %arg2[%c5, %c0_20, %c0_21] : memref<9x4x128xbf16, #tpu.memory_space<vmem>>, vector<1x4x128xbf16>
    %42 = vector.shape_cast %41 : vector<1x4x128xbf16> to vector<4x128xbf16>
    %cst_22 = arith.constant dense<0.000000e+00> : vector<256x128xf32>
    %43 = tpu.matmul %40, %42, %cst_22 {dimension_numbers = #tpu.dot_dimension_numbers<[1], [0], [0], [1], [0, 0, 1, 1], [], []>} : vector<256x4xbf16>, vector<4x128xbf16>, vector<256x128xf32> -> vector<256x128xf32>
    %44 = arith.addf %37, %43 : vector<256x128xf32>
    %45 = vector.extract_strided_slice %1 {offsets = [2, 0, 0, 0], sizes = [16, 1, 16, 4], strides = [1, 1, 1, 1]} : vector<18x1x18x4xbf16> to vector<16x1x16x4xbf16>
    %46 = vector.shape_cast %45 : vector<16x1x16x4xbf16> to vector<16x16x4xbf16>
    %47 = vector.shape_cast %46 : vector<16x16x4xbf16> to vector<256x4xbf16>
    %c6 = arith.constant 6 : index
    %c0_23 = arith.constant 0 : index
    %c0_24 = arith.constant 0 : index
    %48 = vector.load %arg2[%c6, %c0_23, %c0_24] : memref<9x4x128xbf16, #tpu.memory_space<vmem>>, vector<1x4x128xbf16>
    %49 = vector.shape_cast %48 : vector<1x4x128xbf16> to vector<4x128xbf16>
    %cst_25 = arith.constant dense<0.000000e+00> : vector<256x128xf32>
    %50 = tpu.matmul %47, %49, %cst_25 {dimension_numbers = #tpu.dot_dimension_numbers<[1], [0], [0], [1], [0, 0, 1, 1], [], []>} : vector<256x4xbf16>, vector<4x128xbf16>, vector<256x128xf32> -> vector<256x128xf32>
    %51 = arith.addf %44, %50 : vector<256x128xf32>
    %52 = vector.extract_strided_slice %1 {offsets = [2, 0, 1, 0], sizes = [16, 1, 16, 4], strides = [1, 1, 1, 1]} : vector<18x1x18x4xbf16> to vector<16x1x16x4xbf16>
    %53 = vector.shape_cast %52 : vector<16x1x16x4xbf16> to vector<16x16x4xbf16>
    %54 = vector.shape_cast %53 : vector<16x16x4xbf16> to vector<256x4xbf16>
    %c7 = arith.constant 7 : index
    %c0_26 = arith.constant 0 : index
    %c0_27 = arith.constant 0 : index
    %55 = vector.load %arg2[%c7, %c0_26, %c0_27] : memref<9x4x128xbf16, #tpu.memory_space<vmem>>, vector<1x4x128xbf16>
    %56 = vector.shape_cast %55 : vector<1x4x128xbf16> to vector<4x128xbf16>
    %cst_28 = arith.constant dense<0.000000e+00> : vector<256x128xf32>
    %57 = tpu.matmul %54, %56, %cst_28 {dimension_numbers = #tpu.dot_dimension_numbers<[1], [0], [0], [1], [0, 0, 1, 1], [], []>} : vector<256x4xbf16>, vector<4x128xbf16>, vector<256x128xf32> -> vector<256x128xf32>
    %58 = arith.addf %51, %57 : vector<256x128xf32>
    %59 = vector.extract_strided_slice %1 {offsets = [2, 0, 2, 0], sizes = [16, 1, 16, 4], strides = [1, 1, 1, 1]} : vector<18x1x18x4xbf16> to vector<16x1x16x4xbf16>
    %60 = vector.shape_cast %59 : vector<16x1x16x4xbf16> to vector<16x16x4xbf16>
    %61 = vector.shape_cast %60 : vector<16x16x4xbf16> to vector<256x4xbf16>
    %c8 = arith.constant 8 : index
    %c0_29 = arith.constant 0 : index
    %c0_30 = arith.constant 0 : index
    %62 = vector.load %arg2[%c8, %c0_29, %c0_30] : memref<9x4x128xbf16, #tpu.memory_space<vmem>>, vector<1x4x128xbf16>
    %63 = vector.shape_cast %62 : vector<1x4x128xbf16> to vector<4x128xbf16>
    %cst_31 = arith.constant dense<0.000000e+00> : vector<256x128xf32>
    %64 = tpu.matmul %61, %63, %cst_31 {dimension_numbers = #tpu.dot_dimension_numbers<[1], [0], [0], [1], [0, 0, 1, 1], [], []>} : vector<256x4xbf16>, vector<4x128xbf16>, vector<256x128xf32> -> vector<256x128xf32>
    %65 = arith.addf %58, %64 : vector<256x128xf32>
    %c0_32 = arith.constant 0 : index
    %c0_33 = arith.constant 0 : index
    %66 = vector.load %arg3[%c0_32, %c0_33] : memref<1x128xf32, #tpu.memory_space<vmem>>, vector<1x128xf32>
    %67 = vector.broadcast %66 : vector<1x128xf32> to vector<256x128xf32>
    %68 = arith.mulf %65, %67 : vector<256x128xf32>
    %c0_34 = arith.constant 0 : index
    %c0_35 = arith.constant 0 : index
    %69 = vector.load %arg4[%c0_34, %c0_35] : memref<1x128xf32, #tpu.memory_space<vmem>>, vector<1x128xf32>
    %70 = vector.broadcast %69 : vector<1x128xf32> to vector<256x128xf32>
    %71 = arith.addf %68, %70 : vector<256x128xf32>
    %cst_36 = arith.constant 0.000000e+00 : f32
    %72 = vector.broadcast %cst_36 : f32 to vector<256x128xf32>
    %73 = arith.maximumf %71, %72 : vector<256x128xf32>
    %74 = vector.extract_strided_slice %73 {offsets = [0, 0], sizes = [256, 8], strides = [1, 1]} : vector<256x128xf32> to vector<256x8xf32>
    %75 = tpu.transpose %74, [1, 0] : vector<256x8xf32> -> vector<8x256xf32>
    %c0_37 = arith.constant 0 : index
    %c0_38 = arith.constant 0 : index
    %c0_39 = arith.constant 0 : index
    %76 = vector.load %arg5[%c0_37, %c0_38, %c0_39] : memref<1x8x256xf32, #tpu.memory_space<vmem>>, vector<1x8x256xf32>
    %77 = vector.shape_cast %76 : vector<1x8x256xf32> to vector<8x256xf32>
    %78 = vector.shape_cast %75 : vector<8x256xf32> to vector<1x8x256xf32>
    tpu.vector_store %arg5[%c0_37, %c0_38, %c0_39], %78 {strides = array<i32>} : memref<1x8x256xf32, #tpu.memory_space<vmem>>, vector<1x8x256xf32>,
    return
  }
  func.func @transform_0(%arg0: i32) -> (i32, i32, i32, i32, i32) {
    %c0_i32 = arith.constant 0 : i32
    %c0_i32_0 = arith.constant 0 : i32
    %c0_i32_1 = arith.constant 0 : i32
    %c0_i32_2 = arith.constant 0 : i32
    %c0_i32_3 = arith.constant 0 : i32
    return %arg0, %c0_i32, %c0_i32_0, %c0_i32_1, %c0_i32_2 : i32, i32, i32, i32, i32
  }
  func.func @transform_1(%arg0: i32) -> (i32, i32, i32) {
    %c0_i32 = arith.constant 0 : i32
    %c0_i32_0 = arith.constant 0 : i32
    %c0_i32_1 = arith.constant 0 : i32
    %c0_i32_2 = arith.constant 0 : i32
    return %c0_i32, %c0_i32_0, %c0_i32_1 : i32, i32, i32
  }
  func.func @transform_2(%arg0: i32) -> (i32, i32) {
    %c0_i32 = arith.constant 0 : i32
    %c0_i32_0 = arith.constant 0 : i32
    %c0_i32_1 = arith.constant 0 : i32
    return %c0_i32, %c0_i32_0 : i32, i32
  }
  func.func @transform_3(%arg0: i32) -> (i32, i32) {
    %c0_i32 = arith.constant 0 : i32
    %c0_i32_0 = arith.constant 0 : i32
    %c0_i32_1 = arith.constant 0 : i32
    return %c0_i32, %c0_i32_0 : i32, i32
  }
  func.func @transform_4(%arg0: i32) -> (i32, i32, i32) {
    %c0_i32 = arith.constant 0 : i32
    %c0_i32_0 = arith.constant 0 : i32
    %c0_i32_1 = arith.constant 0 : i32
    return %arg0, %c0_i32, %c0_i32_0 : i32, i32, i32
  }
}

</mosaic_0001>

<llo_original>
// kernel: convolution_block.2
$region0: #{convolution_block.2}
  #allocation0 [shape = 'u32[]', space=smem, size = 0x4, offset = 0x4, fixed_abs, tag = 'smem constant byte address 0x4 - core index']
  #allocation1 [shape = 'u32[144,128]{1,0:T(1,128)}', space=vmem, size = 0x12000, scoped, tag = 'internal scratch']
  %s0 = inlined_call_operand.vmem [shape: bf16[2,18,1,18,4], index: 0, kind: input, shape index: {}]
  %s1 = inlined_call_operand.vmem [shape: bf16[9,4,128], index: 1, kind: input, shape index: {}]
  %s2 = inlined_call_operand.vmem [shape: f32[2,2,128], index: 2, kind: output, shape index: {}]
  %s3 = sld [smem:[#allocation0]]
  $region41: #{convolution_block.2} parent=0
    _
  %s5 = ssub.s32 1, %s3
  %s6 = scalar_select 0, %s5, %s3
  loop: start=0, step=1, limit=4
  $region2: #{convolution_block.2} parent=0 // loop_pre_header
    _
  $region3: #{convolution_block.2} parent=0 // loop_header
    %s8 = sphi 0, %s12
    %p9 = scmp.ge.s32.totalorder %s8, 4
    %s18 = sphi 0, %s20
    %s21 = sphi 0, %s18
    %s22 = sphi 0, %s21
    %s38 = sphi 0, %s22
    %s42 = sphi 0, %s42
    %s44 = sphi 0, %s42
    %s45 = sphi 0, %s44
    %s59 = sphi 0, %s45
    %s65 = sphi 0, %s67
    %s68 = sphi 0, %s65
    %s69 = sphi 0, %s68
    %s85 = sphi 0, %s69
  $region4: #{convolution_block.2} parent=0 // loop_header_branch
    %11 = sbr.rel (%p9) target = $region8
  $region5: #{convolution_block.2} parent=0 // loop_body
    %s13 = ssub.s32 %s8, 1
    %s14 = ssub.s32 %s8, 2
    %s15 = sadd.s32 %s8, 1
    %s16 = ssub.s32 %s8, %s15
    %p17 = scmp.eq.s32.totalorder %s16, 0
    %s19 = sadd.s32 %s18, 1
    %s20 = scalar_select %p17, %s18, %s19
    %p23 = pneg %p17
    %p24 = scmp.eq.s32.totalorder %s8, 1
    %p25 = por %p23, %p24
    %p26 = scmp.ne.s32.totalorder %s18, %s21
    %p27 = scmp.eq.s32.totalorder %s8, 0
    %p28 = por %p26, %p27
    %p29 = scmp.ne.s32.totalorder %s18, %s21
    %p30 = scmp.eq.s32.totalorder %s13, 1
    %p31 = por %p29, %p30
    %p32 = scmp.ne.s32.totalorder %s21, %s22
    %p33 = scmp.eq.s32.totalorder %s13, 0
    %p34 = por %p32, %p33
    %p35 = scmp.ne.s32.totalorder %s21, %s22
    %p36 = scmp.eq.s32.totalorder %s14, 1
    %p37 = por %p35, %p36
    %p39 = scmp.ne.s32.totalorder %s22, %s38
    %p40 = scmp.eq.s32.totalorder %s14, 0
    %p41 = por %p39, %p40
    %s43 = sadd.s32 %s42, 1
    %p46 = scmp.eq.s32.totalorder %s8, 1
    %p47 = scmp.ne.s32.totalorder %s42, %s44
    %p48 = scmp.eq.s32.totalorder %s8, 0
    %p49 = por %p47, %p48
    %p50 = scmp.ne.s32.totalorder %s42, %s44
    %p51 = scmp.eq.s32.totalorder %s13, 1
    %p52 = por %p50, %p51
    %p53 = scmp.ne.s32.totalorder %s44, %s45
    %p54 = scmp.eq.s32.totalorder %s13, 0
    %p55 = por %p53, %p54
    %p56 = scmp.ne.s32.totalorder %s44, %s45
    %p57 = scmp.eq.s32.totalorder %s14, 1
    %p58 = por %p56, %p57
    %p60 = scmp.ne.s32.totalorder %s45, %s59
    %p61 = scmp.eq.s32.totalorder %s14, 0
    %p62 = por %p60, %p61
    %s63 = ssub.s32 %s8, %s15
    %p64 = scmp.eq.s32.totalorder %s63, 0
    %s66 = sadd.s32 %s65, 1
    %s67 = scalar_select %p64, %s65, %s66
    %p70 = pneg %p64
    %p71 = scmp.eq.s32.totalorder %s8, 1
    %p72 = por %p70, %p71
    %p73 = scmp.ne.s32.totalorder %s65, %s68
    %p74 = scmp.eq.s32.totalorder %s8, 0
    %p75 = por %p73, %p74
    %p76 = scmp.ne.s32.totalorder %s65, %s68
    %p77 = scmp.eq.s32.totalorder %s13, 1
    %p78 = por %p76, %p77
    %p79 = scmp.ne.s32.totalorder %s68, %s69
    %p80 = scmp.eq.s32.totalorder %s13, 0
    %p81 = por %p79, %p80
    %p82 = scmp.ne.s32.totalorder %s68, %s69
    %p83 = scmp.eq.s32.totalorder %s14, 1
    %p84 = por %p82, %p83
    %p86 = scmp.ne.s32.totalorder %s69, %s85
    %p87 = scmp.eq.s32.totalorder %s14, 0
    %p88 = por %p86, %p87
    %p89 = scmp.le.s32.totalorder 1, %s8
    %p90 = scmp.lt.s32.totalorder %s8, 3
    %p91 = pnand %p89, %p90
    %p92 = pneg %p91
    // Predicated region
    $region9: #{convolution_block.2} parent=5 // pred_check
      _
    $region10: #{convolution_block.2} parent=5 // pred_check_branch
      %94 = sbr.rel (%p91) target = $region12
    $region11: #{convolution_block.2} parent=5 // pred_region
      %s95 = ssub.s32 %s8, 1
      // Predicated region
      $region13: #{convolution_block.2} parent=11 // pred_check
        %p96 = pneg %p55
      $region14: #{convolution_block.2} parent=11 // pred_check_branch
        %98 = sbr.rel (%p96) target = $region16
      $region15: #{convolution_block.2} parent=11 // pred_region
        _
      $region16: #{convolution_block.2} parent=11 // pred_fallthru
        _
    $region12: #{convolution_block.2} parent=5 // pred_fallthru
      _
    %p99 = scmp.lt.s32.totalorder %s8, 2
    // Predicated region
    $region17: #{convolution_block.2} parent=5 // pred_check
      %p100 = pneg %p99
    $region18: #{convolution_block.2} parent=5 // pred_check_branch
      %102 = sbr.rel (%p100) target = $region20
    $region19: #{convolution_block.2} parent=5 // pred_region
      // Predicated region
      $region21: #{convolution_block.2} parent=19 // pred_check
        %p103 = pneg %p28
      $region22: #{convolution_block.2} parent=19 // pred_check_branch
        %105 = sbr.rel (%p103) target = $region24
      $region23: #{convolution_block.2} parent=19 // pred_region
        %p106 = scmp.lt.s32.totalorder %s8, 1
        %s107 = scalar_select %p106, %s8, 1
        %s108 = smul.addr %s107, 54
        %s109 = smul.addr %s108, 4
        %s110 = scalar_lea.vmem %s0, %s109
      $region24: #{convolution_block.2} parent=19 // pred_fallthru
        _
    $region20: #{convolution_block.2} parent=5 // pred_fallthru
      _
    %p111 = scmp.le.s32.totalorder 1, %s8
    %p112 = scmp.lt.s32.totalorder %s8, 3
    %p113 = pnand %p111, %p112
    %p114 = pneg %p113
    // Predicated region
    $region25: #{convolution_block.2} parent=5 // pred_check
      _
    $region26: #{convolution_block.2} parent=5 // pred_check_branch
      %116 = sbr.rel (%p113) target = $region28
    $region27: #{convolution_block.2} parent=5 // pred_region
      %s117 = ssub.s32 %s8, 1
      %p118 = scmp.lt.s32.totalorder %s13, 1
      %s119 = scalar_select %p118, %s13, 1
      %s120 = smul.addr %s119, 54
      %s121 = smul.addr %s120, 4
      %s122 = scalar_lea.vmem %s0, %s121
      %p123 = pneg %p34
      %p124 = pneg %p31
      %p125 = pneg %p55
      %p126 = pneg %p52
      %p127 = pneg %p81
      %p128 = pneg %p78
      %p129 = scmp.lt.s32.totalorder %s13, 1
      %s130 = scalar_select %p129, %s13, 1
      %s131 = smul.addr %s130, 2
      %s132 = scalar_lea.vmem %s2, %s131
      %p133 = scmp.lt.s32.totalorder %s13, 1
      %s134 = scalar_select %p133, %s13, 1
      %s135 = smul.addr %s134, 54
      %s136 = smul.addr %s135, 4
      %s137 = scalar_lea.vmem %s0, %s136
      %p138 = scmp.lt.s32.totalorder %s13, 1
      %s139 = scalar_select %p138, %s13, 1
      %s140 = smul.addr %s139, 2
      %s141 = scalar_lea.vmem %s2, %s140
      %v143 = vld [vmem:[%s137] sm:$0xf]
      %v144 = vld [vmem:[%s137 + $0x4] sm:$0xf]
      %v145 = vld [vmem:[%s137 + $0x8] sm:$0x1]
      %v146 = vld [vmem:[%s137 + $0xc] sm:$0xf]
      %v147 = vld [vmem:[%s137 + $0x10] sm:$0xf]
      %v148 = vld [vmem:[%s137 + $0x14] sm:$0x1]
      %v149 = vld [vmem:[%s137 + $0x18] sm:$0xf]
      %v150 = vld [vmem:[%s137 + $0x1c] sm:$0xf]
      %v151 = vld [vmem:[%s137 + $0x20] sm:$0x1]
      %v152 = vld [vmem:[%s137 + $0x24] sm:$0xf]
      %v153 = vld [vmem:[%s137 + $0x28] sm:$0xf]
      %v154 = vld [vmem:[%s137 + $0x2c] sm:$0x1]
      %v155 = vld [vmem:[%s137 + $0x30] sm:$0xf]
      %v156 = vld [vmem:[%s137 + $0x34] sm:$0xf]
      %v157 = vld [vmem:[%s137 + $0x38] sm:$0x1]
      %v158 = vld [vmem:[%s137 + $0x3c] sm:$0xf]
      %v159 = vld [vmem:[%s137 + $0x40] sm:$0xf]
      %v160 = vld [vmem:[%s137 + $0x44] sm:$0x1]
      %v161 = vld [vmem:[%s137 + $0x48] sm:$0xf]
      %v162 = vld [vmem:[%s137 + $0x4c] sm:$0xf]
      %v163 = vld [vmem:[%s137 + $0x50] sm:$0x1]
      %v164 = vld [vmem:[%s137 + $0x54] sm:$0xf]
      %v165 = vld [vmem:[%s137 + $0x58] sm:$0xf]
      %v166 = vld [vmem:[%s137 + $0x5c] sm:$0x1]
      %v167 = vld [vmem:[%s137 + $0x60] sm:$0xf]
      %v168 = vld [vmem:[%s137 + $0x64] sm:$0xf]
      %v169 = vld [vmem:[%s137 + $0x68] sm:$0x1]
      %v170 = vld [vmem:[%s137 + $0x6c] sm:$0xf]
      %v171 = vld [vmem:[%s137 + $0x70] sm:$0xf]
      %v172 = vld [vmem:[%s137 + $0x74] sm:$0x1]
      %v173 = vld [vmem:[%s137 + $0x78] sm:$0xf]
      %v174 = vld [vmem:[%s137 + $0x7c] sm:$0xf]
      %v175 = vld [vmem:[%s137 + $0x80] sm:$0x1]
      %v176 = vld [vmem:[%s137 + $0x84] sm:$0xf]
      %v177 = vld [vmem:[%s137 + $0x88] sm:$0xf]
      %v178 = vld [vmem:[%s137 + $0x8c] sm:$0x1]
      %v179 = vld [vmem:[%s137 + $0x90] sm:$0xf]
      %v180 = vld [vmem:[%s137 + $0x94] sm:$0xf]
      %v181 = vld [vmem:[%s137 + $0x98] sm:$0x1]
      %v182 = vld [vmem:[%s137 + $0x9c] sm:$0xf]
      %v183 = vld [vmem:[%s137 + $0xa0] sm:$0xf]
      %v184 = vld [vmem:[%s137 + $0xa4] sm:$0x1]
      %v185 = vld [vmem:[%s137 + $0xa8] sm:$0xf]
      %v186 = vld [vmem:[%s137 + $0xac] sm:$0xf]
      %v187 = vld [vmem:[%s137 + $0xb0] sm:$0x1]
      %v188 = vld [vmem:[%s137 + $0xb4] sm:$0xf]
      %v189 = vld [vmem:[%s137 + $0xb8] sm:$0xf]
      %v190 = vld [vmem:[%s137 + $0xbc] sm:$0x1]
      %v191 = vld [vmem:[%s137 + $0xc0] sm:$0xf]
      %v192 = vld [vmem:[%s137 + $0xc4] sm:$0xf]
      %v193 = vld [vmem:[%s137 + $0xc8] sm:$0x1]
      %v194 = vld [vmem:[%s137 + $0xcc] sm:$0xf]
      %v195 = vld [vmem:[%s137 + $0xd0] sm:$0xf]
      %v196 = vld [vmem:[%s137 + $0xd4] sm:$0x1]
      %v197 = vld [vmem:[%s1] sm:$0x3]
      %vm198 = vsmask.f32 3328
      %vm199 = vsmask.f32 7440
      %vm200 = vmor %vm198, %vm199
      %v202 = vshrl.u32 %v143, 16
      %v204 = vrot.slane %v202, 4
      %v205 = vshll.u32 %v143, 16
      %v207 = vrot.slane %v205, 5
      %v208 = vor.u32 %v204, %v207
      %v209 = vrot.slane %v208, 4
      %v211 = vshll.u32 %v144, 16
      %v213 = vrot.slane %v211, 5
      %v214 = vsel %vm200, %v209, %v213
      %v215 = vshrl.u32 %v144, 16
      %v217 = vrot.slane %v215, 4
      %v218 = vor.u32 %v217, %v213
      %v219 = vrot.slane %v218, 4
      %v221 = vshll.u32 %v145, 16
      %v223 = vrot.slane %v221, 5
      %v224 = vsel %vm200, %v219, %v223
      %v226 = vshrl.u32 %v146, 16
      %v228 = vrot.slane %v226, 4
      %v229 = vshll.u32 %v146, 16
      %v231 = vrot.slane %v229, 5
      %v232 = vor.u32 %v228, %v231
      %v233 = vrot.slane %v232, 4
      %v235 = vshll.u32 %v147, 16
      %v237 = vrot.slane %v235, 5
      %v238 = vsel %vm200, %v233, %v237
      %v239 = vshrl.u32 %v147, 16
      %v241 = vrot.slane %v239, 4
      %v242 = vor.u32 %v241, %v237
      %v243 = vrot.slane %v242, 4
      %v245 = vshll.u32 %v148, 16
      %v247 = vrot.slane %v245, 5
      %v248 = vsel %vm200, %v243, %v247
      %v250 = vshrl.u32 %v149, 16
      %v252 = vrot.slane %v250, 4
      %v253 = vshll.u32 %v149, 16
      %v255 = vrot.slane %v253, 5
      %v256 = vor.u32 %v252, %v255
      %v257 = vrot.slane %v256, 4
      %v259 = vshll.u32 %v150, 16
      %v261 = vrot.slane %v259, 5
      %v262 = vsel %vm200, %v257, %v261
      %v263 = vshrl.u32 %v150, 16
      %v265 = vrot.slane %v263, 4
      %v266 = vor.u32 %v265, %v261
      %v267 = vrot.slane %v266, 4
      %v269 = vshll.u32 %v151, 16
      %v271 = vrot.slane %v269, 5
      %v272 = vsel %vm200, %v267, %v271
      %v274 = vshrl.u32 %v152, 16
      %v276 = vrot.slane %v274, 4
      %v277 = vshll.u32 %v152, 16
      %v279 = vrot.slane %v277, 5
      %v280 = vor.u32 %v276, %v279
      %v281 = vrot.slane %v280, 4
      %v283 = vshll.u32 %v153, 16
      %v285 = vrot.slane %v283, 5
      %v286 = vsel %vm200, %v281, %v285
      %v287 = vshrl.u32 %v153, 16
      %v289 = vrot.slane %v287, 4
      %v290 = vor.u32 %v289, %v285
      %v291 = vrot.slane %v290, 4
      %v293 = vshll.u32 %v154, 16
      %v295 = vrot.slane %v293, 5
      %v296 = vsel %vm200, %v291, %v295
      %v298 = vshrl.u32 %v155, 16
      %v300 = vrot.slane %v298, 4
      %v301 = vshll.u32 %v155, 16
      %v303 = vrot.slane %v301, 5
      %v304 = vor.u32 %v300, %v303
      %v305 = vrot.slane %v304, 4
      %v307 = vshll.u32 %v156, 16
      %v309 = vrot.slane %v307, 5
      %v310 = vsel %vm200, %v305, %v309
      %v311 = vshrl.u32 %v156, 16
      %v313 = vrot.slane %v311, 4
      %v314 = vor.u32 %v313, %v309
      %v315 = vrot.slane %v314, 4
      %v317 = vshll.u32 %v157, 16
      %v319 = vrot.slane %v317, 5
      %v320 = vsel %vm200, %v315, %v319
      %v322 = vshrl.u32 %v158, 16
      %v324 = vrot.slane %v322, 4
      %v325 = vshll.u32 %v158, 16
      %v327 = vrot.slane %v325, 5
      %v328 = vor.u32 %v324, %v327
      %v329 = vrot.slane %v328, 4
      %v331 = vshll.u32 %v159, 16
      %v333 = vrot.slane %v331, 5
      %v334 = vsel %vm200, %v329, %v333
      %v335 = vshrl.u32 %v159, 16
      %v337 = vrot.slane %v335, 4
      %v338 = vor.u32 %v337, %v333
      %v339 = vrot.slane %v338, 4
      %v341 = vshll.u32 %v160, 16
      %v343 = vrot.slane %v341, 5
      %v344 = vsel %vm200, %v339, %v343
      %v346 = vshrl.u32 %v161, 16
      %v348 = vrot.slane %v346, 4
      %v349 = vshll.u32 %v161, 16
      %v351 = vrot.slane %v349, 5
      %v352 = vor.u32 %v348, %v351
      %v353 = vrot.slane %v352, 4
      %v355 = vshll.u32 %v162, 16
      %v357 = vrot.slane %v355, 5
      %v358 = vsel %vm200, %v353, %v357
      %v359 = vshrl.u32 %v162, 16
      %v361 = vrot.slane %v359, 4
      %v362 = vor.u32 %v361, %v357
      %v363 = vrot.slane %v362, 4
      %v365 = vshll.u32 %v163, 16
      %v367 = vrot.slane %v365, 5
      %v368 = vsel %vm200, %v363, %v367
      %v370 = vshrl.u32 %v164, 16
      %v372 = vrot.slane %v370, 4
      %v373 = vshll.u32 %v164, 16
      %v375 = vrot.slane %v373, 5
      %v376 = vor.u32 %v372, %v375
      %v377 = vrot.slane %v376, 4
      %v379 = vshll.u32 %v165, 16
      %v381 = vrot.slane %v379, 5
      %v382 = vsel %vm200, %v377, %v381
      %v383 = vshrl.u32 %v165, 16
      %v385 = vrot.slane %v383, 4
      %v386 = vor.u32 %v385, %v381
      %v387 = vrot.slane %v386, 4
      %v389 = vshll.u32 %v166, 16
      %v391 = vrot.slane %v389, 5
      %v392 = vsel %vm200, %v387, %v391
      %v394 = vshrl.u32 %v167, 16
      %v396 = vrot.slane %v394, 4
      %v397 = vshll.u32 %v167, 16
      %v399 = vrot.slane %v397, 5
      %v400 = vor.u32 %v396, %v399
      %v401 = vrot.slane %v400, 4
      %v403 = vshll.u32 %v168, 16
      %v405 = vrot.slane %v403, 5
      %v406 = vsel %vm200, %v401, %v405
      %v407 = vshrl.u32 %v168, 16
      %v409 = vrot.slane %v407, 4
      %v410 = vor.u32 %v409, %v405
      %v411 = vrot.slane %v410, 4
      %v413 = vshll.u32 %v169, 16
      %v415 = vrot.slane %v413, 5
      %v416 = vsel %vm200, %v411, %v415
      %v418 = vshrl.u32 %v170, 16
      %v420 = vrot.slane %v418, 4
      %v421 = vshll.u32 %v170, 16
      %v423 = vrot.slane %v421, 5
      %v424 = vor.u32 %v420, %v423
      %v425 = vrot.slane %v424, 4
      %v427 = vshll.u32 %v171, 16
      %v429 = vrot.slane %v427, 5
      %v430 = vsel %vm200, %v425, %v429
      %v431 = vshrl.u32 %v171, 16
      %v433 = vrot.slane %v431, 4
      %v434 = vor.u32 %v433, %v429
      %v435 = vrot.slane %v434, 4
      %v437 = vshll.u32 %v172, 16
      %v439 = vrot.slane %v437, 5
      %v440 = vsel %vm200, %v435, %v439
      %v442 = vshrl.u32 %v173, 16
      %v444 = vrot.slane %v442, 4
      %v445 = vshll.u32 %v173, 16
      %v447 = vrot.slane %v445, 5
      %v448 = vor.u32 %v444, %v447
      %v449 = vrot.slane %v448, 4
      %v451 = vshll.u32 %v174, 16
      %v453 = vrot.slane %v451, 5
      %v454 = vsel %vm200, %v449, %v453
      %v455 = vshrl.u32 %v174, 16
      %v457 = vrot.slane %v455, 4
      %v458 = vor.u32 %v457, %v453
      %v459 = vrot.slane %v458, 4
      %v461 = vshll.u32 %v175, 16
      %v463 = vrot.slane %v461, 5
      %v464 = vsel %vm200, %v459, %v463
      %v466 = vshrl.u32 %v176, 16
      %v468 = vrot.slane %v466, 4
      %v469 = vshll.u32 %v176, 16
      %v471 = vrot.slane %v469, 5
      %v472 = vor.u32 %v468, %v471
      %v473 = vrot.slane %v472, 4
      %v475 = vshll.u32 %v177, 16
      %v477 = vrot.slane %v475, 5
      %v478 = vsel %vm200, %v473, %v477
      %v479 = vshrl.u32 %v177, 16
      %v481 = vrot.slane %v479, 4
      %v482 = vor.u32 %v481, %v477
      %v483 = vrot.slane %v482, 4
      %v485 = vshll.u32 %v178, 16
      %v487 = vrot.slane %v485, 5
      %v488 = vsel %vm200, %v483, %v487
      %v490 = vshrl.u32 %v179, 16
      %v492 = vrot.slane %v490, 4
      %v493 = vshll.u32 %v179, 16
      %v495 = vrot.slane %v493, 5
      %v496 = vor.u32 %v492, %v495
      %v497 = vrot.slane %v496, 4
      %v499 = vshll.u32 %v180, 16
      %v501 = vrot.slane %v499, 5
      %v502 = vsel %vm200, %v497, %v501
      %v503 = vshrl.u32 %v180, 16
      %v505 = vrot.slane %v503, 4
      %v506 = vor.u32 %v505, %v501
      %v507 = vrot.slane %v506, 4
      %v509 = vshll.u32 %v181, 16
      %v511 = vrot.slane %v509, 5
      %v512 = vsel %vm200, %v507, %v511
      %v514 = vshrl.u32 %v182, 16
      %v516 = vrot.slane %v514, 4
      %v517 = vshll.u32 %v182, 16
      %v519 = vrot.slane %v517, 5
      %v520 = vor.u32 %v516, %v519
      %v521 = vrot.slane %v520, 4
      %v523 = vshll.u32 %v183, 16
      %v525 = vrot.slane %v523, 5
      %v526 = vsel %vm200, %v521, %v525
      %v527 = vshrl.u32 %v183, 16
      %v529 = vrot.slane %v527, 4
      %v530 = vor.u32 %v529, %v525
      %v531 = vrot.slane %v530, 4
      %v533 = vshll.u32 %v184, 16
      %v535 = vrot.slane %v533, 5
      %v536 = vsel %vm200, %v531, %v535
      %v538 = vshrl.u32 %v185, 16
      %v540 = vrot.slane %v538, 4
      %v541 = vshll.u32 %v185, 16
      %v543 = vrot.slane %v541, 5
      %v544 = vor.u32 %v540, %v543
      %v545 = vrot.slane %v544, 4
      %v547 = vshll.u32 %v186, 16
      %v549 = vrot.slane %v547, 5
      %v550 = vsel %vm200, %v545, %v549
      %v551 = vshrl.u32 %v186, 16
      %v553 = vrot.slane %v551, 4
      %v554 = vor.u32 %v553, %v549
      %v555 = vrot.slane %v554, 4
      %v557 = vshll.u32 %v187, 16
      %v559 = vrot.slane %v557, 5
      %v560 = vsel %vm200, %v555, %v559
      %v562 = vshrl.u32 %v188, 16
      %v564 = vrot.slane %v562, 4
      %v565 = vshll.u32 %v188, 16
      %v567 = vrot.slane %v565, 5
      %v568 = vor.u32 %v564, %v567
      %v569 = vrot.slane %v568, 4
      %v571 = vshll.u32 %v189, 16
      %v573 = vrot.slane %v571, 5
      %v574 = vsel %vm200, %v569, %v573
      %v575 = vshrl.u32 %v189, 16
      %v577 = vrot.slane %v575, 4
      %v578 = vor.u32 %v577, %v573
      %v579 = vrot.slane %v578, 4
      %v581 = vshll.u32 %v190, 16
      %v583 = vrot.slane %v581, 5
      %v584 = vsel %vm200, %v579, %v583
      %s585 = scalar_lea.vmem %s1, 2
      %v586 = vld [vmem:[%s585] sm:$0x3]
      %v587 = vunpack.c.l.b16 %v214
      %v588 = vunpack.c.l.b16 %v224
      %v589 = vunpack.c.l.b16 %v238
      %v590 = vunpack.c.l.b16 %v248
      %v591 = vunpack.c.l.b16 %v262
      %v592 = vunpack.c.l.b16 %v272
      %v593 = vunpack.c.l.b16 %v286
      %v594 = vunpack.c.l.b16 %v296
      %v595 = vunpack.c.l.b16 %v310
      %v596 = vunpack.c.l.b16 %v320
      %v597 = vunpack.c.l.b16 %v334
      %v598 = vunpack.c.l.b16 %v344
      %v599 = vunpack.c.l.b16 %v358
      %v600 = vunpack.c.l.b16 %v368
      %v601 = vunpack.c.l.b16 %v382
      %v602 = vunpack.c.l.b16 %v392
      %v603 = vunpack.c.l.b16 %v406
      %v604 = vunpack.c.l.b16 %v416
      %v605 = vunpack.c.l.b16 %v430
      %v606 = vunpack.c.l.b16 %v440
      %v607 = vunpack.c.l.b16 %v454
      %v608 = vunpack.c.l.b16 %v464
      %v609 = vunpack.c.l.b16 %v478
      %v610 = vunpack.c.l.b16 %v488
      %v611 = vunpack.c.l.b16 %v502
      %v612 = vunpack.c.l.b16 %v512
      %v613 = vunpack.c.l.b16 %v526
      %v614 = vunpack.c.l.b16 %v536
      %v615 = vunpack.c.l.b16 %v550
      %v616 = vunpack.c.l.b16 %v560
      %v617 = vunpack.c.l.b16 %v574
      %v618 = vunpack.c.l.b16 %v584
      %v619 = vpack.c.b16 %v588, %v587
      %v620 = vpack.c.b16 %v590, %v589
      %v621 = vpack.c.b16 %v592, %v591
      %v622 = vpack.c.b16 %v594, %v593
      %v623 = vpack.c.b16 %v596, %v595
      %v624 = vpack.c.b16 %v598, %v597
      %v625 = vpack.c.b16 %v600, %v599
      %v626 = vpack.c.b16 %v602, %v601
      %v627 = vpack.c.b16 %v604, %v603
      %v628 = vpack.c.b16 %v606, %v605
      %v629 = vpack.c.b16 %v608, %v607
      %v630 = vpack.c.b16 %v610, %v609
      %v631 = vpack.c.b16 %v612, %v611
      %v632 = vpack.c.b16 %v614, %v613
      %v633 = vpack.c.b16 %v616, %v615
      %v634 = vpack.c.b16 %v618, %v617
      %vm635 = vcmask 31744
      %v637 = vsel %vm635, %v619, 0
      %v640 = vsel %vm635, %v620, 0
      %v643 = vsel %vm635, %v621, 0
      %v646 = vsel %vm635, %v622, 0
      %v649 = vsel %vm635, %v623, 0
      %v652 = vsel %vm635, %v624, 0
      %v655 = vsel %vm635, %v625, 0
      %v658 = vsel %vm635, %v626, 0
      %v661 = vsel %vm635, %v627, 0
      %v664 = vsel %vm635, %v628, 0
      %v667 = vsel %vm635, %v629, 0
      %v670 = vsel %vm635, %v630, 0
      %v673 = vsel %vm635, %v631, 0
      %v676 = vsel %vm635, %v632, 0
      %v679 = vsel %vm635, %v633, 0
      %v682 = vsel %vm635, %v634, 0
      %vm684 = vcmask 1041408
      %v686 = vsel %vm684, %v586, 0
      %688 = vmatprep.subr.bf16.mxu0 0
      %689 = vmatpush1.bf16.msra.mxu0 %v686
      %690 = vmatprep.subr.bf16.mxu0 0
      %691 = vmatpush1.bf16.msra.mxu0 0
      %692 = vmatprep.subr.bf16.mxu0 0
      %693 = vmatpush1.bf16.msra.mxu0 0
      %694 = vmatprep.subr.bf16.mxu0 0
      %695 = vmatpush1.bf16.msra.mxu0 0
      %696 = vmatprep.subr.bf16.mxu0 0
      %697 = vmatpush1.bf16.msra.mxu0 0
      %698 = vmatprep.subr.bf16.mxu0 0
      %699 = vmatpush1.bf16.msra.mxu0 0
      %700 = vmatprep.subr.bf16.mxu0 0
      %701 = vmatpush1.bf16.msra.mxu0 0
      %702 = vmatprep.subr.bf16.mxu0 0
      %703 = vmatpush1.bf16.msra.mxu0 0
      %704 = vmatprep.subr.bf16.mxu0 0
      %705 = vmatpush1.bf16.msra.mxu0 0
      %706 = vmatprep.subr.bf16.mxu0 0
      %707 = vmatpush1.bf16.msra.mxu0 0
      %708 = vmatprep.subr.bf16.mxu0 0
      %709 = vmatpush1.bf16.msra.mxu0 0
      %710 = vmatprep.subr.bf16.mxu0 0
      %711 = vmatpush1.bf16.msra.mxu0 0
      %712 = vmatprep.subr.bf16.mxu0 0
      %713 = vmatpush1.bf16.msra.mxu0 0
      %714 = vmatprep.subr.bf16.mxu0 0
      %715 = vmatpush1.bf16.msra.mxu0 0
      %716 = vmatprep.subr.bf16.mxu0 0
      %717 = vmatpush1.bf16.msra.mxu0 0
      %718 = vmatprep.subr.bf16.mxu0 0
      %719 = vmatpush1.bf16.msra.mxu0 0
      %720 = vmatprep.mubr.bf16.mxu0 0
      %721 = vmatmul.mubr.bf16.gmra.mrb[0].mxu0 %v637
      %v722 = vpop.f32.mrb[0].mxu0
      %v723 = vadd.f32 0.0, %v722
      %v724 = vpop.f32.mrb[0].mxu0
      %v725 = vpop.f32.mrb[0].mxu0
      %v726 = vadd.f32 0.0, %v725
      %v727 = vpop.f32.mrb[0].mxu0
      %728 = vmatprep.mubr.bf16.mxu0 0
      %729 = vmatmul.mubr.bf16.gmra.mrb[0].mxu0 %v640
      %v730 = vpop.f32.mrb[0].mxu0
      %v731 = vadd.f32 0.0, %v730
      %v732 = vpop.f32.mrb[0].mxu0
      %v733 = vpop.f32.mrb[0].mxu0
      %v734 = vadd.f32 0.0, %v733
      %v735 = vpop.f32.mrb[0].mxu0
      %736 = vmatprep.mubr.bf16.mxu0 0
      %737 = vmatmul.mubr.bf16.gmra.mrb[0].mxu0 %v643
      %v738 = vpop.f32.mrb[0].mxu0
      %v739 = vadd.f32 0.0, %v738
      %v740 = vpop.f32.mrb[0].mxu0
      %v741 = vpop.f32.mrb[0].mxu0
      %v742 = vadd.f32 0.0, %v741
      %v743 = vpop.f32.mrb[0].mxu0
      %744 = vmatprep.mubr.bf16.mxu0 0
      %745 = vmatmul.mubr.bf16.gmra.mrb[0].mxu0 %v646
      %v746 = vpop.f32.mrb[0].mxu0
      %v747 = vadd.f32 0.0, %v746
      %v748 = vpop.f32.mrb[0].mxu0
      %v749 = vpop.f32.mrb[0].mxu0
      %v750 = vadd.f32 0.0, %v749
      %v751 = vpop.f32.mrb[0].mxu0
      %752 = vmatprep.mubr.bf16.mxu0 0
      %753 = vmatmul.mubr.bf16.gmra.mrb[0].mxu0 %v649
      %v754 = vpop.f32.mrb[0].mxu0
      %v755 = vadd.f32 0.0, %v754
      %v756 = vpop.f32.mrb[0].mxu0
      %v757 = vpop.f32.mrb[0].mxu0
      %v758 = vadd.f32 0.0, %v757
      %v759 = vpop.f32.mrb[0].mxu0
      %760 = vmatprep.mubr.bf16.mxu0 0
      %761 = vmatmul.mubr.bf16.gmra.mrb[0].mxu0 %v652
      %v762 = vpop.f32.mrb[0].mxu0
      %v763 = vadd.f32 0.0, %v762
      %v764 = vpop.f32.mrb[0].mxu0
      %v765 = vpop.f32.mrb[0].mxu0
      %v766 = vadd.f32 0.0, %v765
      %v767 = vpop.f32.mrb[0].mxu0
      %768 = vmatprep.mubr.bf16.mxu0 0
      %769 = vmatmul.mubr.bf16.gmra.mrb[0].mxu0 %v655
      %v770 = vpop.f32.mrb[0].mxu0
      %v771 = vadd.f32 0.0, %v770
      %v772 = vpop.f32.mrb[0].mxu0
      %v773 = vpop.f32.mrb[0].mxu0
      %v774 = vadd.f32 0.0, %v773
      %v775 = vpop.f32.mrb[0].mxu0
      %776 = vmatprep.mubr.bf16.mxu0 0
      %777 = vmatmul.mubr.bf16.gmra.mrb[0].mxu0 %v658
      %v778 = vpop.f32.mrb[0].mxu0
      %v779 = vadd.f32 0.0, %v778
      %v780 = vpop.f32.mrb[0].mxu0
      %v781 = vpop.f32.mrb[0].mxu0
      %v782 = vadd.f32 0.0, %v781
      %v783 = vpop.f32.mrb[0].mxu0
      %784 = vmatprep.mubr.bf16.mxu0 0
      %785 = vmatmul.mubr.bf16.gmra.mrb[0].mxu0 %v661
      %v786 = vpop.f32.mrb[0].mxu0
      %v787 = vadd.f32 0.0, %v786
      %v788 = vpop.f32.mrb[0].mxu0
      %v789 = vpop.f32.mrb[0].mxu0
      %v790 = vadd.f32 0.0, %v789
      %v791 = vpop.f32.mrb[0].mxu0
      %792 = vmatprep.mubr.bf16.mxu0 0
      %793 = vmatmul.mubr.bf16.gmra.mrb[0].mxu0 %v664
      %v794 = vpop.f32.mrb[0].mxu0
      %v795 = vadd.f32 0.0, %v794
      %v796 = vpop.f32.mrb[0].mxu0
      %v797 = vpop.f32.mrb[0].mxu0
      %v798 = vadd.f32 0.0, %v797
      %v799 = vpop.f32.mrb[0].mxu0
      %800 = vmatprep.mubr.bf16.mxu0 0
      %801 = vmatmul.mubr.bf16.gmra.mrb[0].mxu0 %v667
      %v802 = vpop.f32.mrb[0].mxu0
      %v803 = vadd.f32 0.0, %v802
      %v804 = vpop.f32.mrb[0].mxu0
      %v805 = vpop.f32.mrb[0].mxu0
      %v806 = vadd.f32 0.0, %v805
      %v807 = vpop.f32.mrb[0].mxu0
      %808 = vmatprep.mubr.bf16.mxu0 0
      %809 = vmatmul.mubr.bf16.gmra.mrb[0].mxu0 %v670
      %v810 = vpop.f32.mrb[0].mxu0
      %v811 = vadd.f32 0.0, %v810
      %v812 = vpop.f32.mrb[0].mxu0
      %v813 = vpop.f32.mrb[0].mxu0
      %v814 = vadd.f32 0.0, %v813
      %v815 = vpop.f32.mrb[0].mxu0
      %816 = vmatprep.mubr.bf16.mxu0 0
      %817 = vmatmul.mubr.bf16.gmra.mrb[0].mxu0 %v673
      %v818 = vpop.f32.mrb[0].mxu0
      %v819 = vadd.f32 0.0, %v818
      %v820 = vpop.f32.mrb[0].mxu0
      %v821 = vpop.f32.mrb[0].mxu0
      %v822 = vadd.f32 0.0, %v821
      %v823 = vpop.f32.mrb[0].mxu0
      %824 = vmatprep.mubr.bf16.mxu0 0
      %825 = vmatmul.mubr.bf16.gmra.mrb[0].mxu0 %v676
      %v826 = vpop.f32.mrb[0].mxu0
      %v827 = vadd.f32 0.0, %v826
      %v828 = vpop.f32.mrb[0].mxu0
      %v829 = vpop.f32.mrb[0].mxu0
      %v830 = vadd.f32 0.0, %v829
      %v831 = vpop.f32.mrb[0].mxu0
      %832 = vmatprep.mubr.bf16.mxu0 0
      %833 = vmatmul.mubr.bf16.gmra.mrb[0].mxu0 %v679
      %v834 = vpop.f32.mrb[0].mxu0
      %v835 = vadd.f32 0.0, %v834
      %v836 = vpop.f32.mrb[0].mxu0
      %v837 = vpop.f32.mrb[0].mxu0
      %v838 = vadd.f32 0.0, %v837
      %v839 = vpop.f32.mrb[0].mxu0
      %840 = vmatprep.mubr.bf16.mxu0 0
      %841 = vmatmul.mubr.bf16.gmra.mrb[0].mxu0 %v682
      %v842 = vpop.f32.mrb[0].mxu0
      %v843 = vadd.f32 0.0, %v842
      %v844 = vpop.f32.mrb[0].mxu0
      %v845 = vpop.f32.mrb[0].mxu0
      %v846 = vadd.f32 0.0, %v845
      %v847 = vpop.f32.mrb[0].mxu0
      %848 = vdwg.mxu0
      %v881 = vunpack.c.l.b16 %v143
      %v882 = vunpack.c.l.b16 %v144
      %v883 = vunpack.c.l.b16 %v146
      %v884 = vunpack.c.l.b16 %v147
      %v885 = vunpack.c.l.b16 %v149
      %v886 = vunpack.c.l.b16 %v150
      %v887 = vunpack.c.l.b16 %v152
      %v888 = vunpack.c.l.b16 %v153
      %v889 = vunpack.c.l.b16 %v155
      %v890 = vunpack.c.l.b16 %v156
      %v891 = vunpack.c.l.b16 %v158
      %v892 = vunpack.c.l.b16 %v159
      %v893 = vunpack.c.l.b16 %v161
      %v894 = vunpack.c.l.b16 %v162
      %v895 = vunpack.c.l.b16 %v164
      %v896 = vunpack.c.l.b16 %v165
      %v897 = vunpack.c.l.b16 %v167
      %v898 = vunpack.c.l.b16 %v168
      %v899 = vunpack.c.l.b16 %v170
      %v900 = vunpack.c.l.b16 %v171
      %v901 = vunpack.c.l.b16 %v173
      %v902 = vunpack.c.l.b16 %v174
      %v903 = vunpack.c.l.b16 %v176
      %v904 = vunpack.c.l.b16 %v177
      %v905 = vunpack.c.l.b16 %v179
      %v906 = vunpack.c.l.b16 %v180
      %v907 = vunpack.c.l.b16 %v182
      %v908 = vunpack.c.l.b16 %v183
      %v909 = vunpack.c.l.b16 %v185
      %v910 = vunpack.c.l.b16 %v186
      %v911 = vunpack.c.l.b16 %v188
      %v912 = vunpack.c.l.b16 %v189
      %v913 = vpack.c.b16 %v882, %v881
      %v914 = vpack.c.b16 %v884, %v883
      %v915 = vpack.c.b16 %v886, %v885
      %v916 = vpack.c.b16 %v888, %v887
      %v917 = vpack.c.b16 %v890, %v889
      %v918 = vpack.c.b16 %v892, %v891
      %v919 = vpack.c.b16 %v894, %v893
      %v920 = vpack.c.b16 %v896, %v895
      %v921 = vpack.c.b16 %v898, %v897
      %v922 = vpack.c.b16 %v900, %v899
      %v923 = vpack.c.b16 %v902, %v901
      %v924 = vpack.c.b16 %v904, %v903
      %v925 = vpack.c.b16 %v906, %v905
      %v926 = vpack.c.b16 %v908, %v907
      %v927 = vpack.c.b16 %v910, %v909
      %v928 = vpack.c.b16 %v912, %v911
      %v930 = vsel %vm635, %v913, 0
      %v933 = vsel %vm635, %v914, 0
      %v936 = vsel %vm635, %v915, 0
      %v939 = vsel %vm635, %v916, 0
      %v942 = vsel %vm635, %v917, 0
      %v945 = vsel %vm635, %v918, 0
      %v948 = vsel %vm635, %v919, 0
      %v951 = vsel %vm635, %v920, 0
      %v954 = vsel %vm635, %v921, 0
      %v957 = vsel %vm635, %v922, 0
      %v960 = vsel %vm635, %v923, 0
      %v963 = vsel %vm635, %v924, 0
      %v966 = vsel %vm635, %v925, 0
      %v969 = vsel %vm635, %v926, 0
      %v972 = vsel %vm635, %v927, 0
      %v975 = vsel %vm635, %v928, 0
      %v978 = vsel %vm684, %v197, 0
      %980 = vmatprep.subr.bf16.mxu0 0
      %981 = vmatpush1.bf16.msra.mxu0 %v978
      %982 = vmatprep.subr.bf16.mxu0 0
      %983 = vmatpush1.bf16.msra.mxu0 0
      %984 = vmatprep.subr.bf16.mxu0 0
      %985 = vmatpush1.bf16.msra.mxu0 0
      %986 = vmatprep.subr.bf16.mxu0 0
      %987 = vmatpush1.bf16.msra.mxu0 0
      %988 = vmatprep.subr.bf16.mxu0 0
      %989 = vmatpush1.bf16.msra.mxu0 0
      %990 = vmatprep.subr.bf16.mxu0 0
      %991 = vmatpush1.bf16.msra.mxu0 0
      %992 = vmatprep.subr.bf16.mxu0 0
      %993 = vmatpush1.bf16.msra.mxu0 0
      %994 = vmatprep.subr.bf16.mxu0 0
      %995 = vmatpush1.bf16.msra.mxu0 0
      %996 = vmatprep.subr.bf16.mxu0 0
      %997 = vmatpush1.bf16.msra.mxu0 0
      %998 = vmatprep.subr.bf16.mxu0 0
      %999 = vmatpush1.bf16.msra.mxu0 0
      %1000 = vmatprep.subr.bf16.mxu0 0
      %1001 = vmatpush1.bf16.msra.mxu0 0
      %1002 = vmatprep.subr.bf16.mxu0 0
      %1003 = vmatpush1.bf16.msra.mxu0 0
      %1004 = vmatprep.subr.bf16.mxu0 0
      %1005 = vmatpush1.bf16.msra.mxu0 0
      %1006 = vmatprep.subr.bf16.mxu0 0
      %1007 = vmatpush1.bf16.msra.mxu0 0
      %1008 = vmatprep.subr.bf16.mxu0 0
      %1009 = vmatpush1.bf16.msra.mxu0 0
      %1010 = vmatprep.subr.bf16.mxu0 0
      %1011 = vmatpush1.bf16.msra.mxu0 0
      %1012 = vmatprep.mubr.bf16.mxu0 0
      %1013 = vmatmul.mubr.bf16.gmra.mrb[0].mxu0 %v930
      %v1014 = vpop.f32.mrb[0].mxu0
      %v1015 = vadd.f32 %v723, %v1014
      %v1016 = vpop.f32.mrb[0].mxu0
      %v1017 = vpop.f32.mrb[0].mxu0
      %v1018 = vadd.f32 %v726, %v1017
      %v1019 = vpop.f32.mrb[0].mxu0
      %1020 = vmatprep.mubr.bf16.mxu0 0
      %1021 = vmatmul.mubr.bf16.gmra.mrb[0].mxu0 %v933
      %v1022 = vpop.f32.mrb[0].mxu0
      %v1023 = vadd.f32 %v731, %v1022
      %v1024 = vpop.f32.mrb[0].mxu0
      %v1025 = vpop.f32.mrb[0].mxu0
      %v1026 = vadd.f32 %v734, %v1025
      %v1027 = vpop.f32.mrb[0].mxu0
      %1028 = vmatprep.mubr.bf16.mxu0 0
      %1029 = vmatmul.mubr.bf16.gmra.mrb[0].mxu0 %v936
      %v1030 = vpop.f32.mrb[0].mxu0
      %v1031 = vadd.f32 %v739, %v1030
      %v1032 = vpop.f32.mrb[0].mxu0
      %v1033 = vpop.f32.mrb[0].mxu0
      %v1034 = vadd.f32 %v742, %v1033
      %v1035 = vpop.f32.mrb[0].mxu0
      %1036 = vmatprep.mubr.bf16.mxu0 0
      %1037 = vmatmul.mubr.bf16.gmra.mrb[0].mxu0 %v939
      %v1038 = vpop.f32.mrb[0].mxu0
      %v1039 = vadd.f32 %v747, %v1038
      %v1040 = vpop.f32.mrb[0].mxu0
      %v1041 = vpop.f32.mrb[0].mxu0
      %v1042 = vadd.f32 %v750, %v1041
      %v1043 = vpop.f32.mrb[0].mxu0
      %1044 = vmatprep.mubr.bf16.mxu0 0
      %1045 = vmatmul.mubr.bf16.gmra.mrb[0].mxu0 %v942
      %v1046 = vpop.f32.mrb[0].mxu0
      %v1047 = vadd.f32 %v755, %v1046
      %v1048 = vpop.f32.mrb[0].mxu0
      %v1049 = vpop.f32.mrb[0].mxu0
      %v1050 = vadd.f32 %v758, %v1049
      %v1051 = vpop.f32.mrb[0].mxu0
      %1052 = vmatprep.mubr.bf16.mxu0 0
      %1053 = vmatmul.mubr.bf16.gmra.mrb[0].mxu0 %v945
      %v1054 = vpop.f32.mrb[0].mxu0
      %v1055 = vadd.f32 %v763, %v1054
      %v1056 = vpop.f32.mrb[0].mxu0
      %v1057 = vpop.f32.mrb[0].mxu0
      %v1058 = vadd.f32 %v766, %v1057
      %v1059 = vpop.f32.mrb[0].mxu0
      %1060 = vmatprep.mubr.bf16.mxu0 0
      %1061 = vmatmul.mubr.bf16.gmra.mrb[0].mxu0 %v948
      %v1062 = vpop.f32.mrb[0].mxu0
      %v1063 = vadd.f32 %v771, %v1062
      %v1064 = vpop.f32.mrb[0].mxu0
      %v1065 = vpop.f32.mrb[0].mxu0
      %v1066 = vadd.f32 %v774, %v1065
      %v1067 = vpop.f32.mrb[0].mxu0
      %1068 = vmatprep.mubr.bf16.mxu0 0
      %1069 = vmatmul.mubr.bf16.gmra.mrb[0].mxu0 %v951
      %v1070 = vpop.f32.mrb[0].mxu0
      %v1071 = vadd.f32 %v779, %v1070
      %v1072 = vpop.f32.mrb[0].mxu0
      %v1073 = vpop.f32.mrb[0].mxu0
      %v1074 = vadd.f32 %v782, %v1073
      %v1075 = vpop.f32.mrb[0].mxu0
      %1076 = vmatprep.mubr.bf16.mxu0 0
      %1077 = vmatmul.mubr.bf16.gmra.mrb[0].mxu0 %v954
      %v1078 = vpop.f32.mrb[0].mxu0
      %v1079 = vadd.f32 %v787, %v1078
      %v1080 = vpop.f32.mrb[0].mxu0
      %v1081 = vpop.f32.mrb[0].mxu0
      %v1082 = vadd.f32 %v790, %v1081
      %v1083 = vpop.f32.mrb[0].mxu0
      %1084 = vmatprep.mubr.bf16.mxu0 0
      %1085 = vmatmul.mubr.bf16.gmra.mrb[0].mxu0 %v957
      %v1086 = vpop.f32.mrb[0].mxu0
      %v1087 = vadd.f32 %v795, %v1086
      %v1088 = vpop.f32.mrb[0].mxu0
      %v1089 = vpop.f32.mrb[0].mxu0
      %v1090 = vadd.f32 %v798, %v1089
      %v1091 = vpop.f32.mrb[0].mxu0
      %1092 = vmatprep.mubr.bf16.mxu0 0
      %1093 = vmatmul.mubr.bf16.gmra.mrb[0].mxu0 %v960
      %v1094 = vpop.f32.mrb[0].mxu0
      %v1095 = vadd.f32 %v803, %v1094
      %v1096 = vpop.f32.mrb[0].mxu0
      %v1097 = vpop.f32.mrb[0].mxu0
      %v1098 = vadd.f32 %v806, %v1097
      %v1099 = vpop.f32.mrb[0].mxu0
      %1100 = vmatprep.mubr.bf16.mxu0 0
      %1101 = vmatmul.mubr.bf16.gmra.mrb[0].mxu0 %v963
      %v1102 = vpop.f32.mrb[0].mxu0
      %v1103 = vadd.f32 %v811, %v1102
      %v1104 = vpop.f32.mrb[0].mxu0
      %v1105 = vpop.f32.mrb[0].mxu0
      %v1106 = vadd.f32 %v814, %v1105
      %v1107 = vpop.f32.mrb[0].mxu0
      %1108 = vmatprep.mubr.bf16.mxu0 0
      %1109 = vmatmul.mubr.bf16.gmra.mrb[0].mxu0 %v966
      %v1110 = vpop.f32.mrb[0].mxu0
      %v1111 = vadd.f32 %v819, %v1110
      %v1112 = vpop.f32.mrb[0].mxu0
      %v1113 = vpop.f32.mrb[0].mxu0
      %v1114 = vadd.f32 %v822, %v1113
      %v1115 = vpop.f32.mrb[0].mxu0
      %1116 = vmatprep.mubr.bf16.mxu0 0
      %1117 = vmatmul.mubr.bf16.gmra.mrb[0].mxu0 %v969
      %v1118 = vpop.f32.mrb[0].mxu0
      %v1119 = vadd.f32 %v827, %v1118
      %v1120 = vpop.f32.mrb[0].mxu0
      %v1121 = vpop.f32.mrb[0].mxu0
      %v1122 = vadd.f32 %v830, %v1121
      %v1123 = vpop.f32.mrb[0].mxu0
      %1124 = vmatprep.mubr.bf16.mxu0 0
      %1125 = vmatmul.mubr.bf16.gmra.mrb[0].mxu0 %v972
      %v1126 = vpop.f32.mrb[0].mxu0
      %v1127 = vadd.f32 %v835, %v1126
      %v1128 = vpop.f32.mrb[0].mxu0
      %v1129 = vpop.f32.mrb[0].mxu0
      %v1130 = vadd.f32 %v838, %v1129
      %v1131 = vpop.f32.mrb[0].mxu0
      %1132 = vmatprep.mubr.bf16.mxu0 0
      %1133 = vmatmul.mubr.bf16.gmra.mrb[0].mxu0 %v975
      %v1134 = vpop.f32.mrb[0].mxu0
      %v1135 = vadd.f32 %v843, %v1134
      %v1136 = vpop.f32.mrb[0].mxu0
      %v1137 = vpop.f32.mrb[0].mxu0
      %v1138 = vadd.f32 %v846, %v1137
      %v1139 = vpop.f32.mrb[0].mxu0
      %1140 = vdwg.mxu0
      %vm1157 = vcmask 1042432
      %vm1158 = vcmask 1046532
      %vm1159 = vmor %vm1157, %vm1158
      %v1160 = vrot.slane %v143, 5
      %v1161 = vrot.slane %v1160, 4
      %v1162 = vrot.slane %v144, 5
      %v1163 = vsel %vm1159, %v1161, %v1162
      %v1164 = vrot.slane %v1162, 4
      %v1165 = vrot.slane %v145, 5
      %v1166 = vsel %vm1159, %v1164, %v1165
      %v1167 = vrot.slane %v146, 5
      %v1168 = vrot.slane %v1167, 4
      %v1169 = vrot.slane %v147, 5
      %v1170 = vsel %vm1159, %v1168, %v1169
      %v1171 = vrot.slane %v1169, 4
      %v1172 = vrot.slane %v148, 5
      %v1173 = vsel %vm1159, %v1171, %v1172
      %v1174 = vrot.slane %v149, 5
      %v1175 = vrot.slane %v1174, 4
      %v1176 = vrot.slane %v150, 5
      %v1177 = vsel %vm1159, %v1175, %v1176
      %v1178 = vrot.slane %v1176, 4
      %v1179 = vrot.slane %v151, 5
      %v1180 = vsel %vm1159, %v1178, %v1179
      %v1181 = vrot.slane %v152, 5
      %v1182 = vrot.slane %v1181, 4
      %v1183 = vrot.slane %v153, 5
      %v1184 = vsel %vm1159, %v1182, %v1183
      %v1185 = vrot.slane %v1183, 4
      %v1186 = vrot.slane %v154, 5
      %v1187 = vsel %vm1159, %v1185, %v1186
      %v1188 = vrot.slane %v155, 5
      %v1189 = vrot.slane %v1188, 4
      %v1190 = vrot.slane %v156, 5
      %v1191 = vsel %vm1159, %v1189, %v1190
      %v1192 = vrot.slane %v1190, 4
      %v1193 = vrot.slane %v157, 5
      %v1194 = vsel %vm1159, %v1192, %v1193
      %v1195 = vrot.slane %v158, 5
      %v1196 = vrot.slane %v1195, 4
      %v1197 = vrot.slane %v159, 5
      %v1198 = vsel %vm1159, %v1196, %v1197
      %v1199 = vrot.slane %v1197, 4
      %v1200 = vrot.slane %v160, 5
      %v1201 = vsel %vm1159, %v1199, %v1200
      %v1202 = vrot.slane %v161, 5
      %v1203 = vrot.slane %v1202, 4
      %v1204 = vrot.slane %v162, 5
      %v1205 = vsel %vm1159, %v1203, %v1204
      %v1206 = vrot.slane %v1204, 4
      %v1207 = vrot.slane %v163, 5
      %v1208 = vsel %vm1159, %v1206, %v1207
      %v1209 = vrot.slane %v164, 5
      %v1210 = vrot.slane %v1209, 4
      %v1211 = vrot.slane %v165, 5
      %v1212 = vsel %vm1159, %v1210, %v1211
      %v1213 = vrot.slane %v1211, 4
      %v1214 = vrot.slane %v166, 5
      %v1215 = vsel %vm1159, %v1213, %v1214
      %v1216 = vrot.slane %v167, 5
      %v1217 = vrot.slane %v1216, 4
      %v1218 = vrot.slane %v168, 5
      %v1219 = vsel %vm1159, %v1217, %v1218
      %v1220 = vrot.slane %v1218, 4
      %v1221 = vrot.slane %v169, 5
      %v1222 = vsel %vm1159, %v1220, %v1221
      %v1223 = vrot.slane %v170, 5
      %v1224 = vrot.slane %v1223, 4
      %v1225 = vrot.slane %v171, 5
      %v1226 = vsel %vm1159, %v1224, %v1225
      %v1227 = vrot.slane %v1225, 4
      %v1228 = vrot.slane %v172, 5
      %v1229 = vsel %vm1159, %v1227, %v1228
      %v1230 = vrot.slane %v173, 5
      %v1231 = vrot.slane %v1230, 4
      %v1232 = vrot.slane %v174, 5
      %v1233 = vsel %vm1159, %v1231, %v1232
      %v1234 = vrot.slane %v1232, 4
      %v1235 = vrot.slane %v175, 5
      %v1236 = vsel %vm1159, %v1234, %v1235
      %v1237 = vrot.slane %v176, 5
      %v1238 = vrot.slane %v1237, 4
      %v1239 = vrot.slane %v177, 5
      %v1240 = vsel %vm1159, %v1238, %v1239
      %v1241 = vrot.slane %v1239, 4
      %v1242 = vrot.slane %v178, 5
      %v1243 = vsel %vm1159, %v1241, %v1242
      %v1244 = vrot.slane %v179, 5
      %v1245 = vrot.slane %v1244, 4
      %v1246 = vrot.slane %v180, 5
      %v1247 = vsel %vm1159, %v1245, %v1246
      %v1248 = vrot.slane %v1246, 4
      %v1249 = vrot.slane %v181, 5
      %v1250 = vsel %vm1159, %v1248, %v1249
      %v1251 = vrot.slane %v182, 5
      %v1252 = vrot.slane %v1251, 4
      %v1253 = vrot.slane %v183, 5
      %v1254 = vsel %vm1159, %v1252, %v1253
      %v1255 = vrot.slane %v1253, 4
      %v1256 = vrot.slane %v184, 5
      %v1257 = vsel %vm1159, %v1255, %v1256
      %v1258 = vrot.slane %v185, 5
      %v1259 = vrot.slane %v1258, 4
      %v1260 = vrot.slane %v186, 5
      %v1261 = vsel %vm1159, %v1259, %v1260
      %v1262 = vrot.slane %v1260, 4
      %v1263 = vrot.slane %v187, 5
      %v1264 = vsel %vm1159, %v1262, %v1263
      %v1265 = vrot.slane %v188, 5
      %v1266 = vrot.slane %v1265, 4
      %v1267 = vrot.slane %v189, 5
      %v1268 = vsel %vm1159, %v1266, %v1267
      %v1269 = vrot.slane %v1267, 4
      %v1270 = vrot.slane %v190, 5
      %v1271 = vsel %vm1159, %v1269, %v1270
      %s1272 = scalar_lea.vmem %s1, 4
      %v1273 = vld [vmem:[%s1272] sm:$0x3]
      %v1274 = vunpack.c.l.b16 %v1163
      %v1275 = vunpack.c.l.b16 %v1166
      %v1276 = vunpack.c.l.b16 %v1170
      %v1277 = vunpack.c.l.b16 %v1173
      %v1278 = vunpack.c.l.b16 %v1177
      %v1279 = vunpack.c.l.b16 %v1180
      %v1280 = vunpack.c.l.b16 %v1184
      %v1281 = vunpack.c.l.b16 %v1187
      %v1282 = vunpack.c.l.b16 %v1191
      %v1283 = vunpack.c.l.b16 %v1194
      %v1284 = vunpack.c.l.b16 %v1198
      %v1285 = vunpack.c.l.b16 %v1201
      %v1286 = vunpack.c.l.b16 %v1205
      %v1287 = vunpack.c.l.b16 %v1208
      %v1288 = vunpack.c.l.b16 %v1212
      %v1289 = vunpack.c.l.b16 %v1215
      %v1290 = vunpack.c.l.b16 %v1219
      %v1291 = vunpack.c.l.b16 %v1222
      %v1292 = vunpack.c.l.b16 %v1226
      %v1293 = vunpack.c.l.b16 %v1229
      %v1294 = vunpack.c.l.b16 %v1233
      %v1295 = vunpack.c.l.b16 %v1236
      %v1296 = vunpack.c.l.b16 %v1240
      %v1297 = vunpack.c.l.b16 %v1243
      %v1298 = vunpack.c.l.b16 %v1247
      %v1299 = vunpack.c.l.b16 %v1250
      %v1300 = vunpack.c.l.b16 %v1254
      %v1301 = vunpack.c.l.b16 %v1257
      %v1302 = vunpack.c.l.b16 %v1261
      %v1303 = vunpack.c.l.b16 %v1264
      %v1304 = vunpack.c.l.b16 %v1268
      %v1305 = vunpack.c.l.b16 %v1271
      %v1306 = vpack.c.b16 %v1275, %v1274
      %v1307 = vpack.c.b16 %v1277, %v1276
      %v1308 = vpack.c.b16 %v1279, %v1278
      %v1309 = vpack.c.b16 %v1281, %v1280
      %v1310 = vpack.c.b16 %v1283, %v1282
      %v1311 = vpack.c.b16 %v1285, %v1284
      %v1312 = vpack.c.b16 %v1287, %v1286
      %v1313 = vpack.c.b16 %v1289, %v1288
      %v1314 = vpack.c.b16 %v1291, %v1290
      %v1315 = vpack.c.b16 %v1293, %v1292
      %v1316 = vpack.c.b16 %v1295, %v1294
      %v1317 = vpack.c.b16 %v1297, %v1296
      %v1318 = vpack.c.b16 %v1299, %v1298
      %v1319 = vpack.c.b16 %v1301, %v1300
      %v1320 = vpack.c.b16 %v1303, %v1302
      %v1321 = vpack.c.b16 %v1305, %v1304
      %v1323 = vsel %vm635, %v1306, 0
      %v1326 = vsel %vm635, %v1307, 0
      %v1329 = vsel %vm635, %v1308, 0
      %v1332 = vsel %vm635, %v1309, 0
      %v1335 = vsel %vm635, %v1310, 0
      %v1338 = vsel %vm635, %v1311, 0
      %v1341 = vsel %vm635, %v1312, 0
      %v1344 = vsel %vm635, %v1313, 0
      %v1347 = vsel %vm635, %v1314, 0
      %v1350 = vsel %vm635, %v1315, 0
      %v1353 = vsel %vm635, %v1316, 0
      %v1356 = vsel %vm635, %v1317, 0
      %v1359 = vsel %vm635, %v1318, 0
      %v1362 = vsel %vm635, %v1319, 0
      %v1365 = vsel %vm635, %v1320, 0
      %v1368 = vsel %vm635, %v1321, 0
      %v1371 = vsel %vm684, %v1273, 0
      %1373 = vmatprep.subr.bf16.mxu0 0
      %1374 = vmatpush1.bf16.msra.mxu0 %v1371
      %1375 = vmatprep.subr.bf16.mxu0 0
      %1376 = vmatpush1.bf16.msra.mxu0 0
      %1377 = vmatprep.subr.bf16.mxu0 0
      %1378 = vmatpush1.bf16.msra.mxu0 0
      %1379 = vmatprep.subr.bf16.mxu0 0
      %1380 = vmatpush1.bf16.msra.mxu0 0
      %1381 = vmatprep.subr.bf16.mxu0 0
      %1382 = vmatpush1.bf16.msra.mxu0 0
      %1383 = vmatprep.subr.bf16.mxu0 0
      %1384 = vmatpush1.bf16.msra.mxu0 0
      %1385 = vmatprep.subr.bf16.mxu0 0
      %1386 = vmatpush1.bf16.msra.mxu0 0
      %1387 = vmatprep.subr.bf16.mxu0 0
      %1388 = vmatpush1.bf16.msra.mxu0 0
      %1389 = vmatprep.subr.bf16.mxu0 0
      %1390 = vmatpush1.bf16.msra.mxu0 0
      %1391 = vmatprep.subr.bf16.mxu0 0
      %1392 = vmatpush1.bf16.msra.mxu0 0
      %1393 = vmatprep.subr.bf16.mxu0 0
      %1394 = vmatpush1.bf16.msra.mxu0 0
      %1395 = vmatprep.subr.bf16.mxu0 0
      %1396 = vmatpush1.bf16.msra.mxu0 0
      %1397 = vmatprep.subr.bf16.mxu0 0
      %1398 = vmatpush1.bf16.msra.mxu0 0
      %1399 = vmatprep.subr.bf16.mxu0 0
      %1400 = vmatpush1.bf16.msra.mxu0 0
      %1401 = vmatprep.subr.bf16.mxu0 0
      %1402 = vmatpush1.bf16.msra.mxu0 0
      %1403 = vmatprep.subr.bf16.mxu0 0
      %1404 = vmatpush1.bf16.msra.mxu0 0
      %1405 = vmatprep.mubr.bf16.mxu0 0
      %1406 = vmatmul.mubr.bf16.gmra.mrb[0].mxu0 %v1323
      %v1407 = vpop.f32.mrb[0].mxu0
      %v1408 = vadd.f32 0.0, %v1407
      %v1409 = vpop.f32.mrb[0].mxu0
      %v1410 = vpop.f32.mrb[0].mxu0
      %v1411 = vadd.f32 0.0, %v1410
      %v1412 = vpop.f32.mrb[0].mxu0
      %1413 = vmatprep.mubr.bf16.mxu0 0
      %1414 = vmatmul.mubr.bf16.gmra.mrb[0].mxu0 %v1326
      %v1415 = vpop.f32.mrb[0].mxu0
      %v1416 = vadd.f32 0.0, %v1415
      %v1417 = vpop.f32.mrb[0].mxu0
      %v1418 = vpop.f32.mrb[0].mxu0
      %v1419 = vadd.f32 0.0, %v1418
      %v1420 = vpop.f32.mrb[0].mxu0
      %1421 = vmatprep.mubr.bf16.mxu0 0
      %1422 = vmatmul.mubr.bf16.gmra.mrb[0].mxu0 %v1329
      %v1423 = vpop.f32.mrb[0].mxu0
      %v1424 = vadd.f32 0.0, %v1423
      %v1425 = vpop.f32.mrb[0].mxu0
      %v1426 = vpop.f32.mrb[0].mxu0
      %v1427 = vadd.f32 0.0, %v1426
      %v1428 = vpop.f32.mrb[0].mxu0
      %1429 = vmatprep.mubr.bf16.mxu0 0
      %1430 = vmatmul.mubr.bf16.gmra.mrb[0].mxu0 %v1332
      %v1431 = vpop.f32.mrb[0].mxu0
      %v1432 = vadd.f32 0.0, %v1431
      %v1433 = vpop.f32.mrb[0].mxu0
      %v1434 = vpop.f32.mrb[0].mxu0
      %v1435 = vadd.f32 0.0, %v1434
      %v1436 = vpop.f32.mrb[0].mxu0
      %1437 = vmatprep.mubr.bf16.mxu0 0
      %1438 = vmatmul.mubr.bf16.gmra.mrb[0].mxu0 %v1335
      %v1439 = vpop.f32.mrb[0].mxu0
      %v1440 = vadd.f32 0.0, %v1439
      %v1441 = vpop.f32.mrb[0].mxu0
      %v1442 = vpop.f32.mrb[0].mxu0
      %v1443 = vadd.f32 0.0, %v1442
      %v1444 = vpop.f32.mrb[0].mxu0
      %1445 = vmatprep.mubr.bf16.mxu0 0
      %1446 = vmatmul.mubr.bf16.gmra.mrb[0].mxu0 %v1338
      %v1447 = vpop.f32.mrb[0].mxu0
      %v1448 = vadd.f32 0.0, %v1447
      %v1449 = vpop.f32.mrb[0].mxu0
      %v1450 = vpop.f32.mrb[0].mxu0
      %v1451 = vadd.f32 0.0, %v1450
      %v1452 = vpop.f32.mrb[0].mxu0
      %1453 = vmatprep.mubr.bf16.mxu0 0
      %1454 = vmatmul.mubr.bf16.gmra.mrb[0].mxu0 %v1341
      %v1455 = vpop.f32.mrb[0].mxu0
      %v1456 = vadd.f32 0.0, %v1455
      %v1457 = vpop.f32.mrb[0].mxu0
      %v1458 = vpop.f32.mrb[0].mxu0
      %v1459 = vadd.f32 0.0, %v1458
      %v1460 = vpop.f32.mrb[0].mxu0
      %1461 = vmatprep.mubr.bf16.mxu0 0
      %1462 = vmatmul.mubr.bf16.gmra.mrb[0].mxu0 %v1344
      %v1463 = vpop.f32.mrb[0].mxu0
      %v1464 = vadd.f32 0.0, %v1463
      %v1465 = vpop.f32.mrb[0].mxu0
      %v1466 = vpop.f32.mrb[0].mxu0
      %v1467 = vadd.f32 0.0, %v1466
      %v1468 = vpop.f32.mrb[0].mxu0
      %1469 = vmatprep.mubr.bf16.mxu0 0
      %1470 = vmatmul.mubr.bf16.gmra.mrb[0].mxu0 %v1347
      %v1471 = vpop.f32.mrb[0].mxu0
      %v1472 = vadd.f32 0.0, %v1471
      %v1473 = vpop.f32.mrb[0].mxu0
      %v1474 = vpop.f32.mrb[0].mxu0
      %v1475 = vadd.f32 0.0, %v1474
      %v1476 = vpop.f32.mrb[0].mxu0
      %1477 = vmatprep.mubr.bf16.mxu0 0
      %1478 = vmatmul.mubr.bf16.gmra.mrb[0].mxu0 %v1350
      %v1479 = vpop.f32.mrb[0].mxu0
      %v1480 = vadd.f32 0.0, %v1479
      %v1481 = vpop.f32.mrb[0].mxu0
      %v1482 = vpop.f32.mrb[0].mxu0
      %v1483 = vadd.f32 0.0, %v1482
      %v1484 = vpop.f32.mrb[0].mxu0
      %1485 = vmatprep.mubr.bf16.mxu0 0
      %1486 = vmatmul.mubr.bf16.gmra.mrb[0].mxu0 %v1353
      %v1487 = vpop.f32.mrb[0].mxu0
      %v1488 = vadd.f32 0.0, %v1487
      %v1489 = vpop.f32.mrb[0].mxu0
      %v1490 = vpop.f32.mrb[0].mxu0
      %v1491 = vadd.f32 0.0, %v1490
      %v1492 = vpop.f32.mrb[0].mxu0
      %1493 = vmatprep.mubr.bf16.mxu0 0
      %1494 = vmatmul.mubr.bf16.gmra.mrb[0].mxu0 %v1356
      %v1495 = vpop.f32.mrb[0].mxu0
      %v1496 = vadd.f32 0.0, %v1495
      %v1497 = vpop.f32.mrb[0].mxu0
      %v1498 = vpop.f32.mrb[0].mxu0
      %v1499 = vadd.f32 0.0, %v1498
      %v1500 = vpop.f32.mrb[0].mxu0
      %1501 = vmatprep.mubr.bf16.mxu0 0
      %1502 = vmatmul.mubr.bf16.gmra.mrb[0].mxu0 %v1359
      %v1503 = vpop.f32.mrb[0].mxu0
      %v1504 = vadd.f32 0.0, %v1503
      %v1505 = vpop.f32.mrb[0].mxu0
      %v1506 = vpop.f32.mrb[0].mxu0
      %v1507 = vadd.f32 0.0, %v1506
      %v1508 = vpop.f32.mrb[0].mxu0
      %1509 = vmatprep.mubr.bf16.mxu0 0
      %1510 = vmatmul.mubr.bf16.gmra.mrb[0].mxu0 %v1362
      %v1511 = vpop.f32.mrb[0].mxu0
      %v1512 = vadd.f32 0.0, %v1511
      %v1513 = vpop.f32.mrb[0].mxu0
      %v1514 = vpop.f32.mrb[0].mxu0
      %v1515 = vadd.f32 0.0, %v1514
      %v1516 = vpop.f32.mrb[0].mxu0
      %1517 = vmatprep.mubr.bf16.mxu0 0
      %1518 = vmatmul.mubr.bf16.gmra.mrb[0].mxu0 %v1365
      %v1519 = vpop.f32.mrb[0].mxu0
      %v1520 = vadd.f32 0.0, %v1519
      %v1521 = vpop.f32.mrb[0].mxu0
      %v1522 = vpop.f32.mrb[0].mxu0
      %v1523 = vadd.f32 0.0, %v1522
      %v1524 = vpop.f32.mrb[0].mxu0
      %1525 = vmatprep.mubr.bf16.mxu0 0
      %1526 = vmatmul.mubr.bf16.gmra.mrb[0].mxu0 %v1368
      %v1527 = vpop.f32.mrb[0].mxu0
      %v1528 = vadd.f32 0.0, %v1527
      %v1529 = vpop.f32.mrb[0].mxu0
      %v1530 = vpop.f32.mrb[0].mxu0
      %v1531 = vadd.f32 0.0, %v1530
      %v1532 = vpop.f32.mrb[0].mxu0
      %1533 = vdwg.mxu0
      %v1534 = vadd.f32 %v1015, %v1408
      %v1535 = vadd.f32 %v1018, %v1411
      %v1536 = vadd.f32 %v1023, %v1416
      %v1537 = vadd.f32 %v1026, %v1419
      %v1538 = vadd.f32 %v1031, %v1424
      %v1539 = vadd.f32 %v1034, %v1427
      %v1540 = vadd.f32 %v1039, %v1432
      %v1541 = vadd.f32 %v1042, %v1435
      %v1542 = vadd.f32 %v1047, %v1440
      %v1543 = vadd.f32 %v1050, %v1443
      %v1544 = vadd.f32 %v1055, %v1448
      %v1545 = vadd.f32 %v1058, %v1451
      %v1546 = vadd.f32 %v1063, %v1456
      %v1547 = vadd.f32 %v1066, %v1459
      %v1548 = vadd.f32 %v1071, %v1464
      %v1549 = vadd.f32 %v1074, %v1467
      %v1550 = vadd.f32 %v1079, %v1472
      %v1551 = vadd.f32 %v1082, %v1475
      %v1552 = vadd.f32 %v1087, %v1480
      %v1553 = vadd.f32 %v1090, %v1483
      %v1554 = vadd.f32 %v1095, %v1488
      %v1555 = vadd.f32 %v1098, %v1491
      %v1556 = vadd.f32 %v1103, %v1496
      %v1557 = vadd.f32 %v1106, %v1499
      %v1558 = vadd.f32 %v1111, %v1504
      %v1559 = vadd.f32 %v1114, %v1507
      %v1560 = vadd.f32 %v1119, %v1512
      %v1561 = vadd.f32 %v1122, %v1515
      %v1562 = vadd.f32 %v1127, %v1520
      %v1563 = vadd.f32 %v1130, %v1523
      %v1564 = vadd.f32 %v1135, %v1528
      %v1565 = vadd.f32 %v1138, %v1531
      %s1566 = scalar_lea.vmem %s1, 6
      %v1567 = vld [vmem:[%s1566] sm:$0x3]
      %v1570 = vunpack.c.l.b16 %v191
      %v1571 = vunpack.c.l.b16 %v192
      %v1572 = vpack.c.b16 %v1571, %v1570
      %v1574 = vsel %vm635, %v1572, 0
      %v1577 = vsel %vm684, %v1567, 0
      %1579 = vmatprep.subr.bf16.mxu0 0
      %1580 = vmatpush1.bf16.msra.mxu0 %v1577
      %1581 = vmatprep.subr.bf16.mxu0 0
      %1582 = vmatpush1.bf16.msra.mxu0 0
      %1583 = vmatprep.subr.bf16.mxu0 0
      %1584 = vmatpush1.bf16.msra.mxu0 0
      %1585 = vmatprep.subr.bf16.mxu0 0
      %1586 = vmatpush1.bf16.msra.mxu0 0
      %1587 = vmatprep.subr.bf16.mxu0 0
      %1588 = vmatpush1.bf16.msra.mxu0 0
      %1589 = vmatprep.subr.bf16.mxu0 0
      %1590 = vmatpush1.bf16.msra.mxu0 0
      %1591 = vmatprep.subr.bf16.mxu0 0
      %1592 = vmatpush1.bf16.msra.mxu0 0
      %1593 = vmatprep.subr.bf16.mxu0 0
      %1594 = vmatpush1.bf16.msra.mxu0 0
      %1595 = vmatprep.subr.bf16.mxu0 0
      %1596 = vmatpush1.bf16.msra.mxu0 0
      %1597 = vmatprep.subr.bf16.mxu0 0
      %1598 = vmatpush1.bf16.msra.mxu0 0
      %1599 = vmatprep.subr.bf16.mxu0 0
      %1600 = vmatpush1.bf16.msra.mxu0 0
      %1601 = vmatprep.subr.bf16.mxu0 0
      %1602 = vmatpush1.bf16.msra.mxu0 0
      %1603 = vmatprep.subr.bf16.mxu0 0
      %1604 = vmatpush1.bf16.msra.mxu0 0
      %1605 = vmatprep.subr.bf16.mxu0 0
      %1606 = vmatpush1.bf16.msra.mxu0 0
      %1607 = vmatprep.subr.bf16.mxu0 0
      %1608 = vmatpush1.bf16.msra.mxu0 0
      %1609 = vmatprep.subr.bf16.mxu0 0
      %1610 = vmatpush1.bf16.msra.mxu0 0
      %1611 = vmatprep.mubr.bf16.mxu0 0
      %1612 = vmatmul.mubr.bf16.gmra.mrb[0].mxu0 %v933
      %v1613 = vpop.f32.mrb[0].mxu0
      %v1614 = vadd.f32 0.0, %v1613
      %v1615 = vpop.f32.mrb[0].mxu0
      %v1616 = vpop.f32.mrb[0].mxu0
      %v1617 = vadd.f32 0.0, %v1616
      %v1618 = vpop.f32.mrb[0].mxu0
      %1619 = vmatprep.mubr.bf16.mxu0 0
      %1620 = vmatmul.mubr.bf16.gmra.mrb[0].mxu0 %v936
      %v1621 = vpop.f32.mrb[0].mxu0
      %v1622 = vadd.f32 0.0, %v1621
      %v1623 = vpop.f32.mrb[0].mxu0
      %v1624 = vpop.f32.mrb[0].mxu0
      %v1625 = vadd.f32 0.0, %v1624
      %v1626 = vpop.f32.mrb[0].mxu0
      %1627 = vmatprep.mubr.bf16.mxu0 0
      %1628 = vmatmul.mubr.bf16.gmra.mrb[0].mxu0 %v939
      %v1629 = vpop.f32.mrb[0].mxu0
      %v1630 = vadd.f32 0.0, %v1629
      %v1631 = vpop.f32.mrb[0].mxu0
      %v1632 = vpop.f32.mrb[0].mxu0
      %v1633 = vadd.f32 0.0, %v1632
      %v1634 = vpop.f32.mrb[0].mxu0
      %1635 = vmatprep.mubr.bf16.mxu0 0
      %1636 = vmatmul.mubr.bf16.gmra.mrb[0].mxu0 %v942
      %v1637 = vpop.f32.mrb[0].mxu0
      %v1638 = vadd.f32 0.0, %v1637
      %v1639 = vpop.f32.mrb[0].mxu0
      %v1640 = vpop.f32.mrb[0].mxu0
      %v1641 = vadd.f32 0.0, %v1640
      %v1642 = vpop.f32.mrb[0].mxu0
      %1643 = vmatprep.mubr.bf16.mxu0 0
      %1644 = vmatmul.mubr.bf16.gmra.mrb[0].mxu0 %v945
      %v1645 = vpop.f32.mrb[0].mxu0
      %v1646 = vadd.f32 0.0, %v1645
      %v1647 = vpop.f32.mrb[0].mxu0
      %v1648 = vpop.f32.mrb[0].mxu0
      %v1649 = vadd.f32 0.0, %v1648
      %v1650 = vpop.f32.mrb[0].mxu0
      %1651 = vmatprep.mubr.bf16.mxu0 0
      %1652 = vmatmul.mubr.bf16.gmra.mrb[0].mxu0 %v948
      %v1653 = vpop.f32.mrb[0].mxu0
      %v1654 = vadd.f32 0.0, %v1653
      %v1655 = vpop.f32.mrb[0].mxu0
      %v1656 = vpop.f32.mrb[0].mxu0
      %v1657 = vadd.f32 0.0, %v1656
      %v1658 = vpop.f32.mrb[0].mxu0
      %1659 = vmatprep.mubr.bf16.mxu0 0
      %1660 = vmatmul.mubr.bf16.gmra.mrb[0].mxu0 %v951
      %v1661 = vpop.f32.mrb[0].mxu0
      %v1662 = vadd.f32 0.0, %v1661
      %v1663 = vpop.f32.mrb[0].mxu0
      %v1664 = vpop.f32.mrb[0].mxu0
      %v1665 = vadd.f32 0.0, %v1664
      %v1666 = vpop.f32.mrb[0].mxu0
      %1667 = vmatprep.mubr.bf16.mxu0 0
      %1668 = vmatmul.mubr.bf16.gmra.mrb[0].mxu0 %v954
      %v1669 = vpop.f32.mrb[0].mxu0
      %v1670 = vadd.f32 0.0, %v1669
      %v1671 = vpop.f32.mrb[0].mxu0
      %v1672 = vpop.f32.mrb[0].mxu0
      %v1673 = vadd.f32 0.0, %v1672
      %v1674 = vpop.f32.mrb[0].mxu0
      %1675 = vmatprep.mubr.bf16.mxu0 0
      %1676 = vmatmul.mubr.bf16.gmra.mrb[0].mxu0 %v957
      %v1677 = vpop.f32.mrb[0].mxu0
      %v1678 = vadd.f32 0.0, %v1677
      %v1679 = vpop.f32.mrb[0].mxu0
      %v1680 = vpop.f32.mrb[0].mxu0
      %v1681 = vadd.f32 0.0, %v1680
      %v1682 = vpop.f32.mrb[0].mxu0
      %1683 = vmatprep.mubr.bf16.mxu0 0
      %1684 = vmatmul.mubr.bf16.gmra.mrb[0].mxu0 %v960
      %v1685 = vpop.f32.mrb[0].mxu0
      %v1686 = vadd.f32 0.0, %v1685
      %v1687 = vpop.f32.mrb[0].mxu0
      %v1688 = vpop.f32.mrb[0].mxu0
      %v1689 = vadd.f32 0.0, %v1688
      %v1690 = vpop.f32.mrb[0].mxu0
      %1691 = vmatprep.mubr.bf16.mxu0 0
      %1692 = vmatmul.mubr.bf16.gmra.mrb[0].mxu0 %v963
      %v1693 = vpop.f32.mrb[0].mxu0
      %v1694 = vadd.f32 0.0, %v1693
      %v1695 = vpop.f32.mrb[0].mxu0
      %v1696 = vpop.f32.mrb[0].mxu0
      %v1697 = vadd.f32 0.0, %v1696
      %v1698 = vpop.f32.mrb[0].mxu0
      %1699 = vmatprep.mubr.bf16.mxu0 0
      %1700 = vmatmul.mubr.bf16.gmra.mrb[0].mxu0 %v966
      %v1701 = vpop.f32.mrb[0].mxu0
      %v1702 = vadd.f32 0.0, %v1701
      %v1703 = vpop.f32.mrb[0].mxu0
      %v1704 = vpop.f32.mrb[0].mxu0
      %v1705 = vadd.f32 0.0, %v1704
      %v1706 = vpop.f32.mrb[0].mxu0
      %1707 = vmatprep.mubr.bf16.mxu0 0
      %1708 = vmatmul.mubr.bf16.gmra.mrb[0].mxu0 %v969
      %v1709 = vpop.f32.mrb[0].mxu0
      %v1710 = vadd.f32 0.0, %v1709
      %v1711 = vpop.f32.mrb[0].mxu0
      %v1712 = vpop.f32.mrb[0].mxu0
      %v1713 = vadd.f32 0.0, %v1712
      %v1714 = vpop.f32.mrb[0].mxu0
      %1715 = vmatprep.mubr.bf16.mxu0 0
      %1716 = vmatmul.mubr.bf16.gmra.mrb[0].mxu0 %v972
      %v1717 = vpop.f32.mrb[0].mxu0
      %v1718 = vadd.f32 0.0, %v1717
      %v1719 = vpop.f32.mrb[0].mxu0
      %v1720 = vpop.f32.mrb[0].mxu0
      %v1721 = vadd.f32 0.0, %v1720
      %v1722 = vpop.f32.mrb[0].mxu0
      %1723 = vmatprep.mubr.bf16.mxu0 0
      %1724 = vmatmul.mubr.bf16.gmra.mrb[0].mxu0 %v975
      %v1725 = vpop.f32.mrb[0].mxu0
      %v1726 = vadd.f32 0.0, %v1725
      %v1727 = vpop.f32.mrb[0].mxu0
      %v1728 = vpop.f32.mrb[0].mxu0
      %v1729 = vadd.f32 0.0, %v1728
      %v1730 = vpop.f32.mrb[0].mxu0
      %1731 = vmatprep.mubr.bf16.mxu0 0
      %1732 = vmatmul.mubr.bf16.gmra.mrb[0].mxu0 %v1574
      %v1733 = vpop.f32.mrb[0].mxu0
      %v1734 = vadd.f32 0.0, %v1733
      %v1735 = vpop.f32.mrb[0].mxu0
      %v1736 = vpop.f32.mrb[0].mxu0
      %v1737 = vadd.f32 0.0, %v1736
      %v1738 = vpop.f32.mrb[0].mxu0
      %1739 = vdwg.mxu0
      %v1740 = vadd.f32 %v1534, %v1614
      %v1741 = vadd.f32 %v1535, %v1617
      %v1742 = vadd.f32 %v1536, %v1622
      %v1743 = vadd.f32 %v1537, %v1625
      %v1744 = vadd.f32 %v1538, %v1630
      %v1745 = vadd.f32 %v1539, %v1633
      %v1746 = vadd.f32 %v1540, %v1638
      %v1747 = vadd.f32 %v1541, %v1641
      %v1748 = vadd.f32 %v1542, %v1646
      %v1749 = vadd.f32 %v1543, %v1649
      %v1750 = vadd.f32 %v1544, %v1654
      %v1751 = vadd.f32 %v1545, %v1657
      %v1752 = vadd.f32 %v1546, %v1662
      %v1753 = vadd.f32 %v1547, %v1665
      %v1754 = vadd.f32 %v1548, %v1670
      %v1755 = vadd.f32 %v1549, %v1673
      %v1756 = vadd.f32 %v1550, %v1678
      %v1757 = vadd.f32 %v1551, %v1681
      %v1758 = vadd.f32 %v1552, %v1686
      %v1759 = vadd.f32 %v1553, %v1689
      %v1760 = vadd.f32 %v1554, %v1694
      %v1761 = vadd.f32 %v1555, %v1697
      %v1762 = vadd.f32 %v1556, %v1702
      %v1763 = vadd.f32 %v1557, %v1705
      %v1764 = vadd.f32 %v1558, %v1710
      %v1765 = vadd.f32 %v1559, %v1713
      %v1766 = vadd.f32 %v1560, %v1718
      %v1767 = vadd.f32 %v1561, %v1721
      %v1768 = vadd.f32 %v1562, %v1726
      %v1769 = vadd.f32 %v1563, %v1729
      %v1770 = vadd.f32 %v1564, %v1734
      %v1771 = vadd.f32 %v1565, %v1737
      %v1773 = vshrl.u32 %v191, 16
      %v1775 = vrot.slane %v1773, 4
      %v1776 = vshll.u32 %v191, 16
      %v1778 = vrot.slane %v1776, 5
      %v1779 = vor.u32 %v1775, %v1778
      %v1780 = vrot.slane %v1779, 4
      %v1782 = vshll.u32 %v192, 16
      %v1784 = vrot.slane %v1782, 5
      %v1785 = vsel %vm200, %v1780, %v1784
      %v1786 = vshrl.u32 %v192, 16
      %v1788 = vrot.slane %v1786, 4
      %v1789 = vor.u32 %v1788, %v1784
      %v1790 = vrot.slane %v1789, 4
      %v1792 = vshll.u32 %v193, 16
      %v1794 = vrot.slane %v1792, 5
      %v1795 = vsel %vm200, %v1790, %v1794
      %s1796 = scalar_lea.vmem %s1, 8
      %v1797 = vld [vmem:[%s1796] sm:$0x3]
      %v1798 = vunpack.c.l.b16 %v1785
      %v1799 = vunpack.c.l.b16 %v1795
      %v1800 = vpack.c.b16 %v1799, %v1798
      %v1802 = vsel %vm635, %v1800, 0
      %v1805 = vsel %vm684, %v1797, 0
      %1807 = vmatprep.subr.bf16.mxu0 0
      %1808 = vmatpush1.bf16.msra.mxu0 %v1805
      %1809 = vmatprep.subr.bf16.mxu0 0
      %1810 = vmatpush1.bf16.msra.mxu0 0
      %1811 = vmatprep.subr.bf16.mxu0 0
      %1812 = vmatpush1.bf16.msra.mxu0 0
      %1813 = vmatprep.subr.bf16.mxu0 0
      %1814 = vmatpush1.bf16.msra.mxu0 0
      %1815 = vmatprep.subr.bf16.mxu0 0
      %1816 = vmatpush1.bf16.msra.mxu0 0
      %1817 = vmatprep.subr.bf16.mxu0 0
      %1818 = vmatpush1.bf16.msra.mxu0 0
      %1819 = vmatprep.subr.bf16.mxu0 0
      %1820 = vmatpush1.bf16.msra.mxu0 0
      %1821 = vmatprep.subr.bf16.mxu0 0
      %1822 = vmatpush1.bf16.msra.mxu0 0
      %1823 = vmatprep.subr.bf16.mxu0 0
      %1824 = vmatpush1.bf16.msra.mxu0 0
      %1825 = vmatprep.subr.bf16.mxu0 0
      %1826 = vmatpush1.bf16.msra.mxu0 0
      %1827 = vmatprep.subr.bf16.mxu0 0
      %1828 = vmatpush1.bf16.msra.mxu0 0
      %1829 = vmatprep.subr.bf16.mxu0 0
      %1830 = vmatpush1.bf16.msra.mxu0 0
      %1831 = vmatprep.subr.bf16.mxu0 0
      %1832 = vmatpush1.bf16.msra.mxu0 0
      %1833 = vmatprep.subr.bf16.mxu0 0
      %1834 = vmatpush1.bf16.msra.mxu0 0
      %1835 = vmatprep.subr.bf16.mxu0 0
      %1836 = vmatpush1.bf16.msra.mxu0 0
      %1837 = vmatprep.subr.bf16.mxu0 0
      %1838 = vmatpush1.bf16.msra.mxu0 0
      %1839 = vmatprep.mubr.bf16.mxu0 0
      %1840 = vmatmul.mubr.bf16.gmra.mrb[0].mxu0 %v640
      %v1841 = vpop.f32.mrb[0].mxu0
      %v1842 = vadd.f32 0.0, %v1841
      %v1843 = vpop.f32.mrb[0].mxu0
      %v1844 = vpop.f32.mrb[0].mxu0
      %v1845 = vadd.f32 0.0, %v1844
      %v1846 = vpop.f32.mrb[0].mxu0
      %1847 = vmatprep.mubr.bf16.mxu0 0
      %1848 = vmatmul.mubr.bf16.gmra.mrb[0].mxu0 %v643
      %v1849 = vpop.f32.mrb[0].mxu0
      %v1850 = vadd.f32 0.0, %v1849
      %v1851 = vpop.f32.mrb[0].mxu0
      %v1852 = vpop.f32.mrb[0].mxu0
      %v1853 = vadd.f32 0.0, %v1852
      %v1854 = vpop.f32.mrb[0].mxu0
      %1855 = vmatprep.mubr.bf16.mxu0 0
      %1856 = vmatmul.mubr.bf16.gmra.mrb[0].mxu0 %v646
      %v1857 = vpop.f32.mrb[0].mxu0
      %v1858 = vadd.f32 0.0, %v1857
      %v1859 = vpop.f32.mrb[0].mxu0
      %v1860 = vpop.f32.mrb[0].mxu0
      %v1861 = vadd.f32 0.0, %v1860
      %v1862 = vpop.f32.mrb[0].mxu0
      %1863 = vmatprep.mubr.bf16.mxu0 0
      %1864 = vmatmul.mubr.bf16.gmra.mrb[0].mxu0 %v649
      %v1865 = vpop.f32.mrb[0].mxu0
      %v1866 = vadd.f32 0.0, %v1865
      %v1867 = vpop.f32.mrb[0].mxu0
      %v1868 = vpop.f32.mrb[0].mxu0
      %v1869 = vadd.f32 0.0, %v1868
      %v1870 = vpop.f32.mrb[0].mxu0
      %1871 = vmatprep.mubr.bf16.mxu0 0
      %1872 = vmatmul.mubr.bf16.gmra.mrb[0].mxu0 %v652
      %v1873 = vpop.f32.mrb[0].mxu0
      %v1874 = vadd.f32 0.0, %v1873
      %v1875 = vpop.f32.mrb[0].mxu0
      %v1876 = vpop.f32.mrb[0].mxu0
      %v1877 = vadd.f32 0.0, %v1876
      %v1878 = vpop.f32.mrb[0].mxu0
      %1879 = vmatprep.mubr.bf16.mxu0 0
      %1880 = vmatmul.mubr.bf16.gmra.mrb[0].mxu0 %v655
      %v1881 = vpop.f32.mrb[0].mxu0
      %v1882 = vadd.f32 0.0, %v1881
      %v1883 = vpop.f32.mrb[0].mxu0
      %v1884 = vpop.f32.mrb[0].mxu0
      %v1885 = vadd.f32 0.0, %v1884
      %v1886 = vpop.f32.mrb[0].mxu0
      %1887 = vmatprep.mubr.bf16.mxu0 0
      %1888 = vmatmul.mubr.bf16.gmra.mrb[0].mxu0 %v658
      %v1889 = vpop.f32.mrb[0].mxu0
      %v1890 = vadd.f32 0.0, %v1889
      %v1891 = vpop.f32.mrb[0].mxu0
      %v1892 = vpop.f32.mrb[0].mxu0
      %v1893 = vadd.f32 0.0, %v1892
      %v1894 = vpop.f32.mrb[0].mxu0
      %1895 = vmatprep.mubr.bf16.mxu0 0
      %1896 = vmatmul.mubr.bf16.gmra.mrb[0].mxu0 %v661
      %v1897 = vpop.f32.mrb[0].mxu0
      %v1898 = vadd.f32 0.0, %v1897
      %v1899 = vpop.f32.mrb[0].mxu0
      %v1900 = vpop.f32.mrb[0].mxu0
      %v1901 = vadd.f32 0.0, %v1900
      %v1902 = vpop.f32.mrb[0].mxu0
      %1903 = vmatprep.mubr.bf16.mxu0 0
      %1904 = vmatmul.mubr.bf16.gmra.mrb[0].mxu0 %v664
      %v1905 = vpop.f32.mrb[0].mxu0
      %v1906 = vadd.f32 0.0, %v1905
      %v1907 = vpop.f32.mrb[0].mxu0
      %v1908 = vpop.f32.mrb[0].mxu0
      %v1909 = vadd.f32 0.0, %v1908
      %v1910 = vpop.f32.mrb[0].mxu0
      %1911 = vmatprep.mubr.bf16.mxu0 0
      %1912 = vmatmul.mubr.bf16.gmra.mrb[0].mxu0 %v667
      %v1913 = vpop.f32.mrb[0].mxu0
      %v1914 = vadd.f32 0.0, %v1913
      %v1915 = vpop.f32.mrb[0].mxu0
      %v1916 = vpop.f32.mrb[0].mxu0
      %v1917 = vadd.f32 0.0, %v1916
      %v1918 = vpop.f32.mrb[0].mxu0
      %1919 = vmatprep.mubr.bf16.mxu0 0
      %1920 = vmatmul.mubr.bf16.gmra.mrb[0].mxu0 %v670
      %v1921 = vpop.f32.mrb[0].mxu0
      %v1922 = vadd.f32 0.0, %v1921
      %v1923 = vpop.f32.mrb[0].mxu0
      %v1924 = vpop.f32.mrb[0].mxu0
      %v1925 = vadd.f32 0.0, %v1924
      %v1926 = vpop.f32.mrb[0].mxu0
      %1927 = vmatprep.mubr.bf16.mxu0 0
      %1928 = vmatmul.mubr.bf16.gmra.mrb[0].mxu0 %v673
      %v1929 = vpop.f32.mrb[0].mxu0
      %v1930 = vadd.f32 0.0, %v1929
      %v1931 = vpop.f32.mrb[0].mxu0
      %v1932 = vpop.f32.mrb[0].mxu0
      %v1933 = vadd.f32 0.0, %v1932
      %v1934 = vpop.f32.mrb[0].mxu0
      %1935 = vmatprep.mubr.bf16.mxu0 0
      %1936 = vmatmul.mubr.bf16.gmra.mrb[0].mxu0 %v676
      %v1937 = vpop.f32.mrb[0].mxu0
      %v1938 = vadd.f32 0.0, %v1937
      %v1939 = vpop.f32.mrb[0].mxu0
      %v1940 = vpop.f32.mrb[0].mxu0
      %v1941 = vadd.f32 0.0, %v1940
      %v1942 = vpop.f32.mrb[0].mxu0
      %1943 = vmatprep.mubr.bf16.mxu0 0
      %1944 = vmatmul.mubr.bf16.gmra.mrb[0].mxu0 %v679
      %v1945 = vpop.f32.mrb[0].mxu0
      %v1946 = vadd.f32 0.0, %v1945
      %v1947 = vpop.f32.mrb[0].mxu0
      %v1948 = vpop.f32.mrb[0].mxu0
      %v1949 = vadd.f32 0.0, %v1948
      %v1950 = vpop.f32.mrb[0].mxu0
      %1951 = vmatprep.mubr.bf16.mxu0 0
      %1952 = vmatmul.mubr.bf16.gmra.mrb[0].mxu0 %v682
      %v1953 = vpop.f32.mrb[0].mxu0
      %v1954 = vadd.f32 0.0, %v1953
      %v1955 = vpop.f32.mrb[0].mxu0
      %v1956 = vpop.f32.mrb[0].mxu0
      %v1957 = vadd.f32 0.0, %v1956
      %v1958 = vpop.f32.mrb[0].mxu0
      %1959 = vmatprep.mubr.bf16.mxu0 0
      %1960 = vmatmul.mubr.bf16.gmra.mrb[0].mxu0 %v1802
      %v1961 = vpop.f32.mrb[0].mxu0
      %v1962 = vadd.f32 0.0, %v1961
      %v1963 = vpop.f32.mrb[0].mxu0
      %v1964 = vpop.f32.mrb[0].mxu0
      %v1965 = vadd.f32 0.0, %v1964
      %v1966 = vpop.f32.mrb[0].mxu0
      %1967 = vdwg.mxu0
      %v1968 = vadd.f32 %v1740, %v1842
      %v1969 = vadd.f32 %v1741, %v1845
      %v1970 = vadd.f32 %v1742, %v1850
      %v1971 = vadd.f32 %v1743, %v1853
      %v1972 = vadd.f32 %v1744, %v1858
      %v1973 = vadd.f32 %v1745, %v1861
      %v1974 = vadd.f32 %v1746, %v1866
      %v1975 = vadd.f32 %v1747, %v1869
      %v1976 = vadd.f32 %v1748, %v1874
      %v1977 = vadd.f32 %v1749, %v1877
      %v1978 = vadd.f32 %v1750, %v1882
      %v1979 = vadd.f32 %v1751, %v1885
      %v1980 = vadd.f32 %v1752, %v1890
      %v1981 = vadd.f32 %v1753, %v1893
      %v1982 = vadd.f32 %v1754, %v1898
      %v1983 = vadd.f32 %v1755, %v1901
      %v1984 = vadd.f32 %v1756, %v1906
      %v1985 = vadd.f32 %v1757, %v1909
      %v1986 = vadd.f32 %v1758, %v1914
      %v1987 = vadd.f32 %v1759, %v1917
      %v1988 = vadd.f32 %v1760, %v1922
      %v1989 = vadd.f32 %v1761, %v1925
      %v1990 = vadd.f32 %v1762, %v1930
      %v1991 = vadd.f32 %v1763, %v1933
      %v1992 = vadd.f32 %v1764, %v1938
      %v1993 = vadd.f32 %v1765, %v1941
      %v1994 = vadd.f32 %v1766, %v1946
      %v1995 = vadd.f32 %v1767, %v1949
      %v1996 = vadd.f32 %v1768, %v1954
      %v1997 = vadd.f32 %v1769, %v1957
      %v1998 = vadd.f32 %v1770, %v1962
      %v1999 = vadd.f32 %v1771, %v1965
      %v2001 = vrot.slane %v191, 5
      %v2002 = vrot.slane %v2001, 4
      %v2003 = vrot.slane %v192, 5
      %v2004 = vsel %vm1159, %v2002, %v2003
      %v2005 = vrot.slane %v2003, 4
      %v2006 = vrot.slane %v193, 5
      %v2007 = vsel %vm1159, %v2005, %v2006
      %s2008 = scalar_lea.vmem %s1, 10
      %v2009 = vld [vmem:[%s2008] sm:$0x3]
      %v2010 = vunpack.c.l.b16 %v2004
      %v2011 = vunpack.c.l.b16 %v2007
      %v2012 = vpack.c.b16 %v2011, %v2010
      %v2014 = vsel %vm635, %v2012, 0
      %v2017 = vsel %vm684, %v2009, 0
      %2019 = vmatprep.subr.bf16.mxu0 0
      %2020 = vmatpush1.bf16.msra.mxu0 %v2017
      %2021 = vmatprep.subr.bf16.mxu0 0
      %2022 = vmatpush1.bf16.msra.mxu0 0
      %2023 = vmatprep.subr.bf16.mxu0 0
      %2024 = vmatpush1.bf16.msra.mxu0 0
      %2025 = vmatprep.subr.bf16.mxu0 0
      %2026 = vmatpush1.bf16.msra.mxu0 0
      %2027 = vmatprep.subr.bf16.mxu0 0
      %2028 = vmatpush1.bf16.msra.mxu0 0
      %2029 = vmatprep.subr.bf16.mxu0 0
      %2030 = vmatpush1.bf16.msra.mxu0 0
      %2031 = vmatprep.subr.bf16.mxu0 0
      %2032 = vmatpush1.bf16.msra.mxu0 0
      %2033 = vmatprep.subr.bf16.mxu0 0
      %2034 = vmatpush1.bf16.msra.mxu0 0
      %2035 = vmatprep.subr.bf16.mxu0 0
      %2036 = vmatpush1.bf16.msra.mxu0 0
      %2037 = vmatprep.subr.bf16.mxu0 0
      %2038 = vmatpush1.bf16.msra.mxu0 0
      %2039 = vmatprep.subr.bf16.mxu0 0
      %2040 = vmatpush1.bf16.msra.mxu0 0
      %2041 = vmatprep.subr.bf16.mxu0 0
      %2042 = vmatpush1.bf16.msra.mxu0 0
      %2043 = vmatprep.subr.bf16.mxu0 0
      %2044 = vmatpush1.bf16.msra.mxu0 0
      %2045 = vmatprep.subr.bf16.mxu0 0
      %2046 = vmatpush1.bf16.msra.mxu0 0
      %2047 = vmatprep.subr.bf16.mxu0 0
      %2048 = vmatpush1.bf16.msra.mxu0 0
      %2049 = vmatprep.subr.bf16.mxu0 0
      %2050 = vmatpush1.bf16.msra.mxu0 0
      %2051 = vmatprep.mubr.bf16.mxu0 0
      %2052 = vmatmul.mubr.bf16.gmra.mrb[0].mxu0 %v1326
      %v2053 = vpop.f32.mrb[0].mxu0
      %v2054 = vadd.f32 0.0, %v2053
      %v2055 = vpop.f32.mrb[0].mxu0
      %v2056 = vpop.f32.mrb[0].mxu0
      %v2057 = vadd.f32 0.0, %v2056
      %v2058 = vpop.f32.mrb[0].mxu0
      %2059 = vmatprep.mubr.bf16.mxu0 0
      %2060 = vmatmul.mubr.bf16.gmra.mrb[0].mxu0 %v1329
      %v2061 = vpop.f32.mrb[0].mxu0
      %v2062 = vadd.f32 0.0, %v2061
      %v2063 = vpop.f32.mrb[0].mxu0
      %v2064 = vpop.f32.mrb[0].mxu0
      %v2065 = vadd.f32 0.0, %v2064
      %v2066 = vpop.f32.mrb[0].mxu0
      %2067 = vmatprep.mubr.bf16.mxu0 0
      %2068 = vmatmul.mubr.bf16.gmra.mrb[0].mxu0 %v1332
      %v2069 = vpop.f32.mrb[0].mxu0
      %v2070 = vadd.f32 0.0, %v2069
      %v2071 = vpop.f32.mrb[0].mxu0
      %v2072 = vpop.f32.mrb[0].mxu0
      %v2073 = vadd.f32 0.0, %v2072
      %v2074 = vpop.f32.mrb[0].mxu0
      %2075 = vmatprep.mubr.bf16.mxu0 0
      %2076 = vmatmul.mubr.bf16.gmra.mrb[0].mxu0 %v1335
      %v2077 = vpop.f32.mrb[0].mxu0
      %v2078 = vadd.f32 0.0, %v2077
      %v2079 = vpop.f32.mrb[0].mxu0
      %v2080 = vpop.f32.mrb[0].mxu0
      %v2081 = vadd.f32 0.0, %v2080
      %v2082 = vpop.f32.mrb[0].mxu0
      %2083 = vmatprep.mubr.bf16.mxu0 0
      %2084 = vmatmul.mubr.bf16.gmra.mrb[0].mxu0 %v1338
      %v2085 = vpop.f32.mrb[0].mxu0
      %v2086 = vadd.f32 0.0, %v2085
      %v2087 = vpop.f32.mrb[0].mxu0
      %v2088 = vpop.f32.mrb[0].mxu0
      %v2089 = vadd.f32 0.0, %v2088
      %v2090 = vpop.f32.mrb[0].mxu0
      %2091 = vmatprep.mubr.bf16.mxu0 0
      %2092 = vmatmul.mubr.bf16.gmra.mrb[0].mxu0 %v1341
      %v2093 = vpop.f32.mrb[0].mxu0
      %v2094 = vadd.f32 0.0, %v2093
      %v2095 = vpop.f32.mrb[0].mxu0
      %v2096 = vpop.f32.mrb[0].mxu0
      %v2097 = vadd.f32 0.0, %v2096
      %v2098 = vpop.f32.mrb[0].mxu0
      %2099 = vmatprep.mubr.bf16.mxu0 0
      %2100 = vmatmul.mubr.bf16.gmra.mrb[0].mxu0 %v1344
      %v2101 = vpop.f32.mrb[0].mxu0
      %v2102 = vadd.f32 0.0, %v2101
      %v2103 = vpop.f32.mrb[0].mxu0
      %v2104 = vpop.f32.mrb[0].mxu0
      %v2105 = vadd.f32 0.0, %v2104
      %v2106 = vpop.f32.mrb[0].mxu0
      %2107 = vmatprep.mubr.bf16.mxu0 0
      %2108 = vmatmul.mubr.bf16.gmra.mrb[0].mxu0 %v1347
      %v2109 = vpop.f32.mrb[0].mxu0
      %v2110 = vadd.f32 0.0, %v2109
      %v2111 = vpop.f32.mrb[0].mxu0
      %v2112 = vpop.f32.mrb[0].mxu0
      %v2113 = vadd.f32 0.0, %v2112
      %v2114 = vpop.f32.mrb[0].mxu0
      %2115 = vmatprep.mubr.bf16.mxu0 0
      %2116 = vmatmul.mubr.bf16.gmra.mrb[0].mxu0 %v1350
      %v2117 = vpop.f32.mrb[0].mxu0
      %v2118 = vadd.f32 0.0, %v2117
      %v2119 = vpop.f32.mrb[0].mxu0
      %v2120 = vpop.f32.mrb[0].mxu0
      %v2121 = vadd.f32 0.0, %v2120
      %v2122 = vpop.f32.mrb[0].mxu0
      %2123 = vmatprep.mubr.bf16.mxu0 0
      %2124 = vmatmul.mubr.bf16.gmra.mrb[0].mxu0 %v1353
      %v2125 = vpop.f32.mrb[0].mxu0
      %v2126 = vadd.f32 0.0, %v2125
      %v2127 = vpop.f32.mrb[0].mxu0
      %v2128 = vpop.f32.mrb[0].mxu0
      %v2129 = vadd.f32 0.0, %v2128
      %v2130 = vpop.f32.mrb[0].mxu0
      %2131 = vmatprep.mubr.bf16.mxu0 0
      %2132 = vmatmul.mubr.bf16.gmra.mrb[0].mxu0 %v1356
      %v2133 = vpop.f32.mrb[0].mxu0
      %v2134 = vadd.f32 0.0, %v2133
      %v2135 = vpop.f32.mrb[0].mxu0
      %v2136 = vpop.f32.mrb[0].mxu0
      %v2137 = vadd.f32 0.0, %v2136
      %v2138 = vpop.f32.mrb[0].mxu0
      %2139 = vmatprep.mubr.bf16.mxu0 0
      %2140 = vmatmul.mubr.bf16.gmra.mrb[0].mxu0 %v1359
      %v2141 = vpop.f32.mrb[0].mxu0
      %v2142 = vadd.f32 0.0, %v2141
      %v2143 = vpop.f32.mrb[0].mxu0
      %v2144 = vpop.f32.mrb[0].mxu0
      %v2145 = vadd.f32 0.0, %v2144
      %v2146 = vpop.f32.mrb[0].mxu0
      %2147 = vmatprep.mubr.bf16.mxu0 0
      %2148 = vmatmul.mubr.bf16.gmra.mrb[0].mxu0 %v1362
      %v2149 = vpop.f32.mrb[0].mxu0
      %v2150 = vadd.f32 0.0, %v2149
      %v2151 = vpop.f32.mrb[0].mxu0
      %v2152 = vpop.f32.mrb[0].mxu0
      %v2153 = vadd.f32 0.0, %v2152
      %v2154 = vpop.f32.mrb[0].mxu0
      %2155 = vmatprep.mubr.bf16.mxu0 0
      %2156 = vmatmul.mubr.bf16.gmra.mrb[0].mxu0 %v1365
      %v2157 = vpop.f32.mrb[0].mxu0
      %v2158 = vadd.f32 0.0, %v2157
      %v2159 = vpop.f32.mrb[0].mxu0
      %v2160 = vpop.f32.mrb[0].mxu0
      %v2161 = vadd.f32 0.0, %v2160
      %v2162 = vpop.f32.mrb[0].mxu0
      %2163 = vmatprep.mubr.bf16.mxu0 0
      %2164 = vmatmul.mubr.bf16.gmra.mrb[0].mxu0 %v1368
      %v2165 = vpop.f32.mrb[0].mxu0
      %v2166 = vadd.f32 0.0, %v2165
      %v2167 = vpop.f32.mrb[0].mxu0
      %v2168 = vpop.f32.mrb[0].mxu0
      %v2169 = vadd.f32 0.0, %v2168
      %v2170 = vpop.f32.mrb[0].mxu0
      %2171 = vmatprep.mubr.bf16.mxu0 0
      %2172 = vmatmul.mubr.bf16.gmra.mrb[0].mxu0 %v2014
      %v2173 = vpop.f32.mrb[0].mxu0
      %v2174 = vadd.f32 0.0, %v2173
      %v2175 = vpop.f32.mrb[0].mxu0
      %v2176 = vpop.f32.mrb[0].mxu0
      %v2177 = vadd.f32 0.0, %v2176
      %v2178 = vpop.f32.mrb[0].mxu0
      %2179 = vdwg.mxu0
      %v2180 = vadd.f32 %v1968, %v2054
      %v2181 = vadd.f32 %v1969, %v2057
      %v2182 = vadd.f32 %v1970, %v2062
      %v2183 = vadd.f32 %v1971, %v2065
      %v2184 = vadd.f32 %v1972, %v2070
      %v2185 = vadd.f32 %v1973, %v2073
      %v2186 = vadd.f32 %v1974, %v2078
      %v2187 = vadd.f32 %v1975, %v2081
      %v2188 = vadd.f32 %v1976, %v2086
      %v2189 = vadd.f32 %v1977, %v2089
      %v2190 = vadd.f32 %v1978, %v2094
      %v2191 = vadd.f32 %v1979, %v2097
      %v2192 = vadd.f32 %v1980, %v2102
      %v2193 = vadd.f32 %v1981, %v2105
      %v2194 = vadd.f32 %v1982, %v2110
      %v2195 = vadd.f32 %v1983, %v2113
      %v2196 = vadd.f32 %v1984, %v2118
      %v2197 = vadd.f32 %v1985, %v2121
      %v2198 = vadd.f32 %v1986, %v2126
      %v2199 = vadd.f32 %v1987, %v2129
      %v2200 = vadd.f32 %v1988, %v2134
      %v2201 = vadd.f32 %v1989, %v2137
      %v2202 = vadd.f32 %v1990, %v2142
      %v2203 = vadd.f32 %v1991, %v2145
      %v2204 = vadd.f32 %v1992, %v2150
      %v2205 = vadd.f32 %v1993, %v2153
      %v2206 = vadd.f32 %v1994, %v2158
      %v2207 = vadd.f32 %v1995, %v2161
      %v2208 = vadd.f32 %v1996, %v2166
      %v2209 = vadd.f32 %v1997, %v2169
      %v2210 = vadd.f32 %v1998, %v2174
      %v2211 = vadd.f32 %v1999, %v2177
      %s2212 = scalar_lea.vmem %s1, 12
      %v2213 = vld [vmem:[%s2212] sm:$0x3]
      %v2216 = vunpack.c.l.b16 %v194
      %v2217 = vunpack.c.l.b16 %v195
      %v2218 = vpack.c.b16 %v2217, %v2216
      %v2220 = vsel %vm635, %v2218, 0
      %v2223 = vsel %vm684, %v2213, 0
      %2225 = vmatprep.subr.bf16.mxu0 0
      %2226 = vmatpush1.bf16.msra.mxu0 %v2223
      %2227 = vmatprep.subr.bf16.mxu0 0
      %2228 = vmatpush1.bf16.msra.mxu0 0
      %2229 = vmatprep.subr.bf16.mxu0 0
      %2230 = vmatpush1.bf16.msra.mxu0 0
      %2231 = vmatprep.subr.bf16.mxu0 0
      %2232 = vmatpush1.bf16.msra.mxu0 0
      %2233 = vmatprep.subr.bf16.mxu0 0
      %2234 = vmatpush1.bf16.msra.mxu0 0
      %2235 = vmatprep.subr.bf16.mxu0 0
      %2236 = vmatpush1.bf16.msra.mxu0 0
      %2237 = vmatprep.subr.bf16.mxu0 0
      %2238 = vmatpush1.bf16.msra.mxu0 0
      %2239 = vmatprep.subr.bf16.mxu0 0
      %2240 = vmatpush1.bf16.msra.mxu0 0
      %2241 = vmatprep.subr.bf16.mxu0 0
      %2242 = vmatpush1.bf16.msra.mxu0 0
      %2243 = vmatprep.subr.bf16.mxu0 0
      %2244 = vmatpush1.bf16.msra.mxu0 0
      %2245 = vmatprep.subr.bf16.mxu0 0
      %2246 = vmatpush1.bf16.msra.mxu0 0
      %2247 = vmatprep.subr.bf16.mxu0 0
      %2248 = vmatpush1.bf16.msra.mxu0 0
      %2249 = vmatprep.subr.bf16.mxu0 0
      %2250 = vmatpush1.bf16.msra.mxu0 0
      %2251 = vmatprep.subr.bf16.mxu0 0
      %2252 = vmatpush1.bf16.msra.mxu0 0
      %2253 = vmatprep.subr.bf16.mxu0 0
      %2254 = vmatpush1.bf16.msra.mxu0 0
      %2255 = vmatprep.subr.bf16.mxu0 0
      %2256 = vmatpush1.bf16.msra.mxu0 0
      %2257 = vmatprep.mubr.bf16.mxu0 0
      %2258 = vmatmul.mubr.bf16.gmra.mrb[0].mxu0 %v936
      %v2259 = vpop.f32.mrb[0].mxu0
      %v2260 = vadd.f32 0.0, %v2259
      %v2261 = vpop.f32.mrb[0].mxu0
      %v2262 = vpop.f32.mrb[0].mxu0
      %v2263 = vadd.f32 0.0, %v2262
      %v2264 = vpop.f32.mrb[0].mxu0
      %2265 = vmatprep.mubr.bf16.mxu0 0
      %2266 = vmatmul.mubr.bf16.gmra.mrb[0].mxu0 %v939
      %v2267 = vpop.f32.mrb[0].mxu0
      %v2268 = vadd.f32 0.0, %v2267
      %v2269 = vpop.f32.mrb[0].mxu0
      %v2270 = vpop.f32.mrb[0].mxu0
      %v2271 = vadd.f32 0.0, %v2270
      %v2272 = vpop.f32.mrb[0].mxu0
      %2273 = vmatprep.mubr.bf16.mxu0 0
      %2274 = vmatmul.mubr.bf16.gmra.mrb[0].mxu0 %v942
      %v2275 = vpop.f32.mrb[0].mxu0
      %v2276 = vadd.f32 0.0, %v2275
      %v2277 = vpop.f32.mrb[0].mxu0
      %v2278 = vpop.f32.mrb[0].mxu0
      %v2279 = vadd.f32 0.0, %v2278
      %v2280 = vpop.f32.mrb[0].mxu0
      %2281 = vmatprep.mubr.bf16.mxu0 0
      %2282 = vmatmul.mubr.bf16.gmra.mrb[0].mxu0 %v945
      %v2283 = vpop.f32.mrb[0].mxu0
      %v2284 = vadd.f32 0.0, %v2283
      %v2285 = vpop.f32.mrb[0].mxu0
      %v2286 = vpop.f32.mrb[0].mxu0
      %v2287 = vadd.f32 0.0, %v2286
      %v2288 = vpop.f32.mrb[0].mxu0
      %2289 = vmatprep.mubr.bf16.mxu0 0
      %2290 = vmatmul.mubr.bf16.gmra.mrb[0].mxu0 %v948
      %v2291 = vpop.f32.mrb[0].mxu0
      %v2292 = vadd.f32 0.0, %v2291
      %v2293 = vpop.f32.mrb[0].mxu0
      %v2294 = vpop.f32.mrb[0].mxu0
      %v2295 = vadd.f32 0.0, %v2294
      %v2296 = vpop.f32.mrb[0].mxu0
      %2297 = vmatprep.mubr.bf16.mxu0 0
      %2298 = vmatmul.mubr.bf16.gmra.mrb[0].mxu0 %v951
      %v2299 = vpop.f32.mrb[0].mxu0
      %v2300 = vadd.f32 0.0, %v2299
      %v2301 = vpop.f32.mrb[0].mxu0
      %v2302 = vpop.f32.mrb[0].mxu0
      %v2303 = vadd.f32 0.0, %v2302
      %v2304 = vpop.f32.mrb[0].mxu0
      %2305 = vmatprep.mubr.bf16.mxu0 0
      %2306 = vmatmul.mubr.bf16.gmra.mrb[0].mxu0 %v954
      %v2307 = vpop.f32.mrb[0].mxu0
      %v2308 = vadd.f32 0.0, %v2307
      %v2309 = vpop.f32.mrb[0].mxu0
      %v2310 = vpop.f32.mrb[0].mxu0
      %v2311 = vadd.f32 0.0, %v2310
      %v2312 = vpop.f32.mrb[0].mxu0
      %2313 = vmatprep.mubr.bf16.mxu0 0
      %2314 = vmatmul.mubr.bf16.gmra.mrb[0].mxu0 %v957
      %v2315 = vpop.f32.mrb[0].mxu0
      %v2316 = vadd.f32 0.0, %v2315
      %v2317 = vpop.f32.mrb[0].mxu0
      %v2318 = vpop.f32.mrb[0].mxu0
      %v2319 = vadd.f32 0.0, %v2318
      %v2320 = vpop.f32.mrb[0].mxu0
      %2321 = vmatprep.mubr.bf16.mxu0 0
      %2322 = vmatmul.mubr.bf16.gmra.mrb[0].mxu0 %v960
      %v2323 = vpop.f32.mrb[0].mxu0
      %v2324 = vadd.f32 0.0, %v2323
      %v2325 = vpop.f32.mrb[0].mxu0
      %v2326 = vpop.f32.mrb[0].mxu0
      %v2327 = vadd.f32 0.0, %v2326
      %v2328 = vpop.f32.mrb[0].mxu0
      %2329 = vmatprep.mubr.bf16.mxu0 0
      %2330 = vmatmul.mubr.bf16.gmra.mrb[0].mxu0 %v963
      %v2331 = vpop.f32.mrb[0].mxu0
      %v2332 = vadd.f32 0.0, %v2331
      %v2333 = vpop.f32.mrb[0].mxu0
      %v2334 = vpop.f32.mrb[0].mxu0
      %v2335 = vadd.f32 0.0, %v2334
      %v2336 = vpop.f32.mrb[0].mxu0
      %2337 = vmatprep.mubr.bf16.mxu0 0
      %2338 = vmatmul.mubr.bf16.gmra.mrb[0].mxu0 %v966
      %v2339 = vpop.f32.mrb[0].mxu0
      %v2340 = vadd.f32 0.0, %v2339
      %v2341 = vpop.f32.mrb[0].mxu0
      %v2342 = vpop.f32.mrb[0].mxu0
      %v2343 = vadd.f32 0.0, %v2342
      %v2344 = vpop.f32.mrb[0].mxu0
      %2345 = vmatprep.mubr.bf16.mxu0 0
      %2346 = vmatmul.mubr.bf16.gmra.mrb[0].mxu0 %v969
      %v2347 = vpop.f32.mrb[0].mxu0
      %v2348 = vadd.f32 0.0, %v2347
      %v2349 = vpop.f32.mrb[0].mxu0
      %v2350 = vpop.f32.mrb[0].mxu0
      %v2351 = vadd.f32 0.0, %v2350
      %v2352 = vpop.f32.mrb[0].mxu0
      %2353 = vmatprep.mubr.bf16.mxu0 0
      %2354 = vmatmul.mubr.bf16.gmra.mrb[0].mxu0 %v972
      %v2355 = vpop.f32.mrb[0].mxu0
      %v2356 = vadd.f32 0.0, %v2355
      %v2357 = vpop.f32.mrb[0].mxu0
      %v2358 = vpop.f32.mrb[0].mxu0
      %v2359 = vadd.f32 0.0, %v2358
      %v2360 = vpop.f32.mrb[0].mxu0
      %2361 = vmatprep.mubr.bf16.mxu0 0
      %2362 = vmatmul.mubr.bf16.gmra.mrb[0].mxu0 %v975
      %v2363 = vpop.f32.mrb[0].mxu0
      %v2364 = vadd.f32 0.0, %v2363
      %v2365 = vpop.f32.mrb[0].mxu0
      %v2366 = vpop.f32.mrb[0].mxu0
      %v2367 = vadd.f32 0.0, %v2366
      %v2368 = vpop.f32.mrb[0].mxu0
      %2369 = vmatprep.mubr.bf16.mxu0 0
      %2370 = vmatmul.mubr.bf16.gmra.mrb[0].mxu0 %v1574
      %v2371 = vpop.f32.mrb[0].mxu0
      %v2372 = vadd.f32 0.0, %v2371
      %v2373 = vpop.f32.mrb[0].mxu0
      %v2374 = vpop.f32.mrb[0].mxu0
      %v2375 = vadd.f32 0.0, %v2374
      %v2376 = vpop.f32.mrb[0].mxu0
      %2377 = vmatprep.mubr.bf16.mxu0 0
      %2378 = vmatmul.mubr.bf16.gmra.mrb[0].mxu0 %v2220
      %v2379 = vpop.f32.mrb[0].mxu0
      %v2380 = vadd.f32 0.0, %v2379
      %v2381 = vpop.f32.mrb[0].mxu0
      %v2382 = vpop.f32.mrb[0].mxu0
      %v2383 = vadd.f32 0.0, %v2382
      %v2384 = vpop.f32.mrb[0].mxu0
      %2385 = vdwg.mxu0
      %v2386 = vadd.f32 %v2180, %v2260
      %v2387 = vadd.f32 %v2181, %v2263
      %v2388 = vadd.f32 %v2182, %v2268
      %v2389 = vadd.f32 %v2183, %v2271
      %v2390 = vadd.f32 %v2184, %v2276
      %v2391 = vadd.f32 %v2185, %v2279
      %v2392 = vadd.f32 %v2186, %v2284
      %v2393 = vadd.f32 %v2187, %v2287
      %v2394 = vadd.f32 %v2188, %v2292
      %v2395 = vadd.f32 %v2189, %v2295
      %v2396 = vadd.f32 %v2190, %v2300
      %v2397 = vadd.f32 %v2191, %v2303
      %v2398 = vadd.f32 %v2192, %v2308
      %v2399 = vadd.f32 %v2193, %v2311
      %v2400 = vadd.f32 %v2194, %v2316
      %v2401 = vadd.f32 %v2195, %v2319
      %v2402 = vadd.f32 %v2196, %v2324
      %v2403 = vadd.f32 %v2197, %v2327
      %v2404 = vadd.f32 %v2198, %v2332
      %v2405 = vadd.f32 %v2199, %v2335
      %v2406 = vadd.f32 %v2200, %v2340
      %v2407 = vadd.f32 %v2201, %v2343
      %v2408 = vadd.f32 %v2202, %v2348
      %v2409 = vadd.f32 %v2203, %v2351
      %v2410 = vadd.f32 %v2204, %v2356
      %v2411 = vadd.f32 %v2205, %v2359
      %v2412 = vadd.f32 %v2206, %v2364
      %v2413 = vadd.f32 %v2207, %v2367
      %v2414 = vadd.f32 %v2208, %v2372
      %v2415 = vadd.f32 %v2209, %v2375
      %v2416 = vadd.f32 %v2210, %v2380
      %v2417 = vadd.f32 %v2211, %v2383
      %v2419 = vshrl.u32 %v194, 16
      %v2421 = vrot.slane %v2419, 4
      %v2422 = vshll.u32 %v194, 16
      %v2424 = vrot.slane %v2422, 5
      %v2425 = vor.u32 %v2421, %v2424
      %v2426 = vrot.slane %v2425, 4
      %v2428 = vshll.u32 %v195, 16
      %v2430 = vrot.slane %v2428, 5
      %v2431 = vsel %vm200, %v2426, %v2430
      %v2432 = vshrl.u32 %v195, 16
      %v2434 = vrot.slane %v2432, 4
      %v2435 = vor.u32 %v2434, %v2430
      %v2436 = vrot.slane %v2435, 4
      %v2438 = vshll.u32 %v196, 16
      %v2440 = vrot.slane %v2438, 5
      %v2441 = vsel %vm200, %v2436, %v2440
      %s2442 = scalar_lea.vmem %s1, 14
      %v2443 = vld [vmem:[%s2442] sm:$0x3]
      %v2444 = vunpack.c.l.b16 %v2431
      %v2445 = vunpack.c.l.b16 %v2441
      %v2446 = vpack.c.b16 %v2445, %v2444
      %v2448 = vsel %vm635, %v2446, 0
      %v2451 = vsel %vm684, %v2443, 0
      %2453 = vmatprep.subr.bf16.mxu0 0
      %2454 = vmatpush1.bf16.msra.mxu0 %v2451
      %2455 = vmatprep.subr.bf16.mxu0 0
      %2456 = vmatpush1.bf16.msra.mxu0 0
      %2457 = vmatprep.subr.bf16.mxu0 0
      %2458 = vmatpush1.bf16.msra.mxu0 0
      %2459 = vmatprep.subr.bf16.mxu0 0
      %2460 = vmatpush1.bf16.msra.mxu0 0
      %2461 = vmatprep.subr.bf16.mxu0 0
      %2462 = vmatpush1.bf16.msra.mxu0 0
      %2463 = vmatprep.subr.bf16.mxu0 0
      %2464 = vmatpush1.bf16.msra.mxu0 0
      %2465 = vmatprep.subr.bf16.mxu0 0
      %2466 = vmatpush1.bf16.msra.mxu0 0
      %2467 = vmatprep.subr.bf16.mxu0 0
      %2468 = vmatpush1.bf16.msra.mxu0 0
      %2469 = vmatprep.subr.bf16.mxu0 0
      %2470 = vmatpush1.bf16.msra.mxu0 0
      %2471 = vmatprep.subr.bf16.mxu0 0
      %2472 = vmatpush1.bf16.msra.mxu0 0
      %2473 = vmatprep.subr.bf16.mxu0 0
      %2474 = vmatpush1.bf16.msra.mxu0 0
      %2475 = vmatprep.subr.bf16.mxu0 0
      %2476 = vmatpush1.bf16.msra.mxu0 0
      %2477 = vmatprep.subr.bf16.mxu0 0
      %2478 = vmatpush1.bf16.msra.mxu0 0
      %2479 = vmatprep.subr.bf16.mxu0 0
      %2480 = vmatpush1.bf16.msra.mxu0 0
      %2481 = vmatprep.subr.bf16.mxu0 0
      %2482 = vmatpush1.bf16.msra.mxu0 0
      %2483 = vmatprep.subr.bf16.mxu0 0
      %2484 = vmatpush1.bf16.msra.mxu0 0
      %2485 = vmatprep.mubr.bf16.mxu0 0
      %2486 = vmatmul.mubr.bf16.gmra.mrb[0].mxu0 %v643
      %v2487 = vpop.f32.mrb[0].mxu0
      %v2488 = vadd.f32 0.0, %v2487
      %v2489 = vpop.f32.mrb[0].mxu0
      %v2490 = vpop.f32.mrb[0].mxu0
      %v2491 = vadd.f32 0.0, %v2490
      %v2492 = vpop.f32.mrb[0].mxu0
      %2493 = vmatprep.mubr.bf16.mxu0 0
      %2494 = vmatmul.mubr.bf16.gmra.mrb[0].mxu0 %v646
      %v2495 = vpop.f32.mrb[0].mxu0
      %v2496 = vadd.f32 0.0, %v2495
      %v2497 = vpop.f32.mrb[0].mxu0
      %v2498 = vpop.f32.mrb[0].mxu0
      %v2499 = vadd.f32 0.0, %v2498
      %v2500 = vpop.f32.mrb[0].mxu0
      %2501 = vmatprep.mubr.bf16.mxu0 0
      %2502 = vmatmul.mubr.bf16.gmra.mrb[0].mxu0 %v649
      %v2503 = vpop.f32.mrb[0].mxu0
      %v2504 = vadd.f32 0.0, %v2503
      %v2505 = vpop.f32.mrb[0].mxu0
      %v2506 = vpop.f32.mrb[0].mxu0
      %v2507 = vadd.f32 0.0, %v2506
      %v2508 = vpop.f32.mrb[0].mxu0
      %2509 = vmatprep.mubr.bf16.mxu0 0
      %2510 = vmatmul.mubr.bf16.gmra.mrb[0].mxu0 %v652
      %v2511 = vpop.f32.mrb[0].mxu0
      %v2512 = vadd.f32 0.0, %v2511
      %v2513 = vpop.f32.mrb[0].mxu0
      %v2514 = vpop.f32.mrb[0].mxu0
      %v2515 = vadd.f32 0.0, %v2514
      %v2516 = vpop.f32.mrb[0].mxu0
      %2517 = vmatprep.mubr.bf16.mxu0 0
      %2518 = vmatmul.mubr.bf16.gmra.mrb[0].mxu0 %v655
      %v2519 = vpop.f32.mrb[0].mxu0
      %v2520 = vadd.f32 0.0, %v2519
      %v2521 = vpop.f32.mrb[0].mxu0
      %v2522 = vpop.f32.mrb[0].mxu0
      %v2523 = vadd.f32 0.0, %v2522
      %v2524 = vpop.f32.mrb[0].mxu0
      %2525 = vmatprep.mubr.bf16.mxu0 0
      %2526 = vmatmul.mubr.bf16.gmra.mrb[0].mxu0 %v658
      %v2527 = vpop.f32.mrb[0].mxu0
      %v2528 = vadd.f32 0.0, %v2527
      %v2529 = vpop.f32.mrb[0].mxu0
      %v2530 = vpop.f32.mrb[0].mxu0
      %v2531 = vadd.f32 0.0, %v2530
      %v2532 = vpop.f32.mrb[0].mxu0
      %2533 = vmatprep.mubr.bf16.mxu0 0
      %2534 = vmatmul.mubr.bf16.gmra.mrb[0].mxu0 %v661
      %v2535 = vpop.f32.mrb[0].mxu0
      %v2536 = vadd.f32 0.0, %v2535
      %v2537 = vpop.f32.mrb[0].mxu0
      %v2538 = vpop.f32.mrb[0].mxu0
      %v2539 = vadd.f32 0.0, %v2538
      %v2540 = vpop.f32.mrb[0].mxu0
      %2541 = vmatprep.mubr.bf16.mxu0 0
      %2542 = vmatmul.mubr.bf16.gmra.mrb[0].mxu0 %v664
      %v2543 = vpop.f32.mrb[0].mxu0
      %v2544 = vadd.f32 0.0, %v2543
      %v2545 = vpop.f32.mrb[0].mxu0
      %v2546 = vpop.f32.mrb[0].mxu0
      %v2547 = vadd.f32 0.0, %v2546
      %v2548 = vpop.f32.mrb[0].mxu0
      %2549 = vmatprep.mubr.bf16.mxu0 0
      %2550 = vmatmul.mubr.bf16.gmra.mrb[0].mxu0 %v667
      %v2551 = vpop.f32.mrb[0].mxu0
      %v2552 = vadd.f32 0.0, %v2551
      %v2553 = vpop.f32.mrb[0].mxu0
      %v2554 = vpop.f32.mrb[0].mxu0
      %v2555 = vadd.f32 0.0, %v2554
      %v2556 = vpop.f32.mrb[0].mxu0
      %2557 = vmatprep.mubr.bf16.mxu0 0
      %2558 = vmatmul.mubr.bf16.gmra.mrb[0].mxu0 %v670
      %v2559 = vpop.f32.mrb[0].mxu0
      %v2560 = vadd.f32 0.0, %v2559
      %v2561 = vpop.f32.mrb[0].mxu0
      %v2562 = vpop.f32.mrb[0].mxu0
      %v2563 = vadd.f32 0.0, %v2562
      %v2564 = vpop.f32.mrb[0].mxu0
      %2565 = vmatprep.mubr.bf16.mxu0 0
      %2566 = vmatmul.mubr.bf16.gmra.mrb[0].mxu0 %v673
      %v2567 = vpop.f32.mrb[0].mxu0
      %v2568 = vadd.f32 0.0, %v2567
      %v2569 = vpop.f32.mrb[0].mxu0
      %v2570 = vpop.f32.mrb[0].mxu0
      %v2571 = vadd.f32 0.0, %v2570
      %v2572 = vpop.f32.mrb[0].mxu0
      %2573 = vmatprep.mubr.bf16.mxu0 0
      %2574 = vmatmul.mubr.bf16.gmra.mrb[0].mxu0 %v676
      %v2575 = vpop.f32.mrb[0].mxu0
      %v2576 = vadd.f32 0.0, %v2575
      %v2577 = vpop.f32.mrb[0].mxu0
      %v2578 = vpop.f32.mrb[0].mxu0
      %v2579 = vadd.f32 0.0, %v2578
      %v2580 = vpop.f32.mrb[0].mxu0
      %2581 = vmatprep.mubr.bf16.mxu0 0
      %2582 = vmatmul.mubr.bf16.gmra.mrb[0].mxu0 %v679
      %v2583 = vpop.f32.mrb[0].mxu0
      %v2584 = vadd.f32 0.0, %v2583
      %v2585 = vpop.f32.mrb[0].mxu0
      %v2586 = vpop.f32.mrb[0].mxu0
      %v2587 = vadd.f32 0.0, %v2586
      %v2588 = vpop.f32.mrb[0].mxu0
      %2589 = vmatprep.mubr.bf16.mxu0 0
      %2590 = vmatmul.mubr.bf16.gmra.mrb[0].mxu0 %v682
      %v2591 = vpop.f32.mrb[0].mxu0
      %v2592 = vadd.f32 0.0, %v2591
      %v2593 = vpop.f32.mrb[0].mxu0
      %v2594 = vpop.f32.mrb[0].mxu0
      %v2595 = vadd.f32 0.0, %v2594
      %v2596 = vpop.f32.mrb[0].mxu0
      %2597 = vmatprep.mubr.bf16.mxu0 0
      %2598 = vmatmul.mubr.bf16.gmra.mrb[0].mxu0 %v1802
      %v2599 = vpop.f32.mrb[0].mxu0
      %v2600 = vadd.f32 0.0, %v2599
      %v2601 = vpop.f32.mrb[0].mxu0
      %v2602 = vpop.f32.mrb[0].mxu0
      %v2603 = vadd.f32 0.0, %v2602
      %v2604 = vpop.f32.mrb[0].mxu0
      %2605 = vmatprep.mubr.bf16.mxu0 0
      %2606 = vmatmul.mubr.bf16.gmra.mrb[0].mxu0 %v2448
      %v2607 = vpop.f32.mrb[0].mxu0
      %v2608 = vadd.f32 0.0, %v2607
      %v2609 = vpop.f32.mrb[0].mxu0
      %v2610 = vpop.f32.mrb[0].mxu0
      %v2611 = vadd.f32 0.0, %v2610
      %v2612 = vpop.f32.mrb[0].mxu0
      %2613 = vdwg.mxu0
      %v2614 = vadd.f32 %v2386, %v2488
      %v2615 = vadd.f32 %v2387, %v2491
      %v2616 = vadd.f32 %v2388, %v2496
      %v2617 = vadd.f32 %v2389, %v2499
      %v2618 = vadd.f32 %v2390, %v2504
      %v2619 = vadd.f32 %v2391, %v2507
      %v2620 = vadd.f32 %v2392, %v2512
      %v2621 = vadd.f32 %v2393, %v2515
      %v2622 = vadd.f32 %v2394, %v2520
      %v2623 = vadd.f32 %v2395, %v2523
      %v2624 = vadd.f32 %v2396, %v2528
      %v2625 = vadd.f32 %v2397, %v2531
      %v2626 = vadd.f32 %v2398, %v2536
      %v2627 = vadd.f32 %v2399, %v2539
      %v2628 = vadd.f32 %v2400, %v2544
      %v2629 = vadd.f32 %v2401, %v2547
      %v2630 = vadd.f32 %v2402, %v2552
      %v2631 = vadd.f32 %v2403, %v2555
      %v2632 = vadd.f32 %v2404, %v2560
      %v2633 = vadd.f32 %v2405, %v2563
      %v2634 = vadd.f32 %v2406, %v2568
      %v2635 = vadd.f32 %v2407, %v2571
      %v2636 = vadd.f32 %v2408, %v2576
      %v2637 = vadd.f32 %v2409, %v2579
      %v2638 = vadd.f32 %v2410, %v2584
      %v2639 = vadd.f32 %v2411, %v2587
      %v2640 = vadd.f32 %v2412, %v2592
      %v2641 = vadd.f32 %v2413, %v2595
      %v2642 = vadd.f32 %v2414, %v2600
      %v2643 = vadd.f32 %v2415, %v2603
      %v2644 = vadd.f32 %v2416, %v2608
      %v2645 = vadd.f32 %v2417, %v2611
      %v2647 = vrot.slane %v194, 5
      %v2648 = vrot.slane %v2647, 4
      %v2649 = vrot.slane %v195, 5
      %v2650 = vsel %vm1159, %v2648, %v2649
      %v2651 = vrot.slane %v2649, 4
      %v2652 = vrot.slane %v196, 5
      %v2653 = vsel %vm1159, %v2651, %v2652
      %s2654 = scalar_lea.vmem %s1, 16
      %v2655 = vld [vmem:[%s2654] sm:$0x3]
      %v2656 = vunpack.c.l.b16 %v2650
      %v2657 = vunpack.c.l.b16 %v2653
      %v2658 = vpack.c.b16 %v2657, %v2656
      %v2660 = vsel %vm635, %v2658, 0
      %v2663 = vsel %vm684, %v2655, 0
      %2665 = vmatprep.subr.bf16.mxu0 0
      %2666 = vmatpush1.bf16.msra.mxu0 %v2663
      %2667 = vmatprep.subr.bf16.mxu0 0
      %2668 = vmatpush1.bf16.msra.mxu0 0
      %2669 = vmatprep.subr.bf16.mxu0 0
      %2670 = vmatpush1.bf16.msra.mxu0 0
      %2671 = vmatprep.subr.bf16.mxu0 0
      %2672 = vmatpush1.bf16.msra.mxu0 0
      %2673 = vmatprep.subr.bf16.mxu0 0
      %2674 = vmatpush1.bf16.msra.mxu0 0
      %2675 = vmatprep.subr.bf16.mxu0 0
      %2676 = vmatpush1.bf16.msra.mxu0 0
      %2677 = vmatprep.subr.bf16.mxu0 0
      %2678 = vmatpush1.bf16.msra.mxu0 0
      %2679 = vmatprep.subr.bf16.mxu0 0
      %2680 = vmatpush1.bf16.msra.mxu0 0
      %2681 = vmatprep.subr.bf16.mxu0 0
      %2682 = vmatpush1.bf16.msra.mxu0 0
      %2683 = vmatprep.subr.bf16.mxu0 0
      %2684 = vmatpush1.bf16.msra.mxu0 0
      %2685 = vmatprep.subr.bf16.mxu0 0
      %2686 = vmatpush1.bf16.msra.mxu0 0
      %2687 = vmatprep.subr.bf16.mxu0 0
      %2688 = vmatpush1.bf16.msra.mxu0 0
      %2689 = vmatprep.subr.bf16.mxu0 0
      %2690 = vmatpush1.bf16.msra.mxu0 0
      %2691 = vmatprep.subr.bf16.mxu0 0
      %2692 = vmatpush1.bf16.msra.mxu0 0
      %2693 = vmatprep.subr.bf16.mxu0 0
      %2694 = vmatpush1.bf16.msra.mxu0 0
      %2695 = vmatprep.subr.bf16.mxu0 0
      %2696 = vmatpush1.bf16.msra.mxu0 0
      %2697 = vmatprep.mubr.bf16.mxu0 0
      %2698 = vmatmul.mubr.bf16.gmra.mrb[0].mxu0 %v1329
      %v2699 = vpop.f32.mrb[0].mxu0
      %v2700 = vadd.f32 0.0, %v2699
      %v2701 = vpop.f32.mrb[0].mxu0
      %v2702 = vpop.f32.mrb[0].mxu0
      %v2703 = vadd.f32 0.0, %v2702
      %v2704 = vpop.f32.mrb[0].mxu0
      %2705 = vmatprep.mubr.bf16.mxu0 0
      %2706 = vmatmul.mubr.bf16.gmra.mrb[0].mxu0 %v1332
      %v2707 = vpop.f32.mrb[0].mxu0
      %v2708 = vadd.f32 0.0, %v2707
      %v2709 = vpop.f32.mrb[0].mxu0
      %v2710 = vpop.f32.mrb[0].mxu0
      %v2711 = vadd.f32 0.0, %v2710
      %v2712 = vpop.f32.mrb[0].mxu0
      %2713 = vmatprep.mubr.bf16.mxu0 0
      %2714 = vmatmul.mubr.bf16.gmra.mrb[0].mxu0 %v1335
      %v2715 = vpop.f32.mrb[0].mxu0
      %v2716 = vadd.f32 0.0, %v2715
      %v2717 = vpop.f32.mrb[0].mxu0
      %v2718 = vpop.f32.mrb[0].mxu0
      %v2719 = vadd.f32 0.0, %v2718
      %v2720 = vpop.f32.mrb[0].mxu0
      %2721 = vmatprep.mubr.bf16.mxu0 0
      %2722 = vmatmul.mubr.bf16.gmra.mrb[0].mxu0 %v1338
      %v2723 = vpop.f32.mrb[0].mxu0
      %v2724 = vadd.f32 0.0, %v2723
      %v2725 = vpop.f32.mrb[0].mxu0
      %v2726 = vpop.f32.mrb[0].mxu0
      %v2727 = vadd.f32 0.0, %v2726
      %v2728 = vpop.f32.mrb[0].mxu0
      %2729 = vmatprep.mubr.bf16.mxu0 0
      %2730 = vmatmul.mubr.bf16.gmra.mrb[0].mxu0 %v1341
      %v2731 = vpop.f32.mrb[0].mxu0
      %v2732 = vadd.f32 0.0, %v2731
      %v2733 = vpop.f32.mrb[0].mxu0
      %v2734 = vpop.f32.mrb[0].mxu0
      %v2735 = vadd.f32 0.0, %v2734
      %v2736 = vpop.f32.mrb[0].mxu0
      %2737 = vmatprep.mubr.bf16.mxu0 0
      %2738 = vmatmul.mubr.bf16.gmra.mrb[0].mxu0 %v1344
      %v2739 = vpop.f32.mrb[0].mxu0
      %v2740 = vadd.f32 0.0, %v2739
      %v2741 = vpop.f32.mrb[0].mxu0
      %v2742 = vpop.f32.mrb[0].mxu0
      %v2743 = vadd.f32 0.0, %v2742
      %v2744 = vpop.f32.mrb[0].mxu0
      %2745 = vmatprep.mubr.bf16.mxu0 0
      %2746 = vmatmul.mubr.bf16.gmra.mrb[0].mxu0 %v1347
      %v2747 = vpop.f32.mrb[0].mxu0
      %v2748 = vadd.f32 0.0, %v2747
      %v2749 = vpop.f32.mrb[0].mxu0
      %v2750 = vpop.f32.mrb[0].mxu0
      %v2751 = vadd.f32 0.0, %v2750
      %v2752 = vpop.f32.mrb[0].mxu0
      %2753 = vmatprep.mubr.bf16.mxu0 0
      %2754 = vmatmul.mubr.bf16.gmra.mrb[0].mxu0 %v1350
      %v2755 = vpop.f32.mrb[0].mxu0
      %v2756 = vadd.f32 0.0, %v2755
      %v2757 = vpop.f32.mrb[0].mxu0
      %v2758 = vpop.f32.mrb[0].mxu0
      %v2759 = vadd.f32 0.0, %v2758
      %v2760 = vpop.f32.mrb[0].mxu0
      %2761 = vmatprep.mubr.bf16.mxu0 0
      %2762 = vmatmul.mubr.bf16.gmra.mrb[0].mxu0 %v1353
      %v2763 = vpop.f32.mrb[0].mxu0
      %v2764 = vadd.f32 0.0, %v2763
      %v2765 = vpop.f32.mrb[0].mxu0
      %v2766 = vpop.f32.mrb[0].mxu0
      %v2767 = vadd.f32 0.0, %v2766
      %v2768 = vpop.f32.mrb[0].mxu0
      %2769 = vmatprep.mubr.bf16.mxu0 0
      %2770 = vmatmul.mubr.bf16.gmra.mrb[0].mxu0 %v1356
      %v2771 = vpop.f32.mrb[0].mxu0
      %v2772 = vadd.f32 0.0, %v2771
      %v2773 = vpop.f32.mrb[0].mxu0
      %v2774 = vpop.f32.mrb[0].mxu0
      %v2775 = vadd.f32 0.0, %v2774
      %v2776 = vpop.f32.mrb[0].mxu0
      %2777 = vmatprep.mubr.bf16.mxu0 0
      %2778 = vmatmul.mubr.bf16.gmra.mrb[0].mxu0 %v1359
      %v2779 = vpop.f32.mrb[0].mxu0
      %v2780 = vadd.f32 0.0, %v2779
      %v2781 = vpop.f32.mrb[0].mxu0
      %v2782 = vpop.f32.mrb[0].mxu0
      %v2783 = vadd.f32 0.0, %v2782
      %v2784 = vpop.f32.mrb[0].mxu0
      %2785 = vmatprep.mubr.bf16.mxu0 0
      %2786 = vmatmul.mubr.bf16.gmra.mrb[0].mxu0 %v1362
      %v2787 = vpop.f32.mrb[0].mxu0
      %v2788 = vadd.f32 0.0, %v2787
      %v2789 = vpop.f32.mrb[0].mxu0
      %v2790 = vpop.f32.mrb[0].mxu0
      %v2791 = vadd.f32 0.0, %v2790
      %v2792 = vpop.f32.mrb[0].mxu0
      %2793 = vmatprep.mubr.bf16.mxu0 0
      %2794 = vmatmul.mubr.bf16.gmra.mrb[0].mxu0 %v1365
      %v2795 = vpop.f32.mrb[0].mxu0
      %v2796 = vadd.f32 0.0, %v2795
      %v2797 = vpop.f32.mrb[0].mxu0
      %v2798 = vpop.f32.mrb[0].mxu0
      %v2799 = vadd.f32 0.0, %v2798
      %v2800 = vpop.f32.mrb[0].mxu0
      %2801 = vmatprep.mubr.bf16.mxu0 0
      %2802 = vmatmul.mubr.bf16.gmra.mrb[0].mxu0 %v1368
      %v2803 = vpop.f32.mrb[0].mxu0
      %v2804 = vadd.f32 0.0, %v2803
      %v2805 = vpop.f32.mrb[0].mxu0
      %v2806 = vpop.f32.mrb[0].mxu0
      %v2807 = vadd.f32 0.0, %v2806
      %v2808 = vpop.f32.mrb[0].mxu0
      %2809 = vmatprep.mubr.bf16.mxu0 0
      %2810 = vmatmul.mubr.bf16.gmra.mrb[0].mxu0 %v2014
      %v2811 = vpop.f32.mrb[0].mxu0
      %v2812 = vadd.f32 0.0, %v2811
      %v2813 = vpop.f32.mrb[0].mxu0
      %v2814 = vpop.f32.mrb[0].mxu0
      %v2815 = vadd.f32 0.0, %v2814
      %v2816 = vpop.f32.mrb[0].mxu0
      %2817 = vmatprep.mubr.bf16.mxu0 0
      %2818 = vmatmul.mubr.bf16.gmra.mrb[0].mxu0 %v2660
      %v2819 = vpop.f32.mrb[0].mxu0
      %v2820 = vadd.f32 0.0, %v2819
      %v2821 = vpop.f32.mrb[0].mxu0
      %v2822 = vpop.f32.mrb[0].mxu0
      %v2823 = vadd.f32 0.0, %v2822
      %v2824 = vpop.f32.mrb[0].mxu0
      %2825 = vdwg.mxu0
      %v2826 = vadd.f32 %v2614, %v2700
      %v2827 = vadd.f32 %v2615, %v2703
      %v2828 = vadd.f32 %v2616, %v2708
      %v2829 = vadd.f32 %v2617, %v2711
      %v2830 = vadd.f32 %v2618, %v2716
      %v2831 = vadd.f32 %v2619, %v2719
      %v2832 = vadd.f32 %v2620, %v2724
      %v2833 = vadd.f32 %v2621, %v2727
      %v2834 = vadd.f32 %v2622, %v2732
      %v2835 = vadd.f32 %v2623, %v2735
      %v2836 = vadd.f32 %v2624, %v2740
      %v2837 = vadd.f32 %v2625, %v2743
      %v2838 = vadd.f32 %v2626, %v2748
      %v2839 = vadd.f32 %v2627, %v2751
      %v2840 = vadd.f32 %v2628, %v2756
      %v2841 = vadd.f32 %v2629, %v2759
      %v2842 = vadd.f32 %v2630, %v2764
      %v2843 = vadd.f32 %v2631, %v2767
      %v2844 = vadd.f32 %v2632, %v2772
      %v2845 = vadd.f32 %v2633, %v2775
      %v2846 = vadd.f32 %v2634, %v2780
      %v2847 = vadd.f32 %v2635, %v2783
      %v2848 = vadd.f32 %v2636, %v2788
      %v2849 = vadd.f32 %v2637, %v2791
      %v2850 = vadd.f32 %v2638, %v2796
      %v2851 = vadd.f32 %v2639, %v2799
      %v2852 = vadd.f32 %v2640, %v2804
      %v2853 = vadd.f32 %v2641, %v2807
      %v2854 = vadd.f32 %v2642, %v2812
      %v2855 = vadd.f32 %v2643, %v2815
      %v2856 = vadd.f32 %v2644, %v2820
      %v2857 = vadd.f32 %v2645, %v2823
      %v2858 = vadd.f32 %v2826, %v2827
      %v2859 = vadd.f32 %v2858, %v2828
      %v2860 = vadd.f32 %v2859, %v2829
      %v2861 = vadd.f32 %v2860, %v2830
      %v2862 = vadd.f32 %v2861, %v2831
      %v2863 = vadd.f32 %v2862, %v2832
      %v2864 = vadd.f32 %v2863, %v2833
      %v2865 = vadd.f32 %v2864, %v2834
      %v2866 = vadd.f32 %v2865, %v2835
      %v2867 = vadd.f32 %v2866, %v2836
      %v2868 = vadd.f32 %v2867, %v2837
      %v2869 = vadd.f32 %v2868, %v2838
      %v2870 = vadd.f32 %v2869, %v2839
      %v2871 = vadd.f32 %v2870, %v2840
      %v2872 = vadd.f32 %v2871, %v2841
      %v2873 = vadd.f32 %v2872, %v2842
      %v2874 = vadd.f32 %v2873, %v2843
      %v2875 = vadd.f32 %v2874, %v2844
      %v2876 = vadd.f32 %v2875, %v2845
      %v2877 = vadd.f32 %v2876, %v2846
      %v2878 = vadd.f32 %v2877, %v2847
      %v2879 = vadd.f32 %v2878, %v2848
      %v2880 = vadd.f32 %v2879, %v2849
      %v2881 = vadd.f32 %v2880, %v2850
      %v2882 = vadd.f32 %v2881, %v2851
      %v2883 = vadd.f32 %v2882, %v2852
      %v2884 = vadd.f32 %v2883, %v2853
      %v2885 = vadd.f32 %v2884, %v2854
      %v2886 = vadd.f32 %v2885, %v2855
      %v2887 = vadd.f32 %v2886, %v2856
      %v2888 = vadd.f32 %v2887, %v2857
      %v2889 = vrot.slane %v2888, 4
      %v2890 = vadd.f32 %v2888, %v2889
      %v2891 = vrot.slane %v2890, 2
      %v2892 = vadd.f32 %v2890, %v2891
      %v2893 = vrot.slane %v2892, 1
      %v2894 = vadd.f32 %v2892, %v2893
      %v2895 = vmul.f32 %v2894, 0.00390625
      %v2896 = vsub.f32 %v2826, %v2895
      %v2897 = vsub.f32 %v2827, %v2895
      %v2898 = vsub.f32 %v2828, %v2895
      %v2899 = vsub.f32 %v2829, %v2895
      %v2900 = vsub.f32 %v2830, %v2895
      %v2901 = vsub.f32 %v2831, %v2895
      %v2902 = vsub.f32 %v2832, %v2895
      %v2903 = vsub.f32 %v2833, %v2895
      %v2904 = vsub.f32 %v2834, %v2895
      %v2905 = vsub.f32 %v2835, %v2895
      %v2906 = vsub.f32 %v2836, %v2895
      %v2907 = vsub.f32 %v2837, %v2895
      %v2908 = vsub.f32 %v2838, %v2895
      %v2909 = vsub.f32 %v2839, %v2895
      %v2910 = vsub.f32 %v2840, %v2895
      %v2911 = vsub.f32 %v2841, %v2895
      %v2912 = vsub.f32 %v2842, %v2895
      %v2913 = vsub.f32 %v2843, %v2895
      %v2914 = vsub.f32 %v2844, %v2895
      %v2915 = vsub.f32 %v2845, %v2895
      %v2916 = vsub.f32 %v2846, %v2895
      %v2917 = vsub.f32 %v2847, %v2895
      %v2918 = vsub.f32 %v2848, %v2895
      %v2919 = vsub.f32 %v2849, %v2895
      %v2920 = vsub.f32 %v2850, %v2895
      %v2921 = vsub.f32 %v2851, %v2895
      %v2922 = vsub.f32 %v2852, %v2895
      %v2923 = vsub.f32 %v2853, %v2895
      %v2924 = vsub.f32 %v2854, %v2895
      %v2925 = vsub.f32 %v2855, %v2895
      %v2926 = vsub.f32 %v2856, %v2895
      %v2927 = vsub.f32 %v2857, %v2895
      %v2928 = vmul.f32 %v2896, %v2896
      %v2929 = vmul.f32 %v2897, %v2897
      %v2930 = vmul.f32 %v2898, %v2898
      %v2931 = vmul.f32 %v2899, %v2899
      %v2932 = vmul.f32 %v2900, %v2900
      %v2933 = vmul.f32 %v2901, %v2901
      %v2934 = vmul.f32 %v2902, %v2902
      %v2935 = vmul.f32 %v2903, %v2903
      %v2936 = vmul.f32 %v2904, %v2904
      %v2937 = vmul.f32 %v2905, %v2905
      %v2938 = vmul.f32 %v2906, %v2906
      %v2939 = vmul.f32 %v2907, %v2907
      %v2940 = vmul.f32 %v2908, %v2908
      %v2941 = vmul.f32 %v2909, %v2909
      %v2942 = vmul.f32 %v2910, %v2910
      %v2943 = vmul.f32 %v2911, %v2911
      %v2944 = vmul.f32 %v2912, %v2912
      %v2945 = vmul.f32 %v2913, %v2913
      %v2946 = vmul.f32 %v2914, %v2914
      %v2947 = vmul.f32 %v2915, %v2915
      %v2948 = vmul.f32 %v2916, %v2916
      %v2949 = vmul.f32 %v2917, %v2917
      %v2950 = vmul.f32 %v2918, %v2918
      %v2951 = vmul.f32 %v2919, %v2919
      %v2952 = vmul.f32 %v2920, %v2920
      %v2953 = vmul.f32 %v2921, %v2921
      %v2954 = vmul.f32 %v2922, %v2922
      %v2955 = vmul.f32 %v2923, %v2923
      %v2956 = vmul.f32 %v2924, %v2924
      %v2957 = vmul.f32 %v2925, %v2925
      %v2958 = vmul.f32 %v2926, %v2926
      %v2959 = vmul.f32 %v2927, %v2927
      %v2960 = vadd.f32 %v2928, %v2929
      %v2961 = vadd.f32 %v2960, %v2930
      %v2962 = vadd.f32 %v2961, %v2931
      %v2963 = vadd.f32 %v2962, %v2932
      %v2964 = vadd.f32 %v2963, %v2933
      %v2965 = vadd.f32 %v2964, %v2934
      %v2966 = vadd.f32 %v2965, %v2935
      %v2967 = vadd.f32 %v2966, %v2936
      %v2968 = vadd.f32 %v2967, %v2937
      %v2969 = vadd.f32 %v2968, %v2938
      %v2970 = vadd.f32 %v2969, %v2939
      %v2971 = vadd.f32 %v2970, %v2940
      %v2972 = vadd.f32 %v2971, %v2941
      %v2973 = vadd.f32 %v2972, %v2942
      %v2974 = vadd.f32 %v2973, %v2943
      %v2975 = vadd.f32 %v2974, %v2944
      %v2976 = vadd.f32 %v2975, %v2945
      %v2977 = vadd.f32 %v2976, %v2946
      %v2978 = vadd.f32 %v2977, %v2947
      %v2979 = vadd.f32 %v2978, %v2948
      %v2980 = vadd.f32 %v2979, %v2949
      %v2981 = vadd.f32 %v2980, %v2950
      %v2982 = vadd.f32 %v2981, %v2951
      %v2983 = vadd.f32 %v2982, %v2952
      %v2984 = vadd.f32 %v2983, %v2953
      %v2985 = vadd.f32 %v2984, %v2954
      %v2986 = vadd.f32 %v2985, %v2955
      %v2987 = vadd.f32 %v2986, %v2956
      %v2988 = vadd.f32 %v2987, %v2957
      %v2989 = vadd.f32 %v2988, %v2958
      %v2990 = vadd.f32 %v2989, %v2959
      %v2991 = vrot.slane %v2990, 4
      %v2992 = vadd.f32 %v2990, %v2991
      %v2993 = vrot.slane %v2992, 2
      %v2994 = vadd.f32 %v2992, %v2993
      %v2995 = vrot.slane %v2994, 1
      %v2996 = vadd.f32 %v2994, %v2995
      %2997 = vst [vmem:[%s141] sm:$0x1] %v2894
      %2998 = vst [vmem:[%s141 + $0x1] sm:$0x1] %v2996
      %p2999 = scmp.lt.s32.totalorder %s13, 1
      %s3000 = scalar_select %p2999, %s13, 1
      %s3001 = smul.addr %s3000, 2
      %s3002 = scalar_lea.vmem %s2, %s3001
      // Predicated region
      $region29: #{convolution_block.2} parent=27 // pred_check
        %p3003 = pneg %p78
      $region30: #{convolution_block.2} parent=27 // pred_check_branch
        %3005 = sbr.rel (%p3003) target = $region32
      $region31: #{convolution_block.2} parent=27 // pred_region
        _
      $region32: #{convolution_block.2} parent=27 // pred_fallthru
        _
    $region28: #{convolution_block.2} parent=5 // pred_fallthru
      _
    %p3006 = scmp.le.s32.totalorder 2, %s8
    // Predicated region
    $region33: #{convolution_block.2} parent=5 // pred_check
      %p3007 = pneg %p3006
    $region34: #{convolution_block.2} parent=5 // pred_check_branch
      %3009 = sbr.rel (%p3007) target = $region36
    $region35: #{convolution_block.2} parent=5 // pred_region
      %s3010 = ssub.s32 %s8, 2
      // Predicated region
      $region37: #{convolution_block.2} parent=35 // pred_check
        %p3011 = pneg %p84
      $region38: #{convolution_block.2} parent=35 // pred_check_branch
        %3013 = sbr.rel (%p3011) target = $region40
      $region39: #{convolution_block.2} parent=35 // pred_region
        %p3014 = scmp.lt.s32.totalorder %s14, 1
        %s3015 = scalar_select %p3014, %s14, 1
        %s3016 = smul.addr %s3015, 2
        %s3017 = scalar_lea.vmem %s2, %s3016
      $region40: #{convolution_block.2} parent=35 // pred_fallthru
        _
    $region36: #{convolution_block.2} parent=5 // pred_fallthru
      _
  $region6: #{convolution_block.2} parent=0 // loop_footer
    %s12 = sadd.s32 1, %s8
  $region7: #{convolution_block.2} parent=0 // loop_footer_branch
    %7 = sbr.rel target = $region3
  $region8: #{convolution_block.2} parent=0 // loop_exit
    _

// kernel: convolution_block.3
$region0: #{convolution_block.3}
  #allocation0 [shape = 'u32[]', space=smem, size = 0x4, offset = 0x4, fixed_abs, tag = 'smem constant byte address 0x4 - core index']
  #allocation1 [shape = 'u32[144,128]{1,0:T(1,128)}', space=vmem, size = 0x12000, scoped, tag = 'internal scratch']
  %s0 = inlined_call_operand.vmem [shape: bf16[2,18,1,18,4], index: 0, kind: input, shape index: {}]
  %s1 = inlined_call_operand.vmem [shape: bf16[9,4,128], index: 1, kind: input, shape index: {}]
  %s2 = inlined_call_operand.vmem [shape: f32[1,128], index: 2, kind: input, shape index: {}]
  %s3 = inlined_call_operand.vmem [shape: f32[1,128], index: 3, kind: input, shape index: {}]
  %s4 = inlined_call_operand.vmem [shape: f32[2,8,256], index: 4, kind: output, shape index: {}]
  %s5 = sld [smem:[#allocation0]]
  $region49: #{convolution_block.3} parent=0
    _
  %s7 = ssub.s32 1, %s5
  %s8 = scalar_select 0, %s7, %s5
  loop: start=0, step=1, limit=4
  $region2: #{convolution_block.3} parent=0 // loop_pre_header
    _
  $region3: #{convolution_block.3} parent=0 // loop_header
    %s10 = sphi 0, %s14
    %p11 = scmp.ge.s32.totalorder %s10, 4
    %s20 = sphi 0, %s22
    %s23 = sphi 0, %s20
    %s24 = sphi 0, %s23
    %s40 = sphi 0, %s24
    %s44 = sphi 0, %s44
    %s46 = sphi 0, %s44
    %s47 = sphi 0, %s46
    %s61 = sphi 0, %s47
    %s65 = sphi 0, %s65
    %s67 = sphi 0, %s65
    %s68 = sphi 0, %s67
    %s82 = sphi 0, %s68
    %s86 = sphi 0, %s86
    %s88 = sphi 0, %s86
    %s89 = sphi 0, %s88
    %s103 = sphi 0, %s89
    %s109 = sphi 0, %s111
    %s112 = sphi 0, %s109
    %s113 = sphi 0, %s112
    %s129 = sphi 0, %s113
  $region4: #{convolution_block.3} parent=0 // loop_header_branch
    %13 = sbr.rel (%p11) target = $region8
  $region5: #{convolution_block.3} parent=0 // loop_body
    %s15 = ssub.s32 %s10, 1
    %s16 = ssub.s32 %s10, 2
    %s17 = sadd.s32 %s10, 1
    %s18 = ssub.s32 %s10, %s17
    %p19 = scmp.eq.s32.totalorder %s18, 0
    %s21 = sadd.s32 %s20, 1
    %s22 = scalar_select %p19, %s20, %s21
    %p25 = pneg %p19
    %p26 = scmp.eq.s32.totalorder %s10, 1
    %p27 = por %p25, %p26
    %p28 = scmp.ne.s32.totalorder %s20, %s23
    %p29 = scmp.eq.s32.totalorder %s10, 0
    %p30 = por %p28, %p29
    %p31 = scmp.ne.s32.totalorder %s20, %s23
    %p32 = scmp.eq.s32.totalorder %s15, 1
    %p33 = por %p31, %p32
    %p34 = scmp.ne.s32.totalorder %s23, %s24
    %p35 = scmp.eq.s32.totalorder %s15, 0
    %p36 = por %p34, %p35
    %p37 = scmp.ne.s32.totalorder %s23, %s24
    %p38 = scmp.eq.s32.totalorder %s16, 1
    %p39 = por %p37, %p38
    %p41 = scmp.ne.s32.totalorder %s24, %s40
    %p42 = scmp.eq.s32.totalorder %s16, 0
    %p43 = por %p41, %p42
    %s45 = sadd.s32 %s44, 1
    %p48 = scmp.eq.s32.totalorder %s10, 1
    %p49 = scmp.ne.s32.totalorder %s44, %s46
    %p50 = scmp.eq.s32.totalorder %s10, 0
    %p51 = por %p49, %p50
    %p52 = scmp.ne.s32.totalorder %s44, %s46
    %p53 = scmp.eq.s32.totalorder %s15, 1
    %p54 = por %p52, %p53
    %p55 = scmp.ne.s32.totalorder %s46, %s47
    %p56 = scmp.eq.s32.totalorder %s15, 0
    %p57 = por %p55, %p56
    %p58 = scmp.ne.s32.totalorder %s46, %s47
    %p59 = scmp.eq.s32.totalorder %s16, 1
    %p60 = por %p58, %p59
    %p62 = scmp.ne.s32.totalorder %s47, %s61
    %p63 = scmp.eq.s32.totalorder %s16, 0
    %p64 = por %p62, %p63
    %s66 = sadd.s32 %s65, 1
    %p69 = scmp.eq.s32.totalorder %s10, 1
    %p70 = scmp.ne.s32.totalorder %s65, %s67
    %p71 = scmp.eq.s32.totalorder %s10, 0
    %p72 = por %p70, %p71
    %p73 = scmp.ne.s32.totalorder %s65, %s67
    %p74 = scmp.eq.s32.totalorder %s15, 1
    %p75 = por %p73, %p74
    %p76 = scmp.ne.s32.totalorder %s67, %s68
    %p77 = scmp.eq.s32.totalorder %s15, 0
    %p78 = por %p76, %p77
    %p79 = scmp.ne.s32.totalorder %s67, %s68
    %p80 = scmp.eq.s32.totalorder %s16, 1
    %p81 = por %p79, %p80
    %p83 = scmp.ne.s32.totalorder %s68, %s82
    %p84 = scmp.eq.s32.totalorder %s16, 0
    %p85 = por %p83, %p84
    %s87 = sadd.s32 %s86, 1
    %p90 = scmp.eq.s32.totalorder %s10, 1
    %p91 = scmp.ne.s32.totalorder %s86, %s88
    %p92 = scmp.eq.s32.totalorder %s10, 0
    %p93 = por %p91, %p92
    %p94 = scmp.ne.s32.totalorder %s86, %s88
    %p95 = scmp.eq.s32.totalorder %s15, 1
    %p96 = por %p94, %p95
    %p97 = scmp.ne.s32.totalorder %s88, %s89
    %p98 = scmp.eq.s32.totalorder %s15, 0
    %p99 = por %p97, %p98
    %p100 = scmp.ne.s32.totalorder %s88, %s89
    %p101 = scmp.eq.s32.totalorder %s16, 1
    %p102 = por %p100, %p101
    %p104 = scmp.ne.s32.totalorder %s89, %s103
    %p105 = scmp.eq.s32.totalorder %s16, 0
    %p106 = por %p104, %p105
    %s107 = ssub.s32 %s10, %s17
    %p108 = scmp.eq.s32.totalorder %s107, 0
    %s110 = sadd.s32 %s109, 1
    %s111 = scalar_select %p108, %s109, %s110
    %p114 = pneg %p108
    %p115 = scmp.eq.s32.totalorder %s10, 1
    %p116 = por %p114, %p115
    %p117 = scmp.ne.s32.totalorder %s109, %s112
    %p118 = scmp.eq.s32.totalorder %s10, 0
    %p119 = por %p117, %p118
    %p120 = scmp.ne.s32.totalorder %s109, %s112
    %p121 = scmp.eq.s32.totalorder %s15, 1
    %p122 = por %p120, %p121
    %p123 = scmp.ne.s32.totalorder %s112, %s113
    %p124 = scmp.eq.s32.totalorder %s15, 0
    %p125 = por %p123, %p124
    %p126 = scmp.ne.s32.totalorder %s112, %s113
    %p127 = scmp.eq.s32.totalorder %s16, 1
    %p128 = por %p126, %p127
    %p130 = scmp.ne.s32.totalorder %s113, %s129
    %p131 = scmp.eq.s32.totalorder %s16, 0
    %p132 = por %p130, %p131
    %p133 = scmp.le.s32.totalorder 1, %s10
    %p134 = scmp.lt.s32.totalorder %s10, 3
    %p135 = pnand %p133, %p134
    %p136 = pneg %p135
    // Predicated region
    $region9: #{convolution_block.3} parent=5 // pred_check
      _
    $region10: #{convolution_block.3} parent=5 // pred_check_branch
      %138 = sbr.rel (%p135) target = $region12
    $region11: #{convolution_block.3} parent=5 // pred_region
      %s139 = ssub.s32 %s10, 1
      // Predicated region
      $region13: #{convolution_block.3} parent=11 // pred_check
        %p140 = pneg %p57
      $region14: #{convolution_block.3} parent=11 // pred_check_branch
        %142 = sbr.rel (%p140) target = $region16
      $region15: #{convolution_block.3} parent=11 // pred_region
        _
      $region16: #{convolution_block.3} parent=11 // pred_fallthru
        _
      // Predicated region
      $region17: #{convolution_block.3} parent=11 // pred_check
        %p143 = pneg %p78
      $region18: #{convolution_block.3} parent=11 // pred_check_branch
        %145 = sbr.rel (%p143) target = $region20
      $region19: #{convolution_block.3} parent=11 // pred_region
        _
      $region20: #{convolution_block.3} parent=11 // pred_fallthru
        _
      // Predicated region
      $region21: #{convolution_block.3} parent=11 // pred_check
        %p146 = pneg %p99
      $region22: #{convolution_block.3} parent=11 // pred_check_branch
        %148 = sbr.rel (%p146) target = $region24
      $region23: #{convolution_block.3} parent=11 // pred_region
        _
      $region24: #{convolution_block.3} parent=11 // pred_fallthru
        _
    $region12: #{convolution_block.3} parent=5 // pred_fallthru
      _
    %p149 = scmp.lt.s32.totalorder %s10, 2
    // Predicated region
    $region25: #{convolution_block.3} parent=5 // pred_check
      %p150 = pneg %p149
    $region26: #{convolution_block.3} parent=5 // pred_check_branch
      %152 = sbr.rel (%p150) target = $region28
    $region27: #{convolution_block.3} parent=5 // pred_region
      // Predicated region
      $region29: #{convolution_block.3} parent=27 // pred_check
        %p153 = pneg %p30
      $region30: #{convolution_block.3} parent=27 // pred_check_branch
        %155 = sbr.rel (%p153) target = $region32
      $region31: #{convolution_block.3} parent=27 // pred_region
        %p156 = scmp.lt.s32.totalorder %s10, 1
        %s157 = scalar_select %p156, %s10, 1
        %s158 = smul.addr %s157, 54
        %s159 = smul.addr %s158, 4
        %s160 = scalar_lea.vmem %s0, %s159
      $region32: #{convolution_block.3} parent=27 // pred_fallthru
        _
    $region28: #{convolution_block.3} parent=5 // pred_fallthru
      _
    %p161 = scmp.le.s32.totalorder 1, %s10
    %p162 = scmp.lt.s32.totalorder %s10, 3
    %p163 = pnand %p161, %p162
    %p164 = pneg %p163
    // Predicated region
    $region33: #{convolution_block.3} parent=5 // pred_check
      _
    $region34: #{convolution_block.3} parent=5 // pred_check_branch
      %166 = sbr.rel (%p163) target = $region36
    $region35: #{convolution_block.3} parent=5 // pred_region
      %s167 = ssub.s32 %s10, 1
      %p168 = scmp.lt.s32.totalorder %s15, 1
      %s169 = scalar_select %p168, %s15, 1
      %s170 = smul.addr %s169, 54
      %s171 = smul.addr %s170, 4
      %s172 = scalar_lea.vmem %s0, %s171
      %p173 = pneg %p36
      %p174 = pneg %p33
      %p175 = pneg %p57
      %p176 = pneg %p54
      %p177 = pneg %p78
      %p178 = pneg %p75
      %p179 = pneg %p99
      %p180 = pneg %p96
      %p181 = pneg %p125
      %p182 = pneg %p122
      %p183 = scmp.lt.s32.totalorder %s15, 1
      %s184 = scalar_select %p183, %s15, 1
      %s185 = smul.addr %s184, 2
      %s186 = smul.addr %s185, 8
      %s187 = scalar_lea.vmem %s4, %s186
      %p188 = scmp.lt.s32.totalorder %s15, 1
      %s189 = scalar_select %p188, %s15, 1
      %s190 = smul.addr %s189, 54
      %s191 = smul.addr %s190, 4
      %s192 = scalar_lea.vmem %s0, %s191
      %p193 = scmp.lt.s32.totalorder %s15, 1
      %s194 = scalar_select %p193, %s15, 1
      %s195 = smul.addr %s194, 2
      %s196 = smul.addr %s195, 8
      %s197 = scalar_lea.vmem %s4, %s196
      %v199 = vld [vmem:[%s192] sm:$0xf]
      %v200 = vld [vmem:[%s192 + $0x4] sm:$0xf]
      %v201 = vld [vmem:[%s192 + $0x8] sm:$0x1]
      %v202 = vld [vmem:[%s192 + $0xc] sm:$0xf]
      %v203 = vld [vmem:[%s192 + $0x10] sm:$0xf]
      %v204 = vld [vmem:[%s192 + $0x14] sm:$0x1]
      %v205 = vld [vmem:[%s192 + $0x18] sm:$0xf]
      %v206 = vld [vmem:[%s192 + $0x1c] sm:$0xf]
      %v207 = vld [vmem:[%s192 + $0x20] sm:$0x1]
      %v208 = vld [vmem:[%s192 + $0x24] sm:$0xf]
      %v209 = vld [vmem:[%s192 + $0x28] sm:$0xf]
      %v210 = vld [vmem:[%s192 + $0x2c] sm:$0x1]
      %v211 = vld [vmem:[%s192 + $0x30] sm:$0xf]
      %v212 = vld [vmem:[%s192 + $0x34] sm:$0xf]
      %v213 = vld [vmem:[%s192 + $0x38] sm:$0x1]
      %v214 = vld [vmem:[%s192 + $0x3c] sm:$0xf]
      %v215 = vld [vmem:[%s192 + $0x40] sm:$0xf]
      %v216 = vld [vmem:[%s192 + $0x44] sm:$0x1]
      %v217 = vld [vmem:[%s192 + $0x48] sm:$0xf]
      %v218 = vld [vmem:[%s192 + $0x4c] sm:$0xf]
      %v219 = vld [vmem:[%s192 + $0x50] sm:$0x1]
      %v220 = vld [vmem:[%s192 + $0x54] sm:$0xf]
      %v221 = vld [vmem:[%s192 + $0x58] sm:$0xf]
      %v222 = vld [vmem:[%s192 + $0x5c] sm:$0x1]
      %v223 = vld [vmem:[%s192 + $0x60] sm:$0xf]
      %v224 = vld [vmem:[%s192 + $0x64] sm:$0xf]
      %v225 = vld [vmem:[%s192 + $0x68] sm:$0x1]
      %v226 = vld [vmem:[%s192 + $0x6c] sm:$0xf]
      %v227 = vld [vmem:[%s192 + $0x70] sm:$0xf]
      %v228 = vld [vmem:[%s192 + $0x74] sm:$0x1]
      %v229 = vld [vmem:[%s192 + $0x78] sm:$0xf]
      %v230 = vld [vmem:[%s192 + $0x7c] sm:$0xf]
      %v231 = vld [vmem:[%s192 + $0x80] sm:$0x1]
      %v232 = vld [vmem:[%s192 + $0x84] sm:$0xf]
      %v233 = vld [vmem:[%s192 + $0x88] sm:$0xf]
      %v234 = vld [vmem:[%s192 + $0x8c] sm:$0x1]
      %v235 = vld [vmem:[%s192 + $0x90] sm:$0xf]
      %v236 = vld [vmem:[%s192 + $0x94] sm:$0xf]
      %v237 = vld [vmem:[%s192 + $0x98] sm:$0x1]
      %v238 = vld [vmem:[%s192 + $0x9c] sm:$0xf]
      %v239 = vld [vmem:[%s192 + $0xa0] sm:$0xf]
      %v240 = vld [vmem:[%s192 + $0xa4] sm:$0x1]
      %v241 = vld [vmem:[%s192 + $0xa8] sm:$0xf]
      %v242 = vld [vmem:[%s192 + $0xac] sm:$0xf]
      %v243 = vld [vmem:[%s192 + $0xb0] sm:$0x1]
      %v244 = vld [vmem:[%s192 + $0xb4] sm:$0xf]
      %v245 = vld [vmem:[%s192 + $0xb8] sm:$0xf]
      %v246 = vld [vmem:[%s192 + $0xbc] sm:$0x1]
      %v247 = vld [vmem:[%s192 + $0xc0] sm:$0xf]
      %v248 = vld [vmem:[%s192 + $0xc4] sm:$0xf]
      %v249 = vld [vmem:[%s192 + $0xc8] sm:$0x1]
      %v250 = vld [vmem:[%s192 + $0xcc] sm:$0xf]
      %v251 = vld [vmem:[%s192 + $0xd0] sm:$0xf]
      %v252 = vld [vmem:[%s192 + $0xd4] sm:$0x1]
      %v253 = vld [vmem:[%s1] sm:$0x3]
      %vm254 = vsmask.f32 3328
      %vm255 = vsmask.f32 7440
      %vm256 = vmor %vm254, %vm255
      %v258 = vshrl.u32 %v199, 16
      %v260 = vrot.slane %v258, 4
      %v261 = vshll.u32 %v199, 16
      %v263 = vrot.slane %v261, 5
      %v264 = vor.u32 %v260, %v263
      %v265 = vrot.slane %v264, 4
      %v267 = vshll.u32 %v200, 16
      %v269 = vrot.slane %v267, 5
      %v270 = vsel %vm256, %v265, %v269
      %v271 = vshrl.u32 %v200, 16
      %v273 = vrot.slane %v271, 4
      %v274 = vor.u32 %v273, %v269
      %v275 = vrot.slane %v274, 4
      %v277 = vshll.u32 %v201, 16
      %v279 = vrot.slane %v277, 5
      %v280 = vsel %vm256, %v275, %v279
      %v282 = vshrl.u32 %v202, 16
      %v284 = vrot.slane %v282, 4
      %v285 = vshll.u32 %v202, 16
      %v287 = vrot.slane %v285, 5
      %v288 = vor.u32 %v284, %v287
      %v289 = vrot.slane %v288, 4
      %v291 = vshll.u32 %v203, 16
      %v293 = vrot.slane %v291, 5
      %v294 = vsel %vm256, %v289, %v293
      %v295 = vshrl.u32 %v203, 16
      %v297 = vrot.slane %v295, 4
      %v298 = vor.u32 %v297, %v293
      %v299 = vrot.slane %v298, 4
      %v301 = vshll.u32 %v204, 16
      %v303 = vrot.slane %v301, 5
      %v304 = vsel %vm256, %v299, %v303
      %v306 = vshrl.u32 %v205, 16
      %v308 = vrot.slane %v306, 4
      %v309 = vshll.u32 %v205, 16
      %v311 = vrot.slane %v309, 5
      %v312 = vor.u32 %v308, %v311
      %v313 = vrot.slane %v312, 4
      %v315 = vshll.u32 %v206, 16
      %v317 = vrot.slane %v315, 5
      %v318 = vsel %vm256, %v313, %v317
      %v319 = vshrl.u32 %v206, 16
      %v321 = vrot.slane %v319, 4
      %v322 = vor.u32 %v321, %v317
      %v323 = vrot.slane %v322, 4
      %v325 = vshll.u32 %v207, 16
      %v327 = vrot.slane %v325, 5
      %v328 = vsel %vm256, %v323, %v327
      %v330 = vshrl.u32 %v208, 16
      %v332 = vrot.slane %v330, 4
      %v333 = vshll.u32 %v208, 16
      %v335 = vrot.slane %v333, 5
      %v336 = vor.u32 %v332, %v335
      %v337 = vrot.slane %v336, 4
      %v339 = vshll.u32 %v209, 16
      %v341 = vrot.slane %v339, 5
      %v342 = vsel %vm256, %v337, %v341
      %v343 = vshrl.u32 %v209, 16
      %v345 = vrot.slane %v343, 4
      %v346 = vor.u32 %v345, %v341
      %v347 = vrot.slane %v346, 4
      %v349 = vshll.u32 %v210, 16
      %v351 = vrot.slane %v349, 5
      %v352 = vsel %vm256, %v347, %v351
      %v354 = vshrl.u32 %v211, 16
      %v356 = vrot.slane %v354, 4
      %v357 = vshll.u32 %v211, 16
      %v359 = vrot.slane %v357, 5
      %v360 = vor.u32 %v356, %v359
      %v361 = vrot.slane %v360, 4
      %v363 = vshll.u32 %v212, 16
      %v365 = vrot.slane %v363, 5
      %v366 = vsel %vm256, %v361, %v365
      %v367 = vshrl.u32 %v212, 16
      %v369 = vrot.slane %v367, 4
      %v370 = vor.u32 %v369, %v365
      %v371 = vrot.slane %v370, 4
      %v373 = vshll.u32 %v213, 16
      %v375 = vrot.slane %v373, 5
      %v376 = vsel %vm256, %v371, %v375
      %v378 = vshrl.u32 %v214, 16
      %v380 = vrot.slane %v378, 4
      %v381 = vshll.u32 %v214, 16
      %v383 = vrot.slane %v381, 5
      %v384 = vor.u32 %v380, %v383
      %v385 = vrot.slane %v384, 4
      %v387 = vshll.u32 %v215, 16
      %v389 = vrot.slane %v387, 5
      %v390 = vsel %vm256, %v385, %v389
      %v391 = vshrl.u32 %v215, 16
      %v393 = vrot.slane %v391, 4
      %v394 = vor.u32 %v393, %v389
      %v395 = vrot.slane %v394, 4
      %v397 = vshll.u32 %v216, 16
      %v399 = vrot.slane %v397, 5
      %v400 = vsel %vm256, %v395, %v399
      %v402 = vshrl.u32 %v217, 16
      %v404 = vrot.slane %v402, 4
      %v405 = vshll.u32 %v217, 16
      %v407 = vrot.slane %v405, 5
      %v408 = vor.u32 %v404, %v407
      %v409 = vrot.slane %v408, 4
      %v411 = vshll.u32 %v218, 16
      %v413 = vrot.slane %v411, 5
      %v414 = vsel %vm256, %v409, %v413
      %v415 = vshrl.u32 %v218, 16
      %v417 = vrot.slane %v415, 4
      %v418 = vor.u32 %v417, %v413
      %v419 = vrot.slane %v418, 4
      %v421 = vshll.u32 %v219, 16
      %v423 = vrot.slane %v421, 5
      %v424 = vsel %vm256, %v419, %v423
      %v426 = vshrl.u32 %v220, 16
      %v428 = vrot.slane %v426, 4
      %v429 = vshll.u32 %v220, 16
      %v431 = vrot.slane %v429, 5
      %v432 = vor.u32 %v428, %v431
      %v433 = vrot.slane %v432, 4
      %v435 = vshll.u32 %v221, 16
      %v437 = vrot.slane %v435, 5
      %v438 = vsel %vm256, %v433, %v437
      %v439 = vshrl.u32 %v221, 16
      %v441 = vrot.slane %v439, 4
      %v442 = vor.u32 %v441, %v437
      %v443 = vrot.slane %v442, 4
      %v445 = vshll.u32 %v222, 16
      %v447 = vrot.slane %v445, 5
      %v448 = vsel %vm256, %v443, %v447
      %v450 = vshrl.u32 %v223, 16
      %v452 = vrot.slane %v450, 4
      %v453 = vshll.u32 %v223, 16
      %v455 = vrot.slane %v453, 5
      %v456 = vor.u32 %v452, %v455
      %v457 = vrot.slane %v456, 4
      %v459 = vshll.u32 %v224, 16
      %v461 = vrot.slane %v459, 5
      %v462 = vsel %vm256, %v457, %v461
      %v463 = vshrl.u32 %v224, 16
      %v465 = vrot.slane %v463, 4
      %v466 = vor.u32 %v465, %v461
      %v467 = vrot.slane %v466, 4
      %v469 = vshll.u32 %v225, 16
      %v471 = vrot.slane %v469, 5
      %v472 = vsel %vm256, %v467, %v471
      %v474 = vshrl.u32 %v226, 16
      %v476 = vrot.slane %v474, 4
      %v477 = vshll.u32 %v226, 16
      %v479 = vrot.slane %v477, 5
      %v480 = vor.u32 %v476, %v479
      %v481 = vrot.slane %v480, 4
      %v483 = vshll.u32 %v227, 16
      %v485 = vrot.slane %v483, 5
      %v486 = vsel %vm256, %v481, %v485
      %v487 = vshrl.u32 %v227, 16
      %v489 = vrot.slane %v487, 4
      %v490 = vor.u32 %v489, %v485
      %v491 = vrot.slane %v490, 4
      %v493 = vshll.u32 %v228, 16
      %v495 = vrot.slane %v493, 5
      %v496 = vsel %vm256, %v491, %v495
      %v498 = vshrl.u32 %v229, 16
      %v500 = vrot.slane %v498, 4
      %v501 = vshll.u32 %v229, 16
      %v503 = vrot.slane %v501, 5
      %v504 = vor.u32 %v500, %v503
      %v505 = vrot.slane %v504, 4
      %v507 = vshll.u32 %v230, 16
      %v509 = vrot.slane %v507, 5
      %v510 = vsel %vm256, %v505, %v509
      %v511 = vshrl.u32 %v230, 16
      %v513 = vrot.slane %v511, 4
      %v514 = vor.u32 %v513, %v509
      %v515 = vrot.slane %v514, 4
      %v517 = vshll.u32 %v231, 16
      %v519 = vrot.slane %v517, 5
      %v520 = vsel %vm256, %v515, %v519
      %v522 = vshrl.u32 %v232, 16
      %v524 = vrot.slane %v522, 4
      %v525 = vshll.u32 %v232, 16
      %v527 = vrot.slane %v525, 5
      %v528 = vor.u32 %v524, %v527
      %v529 = vrot.slane %v528, 4
      %v531 = vshll.u32 %v233, 16
      %v533 = vrot.slane %v531, 5
      %v534 = vsel %vm256, %v529, %v533
      %v535 = vshrl.u32 %v233, 16
      %v537 = vrot.slane %v535, 4
      %v538 = vor.u32 %v537, %v533
      %v539 = vrot.slane %v538, 4
      %v541 = vshll.u32 %v234, 16
      %v543 = vrot.slane %v541, 5
      %v544 = vsel %vm256, %v539, %v543
      %v546 = vshrl.u32 %v235, 16
      %v548 = vrot.slane %v546, 4
      %v549 = vshll.u32 %v235, 16
      %v551 = vrot.slane %v549, 5
      %v552 = vor.u32 %v548, %v551
      %v553 = vrot.slane %v552, 4
      %v555 = vshll.u32 %v236, 16
      %v557 = vrot.slane %v555, 5
      %v558 = vsel %vm256, %v553, %v557
      %v559 = vshrl.u32 %v236, 16
      %v561 = vrot.slane %v559, 4
      %v562 = vor.u32 %v561, %v557
      %v563 = vrot.slane %v562, 4
      %v565 = vshll.u32 %v237, 16
      %v567 = vrot.slane %v565, 5
      %v568 = vsel %vm256, %v563, %v567
      %v570 = vshrl.u32 %v238, 16
      %v572 = vrot.slane %v570, 4
      %v573 = vshll.u32 %v238, 16
      %v575 = vrot.slane %v573, 5
      %v576 = vor.u32 %v572, %v575
      %v577 = vrot.slane %v576, 4
      %v579 = vshll.u32 %v239, 16
      %v581 = vrot.slane %v579, 5
      %v582 = vsel %vm256, %v577, %v581
      %v583 = vshrl.u32 %v239, 16
      %v585 = vrot.slane %v583, 4
      %v586 = vor.u32 %v585, %v581
      %v587 = vrot.slane %v586, 4
      %v589 = vshll.u32 %v240, 16
      %v591 = vrot.slane %v589, 5
      %v592 = vsel %vm256, %v587, %v591
      %v594 = vshrl.u32 %v241, 16
      %v596 = vrot.slane %v594, 4
      %v597 = vshll.u32 %v241, 16
      %v599 = vrot.slane %v597, 5
      %v600 = vor.u32 %v596, %v599
      %v601 = vrot.slane %v600, 4
      %v603 = vshll.u32 %v242, 16
      %v605 = vrot.slane %v603, 5
      %v606 = vsel %vm256, %v601, %v605
      %v607 = vshrl.u32 %v242, 16
      %v609 = vrot.slane %v607, 4
      %v610 = vor.u32 %v609, %v605
      %v611 = vrot.slane %v610, 4
      %v613 = vshll.u32 %v243, 16
      %v615 = vrot.slane %v613, 5
      %v616 = vsel %vm256, %v611, %v615
      %v618 = vshrl.u32 %v244, 16
      %v620 = vrot.slane %v618, 4
      %v621 = vshll.u32 %v244, 16
      %v623 = vrot.slane %v621, 5
      %v624 = vor.u32 %v620, %v623
      %v625 = vrot.slane %v624, 4
      %v627 = vshll.u32 %v245, 16
      %v629 = vrot.slane %v627, 5
      %v630 = vsel %vm256, %v625, %v629
      %v631 = vshrl.u32 %v245, 16
      %v633 = vrot.slane %v631, 4
      %v634 = vor.u32 %v633, %v629
      %v635 = vrot.slane %v634, 4
      %v637 = vshll.u32 %v246, 16
      %v639 = vrot.slane %v637, 5
      %v640 = vsel %vm256, %v635, %v639
      %s641 = scalar_lea.vmem %s1, 2
      %v642 = vld [vmem:[%s641] sm:$0x3]
      %v643 = vunpack.c.l.b16 %v270
      %v644 = vunpack.c.l.b16 %v280
      %v645 = vunpack.c.l.b16 %v294
      %v646 = vunpack.c.l.b16 %v304
      %v647 = vunpack.c.l.b16 %v318
      %v648 = vunpack.c.l.b16 %v328
      %v649 = vunpack.c.l.b16 %v342
      %v650 = vunpack.c.l.b16 %v352
      %v651 = vunpack.c.l.b16 %v366
      %v652 = vunpack.c.l.b16 %v376
      %v653 = vunpack.c.l.b16 %v390
      %v654 = vunpack.c.l.b16 %v400
      %v655 = vunpack.c.l.b16 %v414
      %v656 = vunpack.c.l.b16 %v424
      %v657 = vunpack.c.l.b16 %v438
      %v658 = vunpack.c.l.b16 %v448
      %v659 = vunpack.c.l.b16 %v462
      %v660 = vunpack.c.l.b16 %v472
      %v661 = vunpack.c.l.b16 %v486
      %v662 = vunpack.c.l.b16 %v496
      %v663 = vunpack.c.l.b16 %v510
      %v664 = vunpack.c.l.b16 %v520
      %v665 = vunpack.c.l.b16 %v534
      %v666 = vunpack.c.l.b16 %v544
      %v667 = vunpack.c.l.b16 %v558
      %v668 = vunpack.c.l.b16 %v568
      %v669 = vunpack.c.l.b16 %v582
      %v670 = vunpack.c.l.b16 %v592
      %v671 = vunpack.c.l.b16 %v606
      %v672 = vunpack.c.l.b16 %v616
      %v673 = vunpack.c.l.b16 %v630
      %v674 = vunpack.c.l.b16 %v640
      %v675 = vpack.c.b16 %v644, %v643
      %v676 = vpack.c.b16 %v646, %v645
      %v677 = vpack.c.b16 %v648, %v647
      %v678 = vpack.c.b16 %v650, %v649
      %v679 = vpack.c.b16 %v652, %v651
      %v680 = vpack.c.b16 %v654, %v653
      %v681 = vpack.c.b16 %v656, %v655
      %v682 = vpack.c.b16 %v658, %v657
      %v683 = vpack.c.b16 %v660, %v659
      %v684 = vpack.c.b16 %v662, %v661
      %v685 = vpack.c.b16 %v664, %v663
      %v686 = vpack.c.b16 %v666, %v665
      %v687 = vpack.c.b16 %v668, %v667
      %v688 = vpack.c.b16 %v670, %v669
      %v689 = vpack.c.b16 %v672, %v671
      %v690 = vpack.c.b16 %v674, %v673
      %vm691 = vcmask 31744
      %v693 = vsel %vm691, %v675, 0
      %v696 = vsel %vm691, %v676, 0
      %v699 = vsel %vm691, %v677, 0
      %v702 = vsel %vm691, %v678, 0
      %v705 = vsel %vm691, %v679, 0
      %v708 = vsel %vm691, %v680, 0
      %v711 = vsel %vm691, %v681, 0
      %v714 = vsel %vm691, %v682, 0
      %v717 = vsel %vm691, %v683, 0
      %v720 = vsel %vm691, %v684, 0
      %v723 = vsel %vm691, %v685, 0
      %v726 = vsel %vm691, %v686, 0
      %v729 = vsel %vm691, %v687, 0
      %v732 = vsel %vm691, %v688, 0
      %v735 = vsel %vm691, %v689, 0
      %v738 = vsel %vm691, %v690, 0
      %vm740 = vcmask 1041408
      %v742 = vsel %vm740, %v642, 0
      %744 = vmatprep.subr.bf16.mxu0 0
      %745 = vmatpush1.bf16.msra.mxu0 %v742
      %746 = vmatprep.subr.bf16.mxu0 0
      %747 = vmatpush1.bf16.msra.mxu0 0
      %748 = vmatprep.subr.bf16.mxu0 0
      %749 = vmatpush1.bf16.msra.mxu0 0
      %750 = vmatprep.subr.bf16.mxu0 0
      %751 = vmatpush1.bf16.msra.mxu0 0
      %752 = vmatprep.subr.bf16.mxu0 0
      %753 = vmatpush1.bf16.msra.mxu0 0
      %754 = vmatprep.subr.bf16.mxu0 0
      %755 = vmatpush1.bf16.msra.mxu0 0
      %756 = vmatprep.subr.bf16.mxu0 0
      %757 = vmatpush1.bf16.msra.mxu0 0
      %758 = vmatprep.subr.bf16.mxu0 0
      %759 = vmatpush1.bf16.msra.mxu0 0
      %760 = vmatprep.subr.bf16.mxu0 0
      %761 = vmatpush1.bf16.msra.mxu0 0
      %762 = vmatprep.subr.bf16.mxu0 0
      %763 = vmatpush1.bf16.msra.mxu0 0
      %764 = vmatprep.subr.bf16.mxu0 0
      %765 = vmatpush1.bf16.msra.mxu0 0
      %766 = vmatprep.subr.bf16.mxu0 0
      %767 = vmatpush1.bf16.msra.mxu0 0
      %768 = vmatprep.subr.bf16.mxu0 0
      %769 = vmatpush1.bf16.msra.mxu0 0
      %770 = vmatprep.subr.bf16.mxu0 0
      %771 = vmatpush1.bf16.msra.mxu0 0
      %772 = vmatprep.subr.bf16.mxu0 0
      %773 = vmatpush1.bf16.msra.mxu0 0
      %774 = vmatprep.subr.bf16.mxu0 0
      %775 = vmatpush1.bf16.msra.mxu0 0
      %776 = vmatprep.mubr.bf16.mxu0 0
      %777 = vmatmul.mubr.bf16.gmra.mrb[0].mxu0 %v693
      %v778 = vpop.f32.mrb[0].mxu0
      %v779 = vadd.f32 0.0, %v778
      %v780 = vpop.f32.mrb[0].mxu0
      %v781 = vpop.f32.mrb[0].mxu0
      %v782 = vadd.f32 0.0, %v781
      %v783 = vpop.f32.mrb[0].mxu0
      %784 = vmatprep.mubr.bf16.mxu0 0
      %785 = vmatmul.mubr.bf16.gmra.mrb[0].mxu0 %v696
      %v786 = vpop.f32.mrb[0].mxu0
      %v787 = vadd.f32 0.0, %v786
      %v788 = vpop.f32.mrb[0].mxu0
      %v789 = vpop.f32.mrb[0].mxu0
      %v790 = vadd.f32 0.0, %v789
      %v791 = vpop.f32.mrb[0].mxu0
      %792 = vmatprep.mubr.bf16.mxu0 0
      %793 = vmatmul.mubr.bf16.gmra.mrb[0].mxu0 %v699
      %v794 = vpop.f32.mrb[0].mxu0
      %v795 = vadd.f32 0.0, %v794
      %v796 = vpop.f32.mrb[0].mxu0
      %v797 = vpop.f32.mrb[0].mxu0
      %v798 = vadd.f32 0.0, %v797
      %v799 = vpop.f32.mrb[0].mxu0
      %800 = vmatprep.mubr.bf16.mxu0 0
      %801 = vmatmul.mubr.bf16.gmra.mrb[0].mxu0 %v702
      %v802 = vpop.f32.mrb[0].mxu0
      %v803 = vadd.f32 0.0, %v802
      %v804 = vpop.f32.mrb[0].mxu0
      %v805 = vpop.f32.mrb[0].mxu0
      %v806 = vadd.f32 0.0, %v805
      %v807 = vpop.f32.mrb[0].mxu0
      %808 = vmatprep.mubr.bf16.mxu0 0
      %809 = vmatmul.mubr.bf16.gmra.mrb[0].mxu0 %v705
      %v810 = vpop.f32.mrb[0].mxu0
      %v811 = vadd.f32 0.0, %v810
      %v812 = vpop.f32.mrb[0].mxu0
      %v813 = vpop.f32.mrb[0].mxu0
      %v814 = vadd.f32 0.0, %v813
      %v815 = vpop.f32.mrb[0].mxu0
      %816 = vmatprep.mubr.bf16.mxu0 0
      %817 = vmatmul.mubr.bf16.gmra.mrb[0].mxu0 %v708
      %v818 = vpop.f32.mrb[0].mxu0
      %v819 = vadd.f32 0.0, %v818
      %v820 = vpop.f32.mrb[0].mxu0
      %v821 = vpop.f32.mrb[0].mxu0
      %v822 = vadd.f32 0.0, %v821
      %v823 = vpop.f32.mrb[0].mxu0
      %824 = vmatprep.mubr.bf16.mxu0 0
      %825 = vmatmul.mubr.bf16.gmra.mrb[0].mxu0 %v711
      %v826 = vpop.f32.mrb[0].mxu0
      %v827 = vadd.f32 0.0, %v826
      %v828 = vpop.f32.mrb[0].mxu0
      %v829 = vpop.f32.mrb[0].mxu0
      %v830 = vadd.f32 0.0, %v829
      %v831 = vpop.f32.mrb[0].mxu0
      %832 = vmatprep.mubr.bf16.mxu0 0
      %833 = vmatmul.mubr.bf16.gmra.mrb[0].mxu0 %v714
      %v834 = vpop.f32.mrb[0].mxu0
      %v835 = vadd.f32 0.0, %v834
      %v836 = vpop.f32.mrb[0].mxu0
      %v837 = vpop.f32.mrb[0].mxu0
      %v838 = vadd.f32 0.0, %v837
      %v839 = vpop.f32.mrb[0].mxu0
      %840 = vmatprep.mubr.bf16.mxu0 0
      %841 = vmatmul.mubr.bf16.gmra.mrb[0].mxu0 %v717
      %v842 = vpop.f32.mrb[0].mxu0
      %v843 = vadd.f32 0.0, %v842
      %v844 = vpop.f32.mrb[0].mxu0
      %v845 = vpop.f32.mrb[0].mxu0
      %v846 = vadd.f32 0.0, %v845
      %v847 = vpop.f32.mrb[0].mxu0
      %848 = vmatprep.mubr.bf16.mxu0 0
      %849 = vmatmul.mubr.bf16.gmra.mrb[0].mxu0 %v720
      %v850 = vpop.f32.mrb[0].mxu0
      %v851 = vadd.f32 0.0, %v850
      %v852 = vpop.f32.mrb[0].mxu0
      %v853 = vpop.f32.mrb[0].mxu0
      %v854 = vadd.f32 0.0, %v853
      %v855 = vpop.f32.mrb[0].mxu0
      %856 = vmatprep.mubr.bf16.mxu0 0
      %857 = vmatmul.mubr.bf16.gmra.mrb[0].mxu0 %v723
      %v858 = vpop.f32.mrb[0].mxu0
      %v859 = vadd.f32 0.0, %v858
      %v860 = vpop.f32.mrb[0].mxu0
      %v861 = vpop.f32.mrb[0].mxu0
      %v862 = vadd.f32 0.0, %v861
      %v863 = vpop.f32.mrb[0].mxu0
      %864 = vmatprep.mubr.bf16.mxu0 0
      %865 = vmatmul.mubr.bf16.gmra.mrb[0].mxu0 %v726
      %v866 = vpop.f32.mrb[0].mxu0
      %v867 = vadd.f32 0.0, %v866
      %v868 = vpop.f32.mrb[0].mxu0
      %v869 = vpop.f32.mrb[0].mxu0
      %v870 = vadd.f32 0.0, %v869
      %v871 = vpop.f32.mrb[0].mxu0
      %872 = vmatprep.mubr.bf16.mxu0 0
      %873 = vmatmul.mubr.bf16.gmra.mrb[0].mxu0 %v729
      %v874 = vpop.f32.mrb[0].mxu0
      %v875 = vadd.f32 0.0, %v874
      %v876 = vpop.f32.mrb[0].mxu0
      %v877 = vpop.f32.mrb[0].mxu0
      %v878 = vadd.f32 0.0, %v877
      %v879 = vpop.f32.mrb[0].mxu0
      %880 = vmatprep.mubr.bf16.mxu0 0
      %881 = vmatmul.mubr.bf16.gmra.mrb[0].mxu0 %v732
      %v882 = vpop.f32.mrb[0].mxu0
      %v883 = vadd.f32 0.0, %v882
      %v884 = vpop.f32.mrb[0].mxu0
      %v885 = vpop.f32.mrb[0].mxu0
      %v886 = vadd.f32 0.0, %v885
      %v887 = vpop.f32.mrb[0].mxu0
      %888 = vmatprep.mubr.bf16.mxu0 0
      %889 = vmatmul.mubr.bf16.gmra.mrb[0].mxu0 %v735
      %v890 = vpop.f32.mrb[0].mxu0
      %v891 = vadd.f32 0.0, %v890
      %v892 = vpop.f32.mrb[0].mxu0
      %v893 = vpop.f32.mrb[0].mxu0
      %v894 = vadd.f32 0.0, %v893
      %v895 = vpop.f32.mrb[0].mxu0
      %896 = vmatprep.mubr.bf16.mxu0 0
      %897 = vmatmul.mubr.bf16.gmra.mrb[0].mxu0 %v738
      %v898 = vpop.f32.mrb[0].mxu0
      %v899 = vadd.f32 0.0, %v898
      %v900 = vpop.f32.mrb[0].mxu0
      %v901 = vpop.f32.mrb[0].mxu0
      %v902 = vadd.f32 0.0, %v901
      %v903 = vpop.f32.mrb[0].mxu0
      %904 = vdwg.mxu0
      %v937 = vunpack.c.l.b16 %v199
      %v938 = vunpack.c.l.b16 %v200
      %v939 = vunpack.c.l.b16 %v202
      %v940 = vunpack.c.l.b16 %v203
      %v941 = vunpack.c.l.b16 %v205
      %v942 = vunpack.c.l.b16 %v206
      %v943 = vunpack.c.l.b16 %v208
      %v944 = vunpack.c.l.b16 %v209
      %v945 = vunpack.c.l.b16 %v211
      %v946 = vunpack.c.l.b16 %v212
      %v947 = vunpack.c.l.b16 %v214
      %v948 = vunpack.c.l.b16 %v215
      %v949 = vunpack.c.l.b16 %v217
      %v950 = vunpack.c.l.b16 %v218
      %v951 = vunpack.c.l.b16 %v220
      %v952 = vunpack.c.l.b16 %v221
      %v953 = vunpack.c.l.b16 %v223
      %v954 = vunpack.c.l.b16 %v224
      %v955 = vunpack.c.l.b16 %v226
      %v956 = vunpack.c.l.b16 %v227
      %v957 = vunpack.c.l.b16 %v229
      %v958 = vunpack.c.l.b16 %v230
      %v959 = vunpack.c.l.b16 %v232
      %v960 = vunpack.c.l.b16 %v233
      %v961 = vunpack.c.l.b16 %v235
      %v962 = vunpack.c.l.b16 %v236
      %v963 = vunpack.c.l.b16 %v238
      %v964 = vunpack.c.l.b16 %v239
      %v965 = vunpack.c.l.b16 %v241
      %v966 = vunpack.c.l.b16 %v242
      %v967 = vunpack.c.l.b16 %v244
      %v968 = vunpack.c.l.b16 %v245
      %v969 = vpack.c.b16 %v938, %v937
      %v970 = vpack.c.b16 %v940, %v939
      %v971 = vpack.c.b16 %v942, %v941
      %v972 = vpack.c.b16 %v944, %v943
      %v973 = vpack.c.b16 %v946, %v945
      %v974 = vpack.c.b16 %v948, %v947
      %v975 = vpack.c.b16 %v950, %v949
      %v976 = vpack.c.b16 %v952, %v951
      %v977 = vpack.c.b16 %v954, %v953
      %v978 = vpack.c.b16 %v956, %v955
      %v979 = vpack.c.b16 %v958, %v957
      %v980 = vpack.c.b16 %v960, %v959
      %v981 = vpack.c.b16 %v962, %v961
      %v982 = vpack.c.b16 %v964, %v963
      %v983 = vpack.c.b16 %v966, %v965
      %v984 = vpack.c.b16 %v968, %v967
      %v986 = vsel %vm691, %v969, 0
      %v989 = vsel %vm691, %v970, 0
      %v992 = vsel %vm691, %v971, 0
      %v995 = vsel %vm691, %v972, 0
      %v998 = vsel %vm691, %v973, 0
      %v1001 = vsel %vm691, %v974, 0
      %v1004 = vsel %vm691, %v975, 0
      %v1007 = vsel %vm691, %v976, 0
      %v1010 = vsel %vm691, %v977, 0
      %v1013 = vsel %vm691, %v978, 0
      %v1016 = vsel %vm691, %v979, 0
      %v1019 = vsel %vm691, %v980, 0
      %v1022 = vsel %vm691, %v981, 0
      %v1025 = vsel %vm691, %v982, 0
      %v1028 = vsel %vm691, %v983, 0
      %v1031 = vsel %vm691, %v984, 0
      %v1034 = vsel %vm740, %v253, 0
      %1036 = vmatprep.subr.bf16.mxu0 0
      %1037 = vmatpush1.bf16.msra.mxu0 %v1034
      %1038 = vmatprep.subr.bf16.mxu0 0
      %1039 = vmatpush1.bf16.msra.mxu0 0
      %1040 = vmatprep.subr.bf16.mxu0 0
      %1041 = vmatpush1.bf16.msra.mxu0 0
      %1042 = vmatprep.subr.bf16.mxu0 0
      %1043 = vmatpush1.bf16.msra.mxu0 0
      %1044 = vmatprep.subr.bf16.mxu0 0
      %1045 = vmatpush1.bf16.msra.mxu0 0
      %1046 = vmatprep.subr.bf16.mxu0 0
      %1047 = vmatpush1.bf16.msra.mxu0 0
      %1048 = vmatprep.subr.bf16.mxu0 0
      %1049 = vmatpush1.bf16.msra.mxu0 0
      %1050 = vmatprep.subr.bf16.mxu0 0
      %1051 = vmatpush1.bf16.msra.mxu0 0
      %1052 = vmatprep.subr.bf16.mxu0 0
      %1053 = vmatpush1.bf16.msra.mxu0 0
      %1054 = vmatprep.subr.bf16.mxu0 0
      %1055 = vmatpush1.bf16.msra.mxu0 0
      %1056 = vmatprep.subr.bf16.mxu0 0
      %1057 = vmatpush1.bf16.msra.mxu0 0
      %1058 = vmatprep.subr.bf16.mxu0 0
      %1059 = vmatpush1.bf16.msra.mxu0 0
      %1060 = vmatprep.subr.bf16.mxu0 0
      %1061 = vmatpush1.bf16.msra.mxu0 0
      %1062 = vmatprep.subr.bf16.mxu0 0
      %1063 = vmatpush1.bf16.msra.mxu0 0
      %1064 = vmatprep.subr.bf16.mxu0 0
      %1065 = vmatpush1.bf16.msra.mxu0 0
      %1066 = vmatprep.subr.bf16.mxu0 0
      %1067 = vmatpush1.bf16.msra.mxu0 0
      %1068 = vmatprep.mubr.bf16.mxu0 0
      %1069 = vmatmul.mubr.bf16.gmra.mrb[0].mxu0 %v986
      %v1070 = vpop.f32.mrb[0].mxu0
      %v1071 = vadd.f32 %v779, %v1070
      %v1072 = vpop.f32.mrb[0].mxu0
      %v1073 = vpop.f32.mrb[0].mxu0
      %v1074 = vadd.f32 %v782, %v1073
      %v1075 = vpop.f32.mrb[0].mxu0
      %1076 = vmatprep.mubr.bf16.mxu0 0
      %1077 = vmatmul.mubr.bf16.gmra.mrb[0].mxu0 %v989
      %v1078 = vpop.f32.mrb[0].mxu0
      %v1079 = vadd.f32 %v787, %v1078
      %v1080 = vpop.f32.mrb[0].mxu0
      %v1081 = vpop.f32.mrb[0].mxu0
      %v1082 = vadd.f32 %v790, %v1081
      %v1083 = vpop.f32.mrb[0].mxu0
      %1084 = vmatprep.mubr.bf16.mxu0 0
      %1085 = vmatmul.mubr.bf16.gmra.mrb[0].mxu0 %v992
      %v1086 = vpop.f32.mrb[0].mxu0
      %v1087 = vadd.f32 %v795, %v1086
      %v1088 = vpop.f32.mrb[0].mxu0
      %v1089 = vpop.f32.mrb[0].mxu0
      %v1090 = vadd.f32 %v798, %v1089
      %v1091 = vpop.f32.mrb[0].mxu0
      %1092 = vmatprep.mubr.bf16.mxu0 0
      %1093 = vmatmul.mubr.bf16.gmra.mrb[0].mxu0 %v995
      %v1094 = vpop.f32.mrb[0].mxu0
      %v1095 = vadd.f32 %v803, %v1094
      %v1096 = vpop.f32.mrb[0].mxu0
      %v1097 = vpop.f32.mrb[0].mxu0
      %v1098 = vadd.f32 %v806, %v1097
      %v1099 = vpop.f32.mrb[0].mxu0
      %1100 = vmatprep.mubr.bf16.mxu0 0
      %1101 = vmatmul.mubr.bf16.gmra.mrb[0].mxu0 %v998
      %v1102 = vpop.f32.mrb[0].mxu0
      %v1103 = vadd.f32 %v811, %v1102
      %v1104 = vpop.f32.mrb[0].mxu0
      %v1105 = vpop.f32.mrb[0].mxu0
      %v1106 = vadd.f32 %v814, %v1105
      %v1107 = vpop.f32.mrb[0].mxu0
      %1108 = vmatprep.mubr.bf16.mxu0 0
      %1109 = vmatmul.mubr.bf16.gmra.mrb[0].mxu0 %v1001
      %v1110 = vpop.f32.mrb[0].mxu0
      %v1111 = vadd.f32 %v819, %v1110
      %v1112 = vpop.f32.mrb[0].mxu0
      %v1113 = vpop.f32.mrb[0].mxu0
      %v1114 = vadd.f32 %v822, %v1113
      %v1115 = vpop.f32.mrb[0].mxu0
      %1116 = vmatprep.mubr.bf16.mxu0 0
      %1117 = vmatmul.mubr.bf16.gmra.mrb[0].mxu0 %v1004
      %v1118 = vpop.f32.mrb[0].mxu0
      %v1119 = vadd.f32 %v827, %v1118
      %v1120 = vpop.f32.mrb[0].mxu0
      %v1121 = vpop.f32.mrb[0].mxu0
      %v1122 = vadd.f32 %v830, %v1121
      %v1123 = vpop.f32.mrb[0].mxu0
      %1124 = vmatprep.mubr.bf16.mxu0 0
      %1125 = vmatmul.mubr.bf16.gmra.mrb[0].mxu0 %v1007
      %v1126 = vpop.f32.mrb[0].mxu0
      %v1127 = vadd.f32 %v835, %v1126
      %v1128 = vpop.f32.mrb[0].mxu0
      %v1129 = vpop.f32.mrb[0].mxu0
      %v1130 = vadd.f32 %v838, %v1129
      %v1131 = vpop.f32.mrb[0].mxu0
      %1132 = vmatprep.mubr.bf16.mxu0 0
      %1133 = vmatmul.mubr.bf16.gmra.mrb[0].mxu0 %v1010
      %v1134 = vpop.f32.mrb[0].mxu0
      %v1135 = vadd.f32 %v843, %v1134
      %v1136 = vpop.f32.mrb[0].mxu0
      %v1137 = vpop.f32.mrb[0].mxu0
      %v1138 = vadd.f32 %v846, %v1137
      %v1139 = vpop.f32.mrb[0].mxu0
      %1140 = vmatprep.mubr.bf16.mxu0 0
      %1141 = vmatmul.mubr.bf16.gmra.mrb[0].mxu0 %v1013
      %v1142 = vpop.f32.mrb[0].mxu0
      %v1143 = vadd.f32 %v851, %v1142
      %v1144 = vpop.f32.mrb[0].mxu0
      %v1145 = vpop.f32.mrb[0].mxu0
      %v1146 = vadd.f32 %v854, %v1145
      %v1147 = vpop.f32.mrb[0].mxu0
      %1148 = vmatprep.mubr.bf16.mxu0 0
      %1149 = vmatmul.mubr.bf16.gmra.mrb[0].mxu0 %v1016
      %v1150 = vpop.f32.mrb[0].mxu0
      %v1151 = vadd.f32 %v859, %v1150
      %v1152 = vpop.f32.mrb[0].mxu0
      %v1153 = vpop.f32.mrb[0].mxu0
      %v1154 = vadd.f32 %v862, %v1153
      %v1155 = vpop.f32.mrb[0].mxu0
      %1156 = vmatprep.mubr.bf16.mxu0 0
      %1157 = vmatmul.mubr.bf16.gmra.mrb[0].mxu0 %v1019
      %v1158 = vpop.f32.mrb[0].mxu0
      %v1159 = vadd.f32 %v867, %v1158
      %v1160 = vpop.f32.mrb[0].mxu0
      %v1161 = vpop.f32.mrb[0].mxu0
      %v1162 = vadd.f32 %v870, %v1161
      %v1163 = vpop.f32.mrb[0].mxu0
      %1164 = vmatprep.mubr.bf16.mxu0 0
      %1165 = vmatmul.mubr.bf16.gmra.mrb[0].mxu0 %v1022
      %v1166 = vpop.f32.mrb[0].mxu0
      %v1167 = vadd.f32 %v875, %v1166
      %v1168 = vpop.f32.mrb[0].mxu0
      %v1169 = vpop.f32.mrb[0].mxu0
      %v1170 = vadd.f32 %v878, %v1169
      %v1171 = vpop.f32.mrb[0].mxu0
      %1172 = vmatprep.mubr.bf16.mxu0 0
      %1173 = vmatmul.mubr.bf16.gmra.mrb[0].mxu0 %v1025
      %v1174 = vpop.f32.mrb[0].mxu0
      %v1175 = vadd.f32 %v883, %v1174
      %v1176 = vpop.f32.mrb[0].mxu0
      %v1177 = vpop.f32.mrb[0].mxu0
      %v1178 = vadd.f32 %v886, %v1177
      %v1179 = vpop.f32.mrb[0].mxu0
      %1180 = vmatprep.mubr.bf16.mxu0 0
      %1181 = vmatmul.mubr.bf16.gmra.mrb[0].mxu0 %v1028
      %v1182 = vpop.f32.mrb[0].mxu0
      %v1183 = vadd.f32 %v891, %v1182
      %v1184 = vpop.f32.mrb[0].mxu0
      %v1185 = vpop.f32.mrb[0].mxu0
      %v1186 = vadd.f32 %v894, %v1185
      %v1187 = vpop.f32.mrb[0].mxu0
      %1188 = vmatprep.mubr.bf16.mxu0 0
      %1189 = vmatmul.mubr.bf16.gmra.mrb[0].mxu0 %v1031
      %v1190 = vpop.f32.mrb[0].mxu0
      %v1191 = vadd.f32 %v899, %v1190
      %v1192 = vpop.f32.mrb[0].mxu0
      %v1193 = vpop.f32.mrb[0].mxu0
      %v1194 = vadd.f32 %v902, %v1193
      %v1195 = vpop.f32.mrb[0].mxu0
      %1196 = vdwg.mxu0
      %vm1213 = vcmask 1042432
      %vm1214 = vcmask 1046532
      %vm1215 = vmor %vm1213, %vm1214
      %v1216 = vrot.slane %v199, 5
      %v1217 = vrot.slane %v1216, 4
      %v1218 = vrot.slane %v200, 5
      %v1219 = vsel %vm1215, %v1217, %v1218
      %v1220 = vrot.slane %v1218, 4
      %v1221 = vrot.slane %v201, 5
      %v1222 = vsel %vm1215, %v1220, %v1221
      %v1223 = vrot.slane %v202, 5
      %v1224 = vrot.slane %v1223, 4
      %v1225 = vrot.slane %v203, 5
      %v1226 = vsel %vm1215, %v1224, %v1225
      %v1227 = vrot.slane %v1225, 4
      %v1228 = vrot.slane %v204, 5
      %v1229 = vsel %vm1215, %v1227, %v1228
      %v1230 = vrot.slane %v205, 5
      %v1231 = vrot.slane %v1230, 4
      %v1232 = vrot.slane %v206, 5
      %v1233 = vsel %vm1215, %v1231, %v1232
      %v1234 = vrot.slane %v1232, 4
      %v1235 = vrot.slane %v207, 5
      %v1236 = vsel %vm1215, %v1234, %v1235
      %v1237 = vrot.slane %v208, 5
      %v1238 = vrot.slane %v1237, 4
      %v1239 = vrot.slane %v209, 5
      %v1240 = vsel %vm1215, %v1238, %v1239
      %v1241 = vrot.slane %v1239, 4
      %v1242 = vrot.slane %v210, 5
      %v1243 = vsel %vm1215, %v1241, %v1242
      %v1244 = vrot.slane %v211, 5
      %v1245 = vrot.slane %v1244, 4
      %v1246 = vrot.slane %v212, 5
      %v1247 = vsel %vm1215, %v1245, %v1246
      %v1248 = vrot.slane %v1246, 4
      %v1249 = vrot.slane %v213, 5
      %v1250 = vsel %vm1215, %v1248, %v1249
      %v1251 = vrot.slane %v214, 5
      %v1252 = vrot.slane %v1251, 4
      %v1253 = vrot.slane %v215, 5
      %v1254 = vsel %vm1215, %v1252, %v1253
      %v1255 = vrot.slane %v1253, 4
      %v1256 = vrot.slane %v216, 5
      %v1257 = vsel %vm1215, %v1255, %v1256
      %v1258 = vrot.slane %v217, 5
      %v1259 = vrot.slane %v1258, 4
      %v1260 = vrot.slane %v218, 5
      %v1261 = vsel %vm1215, %v1259, %v1260
      %v1262 = vrot.slane %v1260, 4
      %v1263 = vrot.slane %v219, 5
      %v1264 = vsel %vm1215, %v1262, %v1263
      %v1265 = vrot.slane %v220, 5
      %v1266 = vrot.slane %v1265, 4
      %v1267 = vrot.slane %v221, 5
      %v1268 = vsel %vm1215, %v1266, %v1267
      %v1269 = vrot.slane %v1267, 4
      %v1270 = vrot.slane %v222, 5
      %v1271 = vsel %vm1215, %v1269, %v1270
      %v1272 = vrot.slane %v223, 5
      %v1273 = vrot.slane %v1272, 4
      %v1274 = vrot.slane %v224, 5
      %v1275 = vsel %vm1215, %v1273, %v1274
      %v1276 = vrot.slane %v1274, 4
      %v1277 = vrot.slane %v225, 5
      %v1278 = vsel %vm1215, %v1276, %v1277
      %v1279 = vrot.slane %v226, 5
      %v1280 = vrot.slane %v1279, 4
      %v1281 = vrot.slane %v227, 5
      %v1282 = vsel %vm1215, %v1280, %v1281
      %v1283 = vrot.slane %v1281, 4
      %v1284 = vrot.slane %v228, 5
      %v1285 = vsel %vm1215, %v1283, %v1284
      %v1286 = vrot.slane %v229, 5
      %v1287 = vrot.slane %v1286, 4
      %v1288 = vrot.slane %v230, 5
      %v1289 = vsel %vm1215, %v1287, %v1288
      %v1290 = vrot.slane %v1288, 4
      %v1291 = vrot.slane %v231, 5
      %v1292 = vsel %vm1215, %v1290, %v1291
      %v1293 = vrot.slane %v232, 5
      %v1294 = vrot.slane %v1293, 4
      %v1295 = vrot.slane %v233, 5
      %v1296 = vsel %vm1215, %v1294, %v1295
      %v1297 = vrot.slane %v1295, 4
      %v1298 = vrot.slane %v234, 5
      %v1299 = vsel %vm1215, %v1297, %v1298
      %v1300 = vrot.slane %v235, 5
      %v1301 = vrot.slane %v1300, 4
      %v1302 = vrot.slane %v236, 5
      %v1303 = vsel %vm1215, %v1301, %v1302
      %v1304 = vrot.slane %v1302, 4
      %v1305 = vrot.slane %v237, 5
      %v1306 = vsel %vm1215, %v1304, %v1305
      %v1307 = vrot.slane %v238, 5
      %v1308 = vrot.slane %v1307, 4
      %v1309 = vrot.slane %v239, 5
      %v1310 = vsel %vm1215, %v1308, %v1309
      %v1311 = vrot.slane %v1309, 4
      %v1312 = vrot.slane %v240, 5
      %v1313 = vsel %vm1215, %v1311, %v1312
      %v1314 = vrot.slane %v241, 5
      %v1315 = vrot.slane %v1314, 4
      %v1316 = vrot.slane %v242, 5
      %v1317 = vsel %vm1215, %v1315, %v1316
      %v1318 = vrot.slane %v1316, 4
      %v1319 = vrot.slane %v243, 5
      %v1320 = vsel %vm1215, %v1318, %v1319
      %v1321 = vrot.slane %v244, 5
      %v1322 = vrot.slane %v1321, 4
      %v1323 = vrot.slane %v245, 5
      %v1324 = vsel %vm1215, %v1322, %v1323
      %v1325 = vrot.slane %v1323, 4
      %v1326 = vrot.slane %v246, 5
      %v1327 = vsel %vm1215, %v1325, %v1326
      %s1328 = scalar_lea.vmem %s1, 4
      %v1329 = vld [vmem:[%s1328] sm:$0x3]
      %v1330 = vunpack.c.l.b16 %v1219
      %v1331 = vunpack.c.l.b16 %v1222
      %v1332 = vunpack.c.l.b16 %v1226
      %v1333 = vunpack.c.l.b16 %v1229
      %v1334 = vunpack.c.l.b16 %v1233
      %v1335 = vunpack.c.l.b16 %v1236
      %v1336 = vunpack.c.l.b16 %v1240
      %v1337 = vunpack.c.l.b16 %v1243
      %v1338 = vunpack.c.l.b16 %v1247
      %v1339 = vunpack.c.l.b16 %v1250
      %v1340 = vunpack.c.l.b16 %v1254
      %v1341 = vunpack.c.l.b16 %v1257
      %v1342 = vunpack.c.l.b16 %v1261
      %v1343 = vunpack.c.l.b16 %v1264
      %v1344 = vunpack.c.l.b16 %v1268
      %v1345 = vunpack.c.l.b16 %v1271
      %v1346 = vunpack.c.l.b16 %v1275
      %v1347 = vunpack.c.l.b16 %v1278
      %v1348 = vunpack.c.l.b16 %v1282
      %v1349 = vunpack.c.l.b16 %v1285
      %v1350 = vunpack.c.l.b16 %v1289
      %v1351 = vunpack.c.l.b16 %v1292
      %v1352 = vunpack.c.l.b16 %v1296
      %v1353 = vunpack.c.l.b16 %v1299
      %v1354 = vunpack.c.l.b16 %v1303
      %v1355 = vunpack.c.l.b16 %v1306
      %v1356 = vunpack.c.l.b16 %v1310
      %v1357 = vunpack.c.l.b16 %v1313
      %v1358 = vunpack.c.l.b16 %v1317
      %v1359 = vunpack.c.l.b16 %v1320
      %v1360 = vunpack.c.l.b16 %v1324
      %v1361 = vunpack.c.l.b16 %v1327
      %v1362 = vpack.c.b16 %v1331, %v1330
      %v1363 = vpack.c.b16 %v1333, %v1332
      %v1364 = vpack.c.b16 %v1335, %v1334
      %v1365 = vpack.c.b16 %v1337, %v1336
      %v1366 = vpack.c.b16 %v1339, %v1338
      %v1367 = vpack.c.b16 %v1341, %v1340
      %v1368 = vpack.c.b16 %v1343, %v1342
      %v1369 = vpack.c.b16 %v1345, %v1344
      %v1370 = vpack.c.b16 %v1347, %v1346
      %v1371 = vpack.c.b16 %v1349, %v1348
      %v1372 = vpack.c.b16 %v1351, %v1350
      %v1373 = vpack.c.b16 %v1353, %v1352
      %v1374 = vpack.c.b16 %v1355, %v1354
      %v1375 = vpack.c.b16 %v1357, %v1356
      %v1376 = vpack.c.b16 %v1359, %v1358
      %v1377 = vpack.c.b16 %v1361, %v1360
      %v1379 = vsel %vm691, %v1362, 0
      %v1382 = vsel %vm691, %v1363, 0
      %v1385 = vsel %vm691, %v1364, 0
      %v1388 = vsel %vm691, %v1365, 0
      %v1391 = vsel %vm691, %v1366, 0
      %v1394 = vsel %vm691, %v1367, 0
      %v1397 = vsel %vm691, %v1368, 0
      %v1400 = vsel %vm691, %v1369, 0
      %v1403 = vsel %vm691, %v1370, 0
      %v1406 = vsel %vm691, %v1371, 0
      %v1409 = vsel %vm691, %v1372, 0
      %v1412 = vsel %vm691, %v1373, 0
      %v1415 = vsel %vm691, %v1374, 0
      %v1418 = vsel %vm691, %v1375, 0
      %v1421 = vsel %vm691, %v1376, 0
      %v1424 = vsel %vm691, %v1377, 0
      %v1427 = vsel %vm740, %v1329, 0
      %1429 = vmatprep.subr.bf16.mxu0 0
      %1430 = vmatpush1.bf16.msra.mxu0 %v1427
      %1431 = vmatprep.subr.bf16.mxu0 0
      %1432 = vmatpush1.bf16.msra.mxu0 0
      %1433 = vmatprep.subr.bf16.mxu0 0
      %1434 = vmatpush1.bf16.msra.mxu0 0
      %1435 = vmatprep.subr.bf16.mxu0 0
      %1436 = vmatpush1.bf16.msra.mxu0 0
      %1437 = vmatprep.subr.bf16.mxu0 0
      %1438 = vmatpush1.bf16.msra.mxu0 0
      %1439 = vmatprep.subr.bf16.mxu0 0
      %1440 = vmatpush1.bf16.msra.mxu0 0
      %1441 = vmatprep.subr.bf16.mxu0 0
      %1442 = vmatpush1.bf16.msra.mxu0 0
      %1443 = vmatprep.subr.bf16.mxu0 0
      %1444 = vmatpush1.bf16.msra.mxu0 0
      %1445 = vmatprep.subr.bf16.mxu0 0
      %1446 = vmatpush1.bf16.msra.mxu0 0
      %1447 = vmatprep.subr.bf16.mxu0 0
      %1448 = vmatpush1.bf16.msra.mxu0 0
      %1449 = vmatprep.subr.bf16.mxu0 0
      %1450 = vmatpush1.bf16.msra.mxu0 0
      %1451 = vmatprep.subr.bf16.mxu0 0
      %1452 = vmatpush1.bf16.msra.mxu0 0
      %1453 = vmatprep.subr.bf16.mxu0 0
      %1454 = vmatpush1.bf16.msra.mxu0 0
      %1455 = vmatprep.subr.bf16.mxu0 0
      %1456 = vmatpush1.bf16.msra.mxu0 0
      %1457 = vmatprep.subr.bf16.mxu0 0
      %1458 = vmatpush1.bf16.msra.mxu0 0
      %1459 = vmatprep.subr.bf16.mxu0 0
      %1460 = vmatpush1.bf16.msra.mxu0 0
      %1461 = vmatprep.mubr.bf16.mxu0 0
      %1462 = vmatmul.mubr.bf16.gmra.mrb[0].mxu0 %v1379
      %v1463 = vpop.f32.mrb[0].mxu0
      %v1464 = vadd.f32 0.0, %v1463
      %v1465 = vpop.f32.mrb[0].mxu0
      %v1466 = vpop.f32.mrb[0].mxu0
      %v1467 = vadd.f32 0.0, %v1466
      %v1468 = vpop.f32.mrb[0].mxu0
      %1469 = vmatprep.mubr.bf16.mxu0 0
      %1470 = vmatmul.mubr.bf16.gmra.mrb[0].mxu0 %v1382
      %v1471 = vpop.f32.mrb[0].mxu0
      %v1472 = vadd.f32 0.0, %v1471
      %v1473 = vpop.f32.mrb[0].mxu0
      %v1474 = vpop.f32.mrb[0].mxu0
      %v1475 = vadd.f32 0.0, %v1474
      %v1476 = vpop.f32.mrb[0].mxu0
      %1477 = vmatprep.mubr.bf16.mxu0 0
      %1478 = vmatmul.mubr.bf16.gmra.mrb[0].mxu0 %v1385
      %v1479 = vpop.f32.mrb[0].mxu0
      %v1480 = vadd.f32 0.0, %v1479
      %v1481 = vpop.f32.mrb[0].mxu0
      %v1482 = vpop.f32.mrb[0].mxu0
      %v1483 = vadd.f32 0.0, %v1482
      %v1484 = vpop.f32.mrb[0].mxu0
      %1485 = vmatprep.mubr.bf16.mxu0 0
      %1486 = vmatmul.mubr.bf16.gmra.mrb[0].mxu0 %v1388
      %v1487 = vpop.f32.mrb[0].mxu0
      %v1488 = vadd.f32 0.0, %v1487
      %v1489 = vpop.f32.mrb[0].mxu0
      %v1490 = vpop.f32.mrb[0].mxu0
      %v1491 = vadd.f32 0.0, %v1490
      %v1492 = vpop.f32.mrb[0].mxu0
      %1493 = vmatprep.mubr.bf16.mxu0 0
      %1494 = vmatmul.mubr.bf16.gmra.mrb[0].mxu0 %v1391
      %v1495 = vpop.f32.mrb[0].mxu0
      %v1496 = vadd.f32 0.0, %v1495
      %v1497 = vpop.f32.mrb[0].mxu0
      %v1498 = vpop.f32.mrb[0].mxu0
      %v1499 = vadd.f32 0.0, %v1498
      %v1500 = vpop.f32.mrb[0].mxu0
      %1501 = vmatprep.mubr.bf16.mxu0 0
      %1502 = vmatmul.mubr.bf16.gmra.mrb[0].mxu0 %v1394
      %v1503 = vpop.f32.mrb[0].mxu0
      %v1504 = vadd.f32 0.0, %v1503
      %v1505 = vpop.f32.mrb[0].mxu0
      %v1506 = vpop.f32.mrb[0].mxu0
      %v1507 = vadd.f32 0.0, %v1506
      %v1508 = vpop.f32.mrb[0].mxu0
      %1509 = vmatprep.mubr.bf16.mxu0 0
      %1510 = vmatmul.mubr.bf16.gmra.mrb[0].mxu0 %v1397
      %v1511 = vpop.f32.mrb[0].mxu0
      %v1512 = vadd.f32 0.0, %v1511
      %v1513 = vpop.f32.mrb[0].mxu0
      %v1514 = vpop.f32.mrb[0].mxu0
      %v1515 = vadd.f32 0.0, %v1514
      %v1516 = vpop.f32.mrb[0].mxu0
      %1517 = vmatprep.mubr.bf16.mxu0 0
      %1518 = vmatmul.mubr.bf16.gmra.mrb[0].mxu0 %v1400
      %v1519 = vpop.f32.mrb[0].mxu0
      %v1520 = vadd.f32 0.0, %v1519
      %v1521 = vpop.f32.mrb[0].mxu0
      %v1522 = vpop.f32.mrb[0].mxu0
      %v1523 = vadd.f32 0.0, %v1522
      %v1524 = vpop.f32.mrb[0].mxu0
      %1525 = vmatprep.mubr.bf16.mxu0 0
      %1526 = vmatmul.mubr.bf16.gmra.mrb[0].mxu0 %v1403
      %v1527 = vpop.f32.mrb[0].mxu0
      %v1528 = vadd.f32 0.0, %v1527
      %v1529 = vpop.f32.mrb[0].mxu0
      %v1530 = vpop.f32.mrb[0].mxu0
      %v1531 = vadd.f32 0.0, %v1530
      %v1532 = vpop.f32.mrb[0].mxu0
      %1533 = vmatprep.mubr.bf16.mxu0 0
      %1534 = vmatmul.mubr.bf16.gmra.mrb[0].mxu0 %v1406
      %v1535 = vpop.f32.mrb[0].mxu0
      %v1536 = vadd.f32 0.0, %v1535
      %v1537 = vpop.f32.mrb[0].mxu0
      %v1538 = vpop.f32.mrb[0].mxu0
      %v1539 = vadd.f32 0.0, %v1538
      %v1540 = vpop.f32.mrb[0].mxu0
      %1541 = vmatprep.mubr.bf16.mxu0 0
      %1542 = vmatmul.mubr.bf16.gmra.mrb[0].mxu0 %v1409
      %v1543 = vpop.f32.mrb[0].mxu0
      %v1544 = vadd.f32 0.0, %v1543
      %v1545 = vpop.f32.mrb[0].mxu0
      %v1546 = vpop.f32.mrb[0].mxu0
      %v1547 = vadd.f32 0.0, %v1546
      %v1548 = vpop.f32.mrb[0].mxu0
      %1549 = vmatprep.mubr.bf16.mxu0 0
      %1550 = vmatmul.mubr.bf16.gmra.mrb[0].mxu0 %v1412
      %v1551 = vpop.f32.mrb[0].mxu0
      %v1552 = vadd.f32 0.0, %v1551
      %v1553 = vpop.f32.mrb[0].mxu0
      %v1554 = vpop.f32.mrb[0].mxu0
      %v1555 = vadd.f32 0.0, %v1554
      %v1556 = vpop.f32.mrb[0].mxu0
      %1557 = vmatprep.mubr.bf16.mxu0 0
      %1558 = vmatmul.mubr.bf16.gmra.mrb[0].mxu0 %v1415
      %v1559 = vpop.f32.mrb[0].mxu0
      %v1560 = vadd.f32 0.0, %v1559
      %v1561 = vpop.f32.mrb[0].mxu0
      %v1562 = vpop.f32.mrb[0].mxu0
      %v1563 = vadd.f32 0.0, %v1562
      %v1564 = vpop.f32.mrb[0].mxu0
      %1565 = vmatprep.mubr.bf16.mxu0 0
      %1566 = vmatmul.mubr.bf16.gmra.mrb[0].mxu0 %v1418
      %v1567 = vpop.f32.mrb[0].mxu0
      %v1568 = vadd.f32 0.0, %v1567
      %v1569 = vpop.f32.mrb[0].mxu0
      %v1570 = vpop.f32.mrb[0].mxu0
      %v1571 = vadd.f32 0.0, %v1570
      %v1572 = vpop.f32.mrb[0].mxu0
      %1573 = vmatprep.mubr.bf16.mxu0 0
      %1574 = vmatmul.mubr.bf16.gmra.mrb[0].mxu0 %v1421
      %v1575 = vpop.f32.mrb[0].mxu0
      %v1576 = vadd.f32 0.0, %v1575
      %v1577 = vpop.f32.mrb[0].mxu0
      %v1578 = vpop.f32.mrb[0].mxu0
      %v1579 = vadd.f32 0.0, %v1578
      %v1580 = vpop.f32.mrb[0].mxu0
      %1581 = vmatprep.mubr.bf16.mxu0 0
      %1582 = vmatmul.mubr.bf16.gmra.mrb[0].mxu0 %v1424
      %v1583 = vpop.f32.mrb[0].mxu0
      %v1584 = vadd.f32 0.0, %v1583
      %v1585 = vpop.f32.mrb[0].mxu0
      %v1586 = vpop.f32.mrb[0].mxu0
      %v1587 = vadd.f32 0.0, %v1586
      %v1588 = vpop.f32.mrb[0].mxu0
      %1589 = vdwg.mxu0
      %v1590 = vadd.f32 %v1071, %v1464
      %v1591 = vadd.f32 %v1074, %v1467
      %v1592 = vadd.f32 %v1079, %v1472
      %v1593 = vadd.f32 %v1082, %v1475
      %v1594 = vadd.f32 %v1087, %v1480
      %v1595 = vadd.f32 %v1090, %v1483
      %v1596 = vadd.f32 %v1095, %v1488
      %v1597 = vadd.f32 %v1098, %v1491
      %v1598 = vadd.f32 %v1103, %v1496
      %v1599 = vadd.f32 %v1106, %v1499
      %v1600 = vadd.f32 %v1111, %v1504
      %v1601 = vadd.f32 %v1114, %v1507
      %v1602 = vadd.f32 %v1119, %v1512
      %v1603 = vadd.f32 %v1122, %v1515
      %v1604 = vadd.f32 %v1127, %v1520
      %v1605 = vadd.f32 %v1130, %v1523
      %v1606 = vadd.f32 %v1135, %v1528
      %v1607 = vadd.f32 %v1138, %v1531
      %v1608 = vadd.f32 %v1143, %v1536
      %v1609 = vadd.f32 %v1146, %v1539
      %v1610 = vadd.f32 %v1151, %v1544
      %v1611 = vadd.f32 %v1154, %v1547
      %v1612 = vadd.f32 %v1159, %v1552
      %v1613 = vadd.f32 %v1162, %v1555
      %v1614 = vadd.f32 %v1167, %v1560
      %v1615 = vadd.f32 %v1170, %v1563
      %v1616 = vadd.f32 %v1175, %v1568
      %v1617 = vadd.f32 %v1178, %v1571
      %v1618 = vadd.f32 %v1183, %v1576
      %v1619 = vadd.f32 %v1186, %v1579
      %v1620 = vadd.f32 %v1191, %v1584
      %v1621 = vadd.f32 %v1194, %v1587
      %s1622 = scalar_lea.vmem %s1, 6
      %v1623 = vld [vmem:[%s1622] sm:$0x3]
      %v1626 = vunpack.c.l.b16 %v247
      %v1627 = vunpack.c.l.b16 %v248
      %v1628 = vpack.c.b16 %v1627, %v1626
      %v1630 = vsel %vm691, %v1628, 0
      %v1633 = vsel %vm740, %v1623, 0
      %1635 = vmatprep.subr.bf16.mxu0 0
      %1636 = vmatpush1.bf16.msra.mxu0 %v1633
      %1637 = vmatprep.subr.bf16.mxu0 0
      %1638 = vmatpush1.bf16.msra.mxu0 0
      %1639 = vmatprep.subr.bf16.mxu0 0
      %1640 = vmatpush1.bf16.msra.mxu0 0
      %1641 = vmatprep.subr.bf16.mxu0 0
      %1642 = vmatpush1.bf16.msra.mxu0 0
      %1643 = vmatprep.subr.bf16.mxu0 0
      %1644 = vmatpush1.bf16.msra.mxu0 0
      %1645 = vmatprep.subr.bf16.mxu0 0
      %1646 = vmatpush1.bf16.msra.mxu0 0
      %1647 = vmatprep.subr.bf16.mxu0 0
      %1648 = vmatpush1.bf16.msra.mxu0 0
      %1649 = vmatprep.subr.bf16.mxu0 0
      %1650 = vmatpush1.bf16.msra.mxu0 0
      %1651 = vmatprep.subr.bf16.mxu0 0
      %1652 = vmatpush1.bf16.msra.mxu0 0
      %1653 = vmatprep.subr.bf16.mxu0 0
      %1654 = vmatpush1.bf16.msra.mxu0 0
      %1655 = vmatprep.subr.bf16.mxu0 0
      %1656 = vmatpush1.bf16.msra.mxu0 0
      %1657 = vmatprep.subr.bf16.mxu0 0
      %1658 = vmatpush1.bf16.msra.mxu0 0
      %1659 = vmatprep.subr.bf16.mxu0 0
      %1660 = vmatpush1.bf16.msra.mxu0 0
      %1661 = vmatprep.subr.bf16.mxu0 0
      %1662 = vmatpush1.bf16.msra.mxu0 0
      %1663 = vmatprep.subr.bf16.mxu0 0
      %1664 = vmatpush1.bf16.msra.mxu0 0
      %1665 = vmatprep.subr.bf16.mxu0 0
      %1666 = vmatpush1.bf16.msra.mxu0 0
      %1667 = vmatprep.mubr.bf16.mxu0 0
      %1668 = vmatmul.mubr.bf16.gmra.mrb[0].mxu0 %v989
      %v1669 = vpop.f32.mrb[0].mxu0
      %v1670 = vadd.f32 0.0, %v1669
      %v1671 = vpop.f32.mrb[0].mxu0
      %v1672 = vpop.f32.mrb[0].mxu0
      %v1673 = vadd.f32 0.0, %v1672
      %v1674 = vpop.f32.mrb[0].mxu0
      %1675 = vmatprep.mubr.bf16.mxu0 0
      %1676 = vmatmul.mubr.bf16.gmra.mrb[0].mxu0 %v992
      %v1677 = vpop.f32.mrb[0].mxu0
      %v1678 = vadd.f32 0.0, %v1677
      %v1679 = vpop.f32.mrb[0].mxu0
      %v1680 = vpop.f32.mrb[0].mxu0
      %v1681 = vadd.f32 0.0, %v1680
      %v1682 = vpop.f32.mrb[0].mxu0
      %1683 = vmatprep.mubr.bf16.mxu0 0
      %1684 = vmatmul.mubr.bf16.gmra.mrb[0].mxu0 %v995
      %v1685 = vpop.f32.mrb[0].mxu0
      %v1686 = vadd.f32 0.0, %v1685
      %v1687 = vpop.f32.mrb[0].mxu0
      %v1688 = vpop.f32.mrb[0].mxu0
      %v1689 = vadd.f32 0.0, %v1688
      %v1690 = vpop.f32.mrb[0].mxu0
      %1691 = vmatprep.mubr.bf16.mxu0 0
      %1692 = vmatmul.mubr.bf16.gmra.mrb[0].mxu0 %v998
      %v1693 = vpop.f32.mrb[0].mxu0
      %v1694 = vadd.f32 0.0, %v1693
      %v1695 = vpop.f32.mrb[0].mxu0
      %v1696 = vpop.f32.mrb[0].mxu0
      %v1697 = vadd.f32 0.0, %v1696
      %v1698 = vpop.f32.mrb[0].mxu0
      %1699 = vmatprep.mubr.bf16.mxu0 0
      %1700 = vmatmul.mubr.bf16.gmra.mrb[0].mxu0 %v1001
      %v1701 = vpop.f32.mrb[0].mxu0
      %v1702 = vadd.f32 0.0, %v1701
      %v1703 = vpop.f32.mrb[0].mxu0
      %v1704 = vpop.f32.mrb[0].mxu0
      %v1705 = vadd.f32 0.0, %v1704
      %v1706 = vpop.f32.mrb[0].mxu0
      %1707 = vmatprep.mubr.bf16.mxu0 0
      %1708 = vmatmul.mubr.bf16.gmra.mrb[0].mxu0 %v1004
      %v1709 = vpop.f32.mrb[0].mxu0
      %v1710 = vadd.f32 0.0, %v1709
      %v1711 = vpop.f32.mrb[0].mxu0
      %v1712 = vpop.f32.mrb[0].mxu0
      %v1713 = vadd.f32 0.0, %v1712
      %v1714 = vpop.f32.mrb[0].mxu0
      %1715 = vmatprep.mubr.bf16.mxu0 0
      %1716 = vmatmul.mubr.bf16.gmra.mrb[0].mxu0 %v1007
      %v1717 = vpop.f32.mrb[0].mxu0
      %v1718 = vadd.f32 0.0, %v1717
      %v1719 = vpop.f32.mrb[0].mxu0
      %v1720 = vpop.f32.mrb[0].mxu0
      %v1721 = vadd.f32 0.0, %v1720
      %v1722 = vpop.f32.mrb[0].mxu0
      %1723 = vmatprep.mubr.bf16.mxu0 0
      %1724 = vmatmul.mubr.bf16.gmra.mrb[0].mxu0 %v1010
      %v1725 = vpop.f32.mrb[0].mxu0
      %v1726 = vadd.f32 0.0, %v1725
      %v1727 = vpop.f32.mrb[0].mxu0
      %v1728 = vpop.f32.mrb[0].mxu0
      %v1729 = vadd.f32 0.0, %v1728
      %v1730 = vpop.f32.mrb[0].mxu0
      %1731 = vmatprep.mubr.bf16.mxu0 0
      %1732 = vmatmul.mubr.bf16.gmra.mrb[0].mxu0 %v1013
      %v1733 = vpop.f32.mrb[0].mxu0
      %v1734 = vadd.f32 0.0, %v1733
      %v1735 = vpop.f32.mrb[0].mxu0
      %v1736 = vpop.f32.mrb[0].mxu0
      %v1737 = vadd.f32 0.0, %v1736
      %v1738 = vpop.f32.mrb[0].mxu0
      %1739 = vmatprep.mubr.bf16.mxu0 0
      %1740 = vmatmul.mubr.bf16.gmra.mrb[0].mxu0 %v1016
      %v1741 = vpop.f32.mrb[0].mxu0
      %v1742 = vadd.f32 0.0, %v1741
      %v1743 = vpop.f32.mrb[0].mxu0
      %v1744 = vpop.f32.mrb[0].mxu0
      %v1745 = vadd.f32 0.0, %v1744
      %v1746 = vpop.f32.mrb[0].mxu0
      %1747 = vmatprep.mubr.bf16.mxu0 0
      %1748 = vmatmul.mubr.bf16.gmra.mrb[0].mxu0 %v1019
      %v1749 = vpop.f32.mrb[0].mxu0
      %v1750 = vadd.f32 0.0, %v1749
      %v1751 = vpop.f32.mrb[0].mxu0
      %v1752 = vpop.f32.mrb[0].mxu0
      %v1753 = vadd.f32 0.0, %v1752
      %v1754 = vpop.f32.mrb[0].mxu0
      %1755 = vmatprep.mubr.bf16.mxu0 0
      %1756 = vmatmul.mubr.bf16.gmra.mrb[0].mxu0 %v1022
      %v1757 = vpop.f32.mrb[0].mxu0
      %v1758 = vadd.f32 0.0, %v1757
      %v1759 = vpop.f32.mrb[0].mxu0
      %v1760 = vpop.f32.mrb[0].mxu0
      %v1761 = vadd.f32 0.0, %v1760
      %v1762 = vpop.f32.mrb[0].mxu0
      %1763 = vmatprep.mubr.bf16.mxu0 0
      %1764 = vmatmul.mubr.bf16.gmra.mrb[0].mxu0 %v1025
      %v1765 = vpop.f32.mrb[0].mxu0
      %v1766 = vadd.f32 0.0, %v1765
      %v1767 = vpop.f32.mrb[0].mxu0
      %v1768 = vpop.f32.mrb[0].mxu0
      %v1769 = vadd.f32 0.0, %v1768
      %v1770 = vpop.f32.mrb[0].mxu0
      %1771 = vmatprep.mubr.bf16.mxu0 0
      %1772 = vmatmul.mubr.bf16.gmra.mrb[0].mxu0 %v1028
      %v1773 = vpop.f32.mrb[0].mxu0
      %v1774 = vadd.f32 0.0, %v1773
      %v1775 = vpop.f32.mrb[0].mxu0
      %v1776 = vpop.f32.mrb[0].mxu0
      %v1777 = vadd.f32 0.0, %v1776
      %v1778 = vpop.f32.mrb[0].mxu0
      %1779 = vmatprep.mubr.bf16.mxu0 0
      %1780 = vmatmul.mubr.bf16.gmra.mrb[0].mxu0 %v1031
      %v1781 = vpop.f32.mrb[0].mxu0
      %v1782 = vadd.f32 0.0, %v1781
      %v1783 = vpop.f32.mrb[0].mxu0
      %v1784 = vpop.f32.mrb[0].mxu0
      %v1785 = vadd.f32 0.0, %v1784
      %v1786 = vpop.f32.mrb[0].mxu0
      %1787 = vmatprep.mubr.bf16.mxu0 0
      %1788 = vmatmul.mubr.bf16.gmra.mrb[0].mxu0 %v1630
      %v1789 = vpop.f32.mrb[0].mxu0
      %v1790 = vadd.f32 0.0, %v1789
      %v1791 = vpop.f32.mrb[0].mxu0
      %v1792 = vpop.f32.mrb[0].mxu0
      %v1793 = vadd.f32 0.0, %v1792
      %v1794 = vpop.f32.mrb[0].mxu0
      %1795 = vdwg.mxu0
      %v1796 = vadd.f32 %v1590, %v1670
      %v1797 = vadd.f32 %v1591, %v1673
      %v1798 = vadd.f32 %v1592, %v1678
      %v1799 = vadd.f32 %v1593, %v1681
      %v1800 = vadd.f32 %v1594, %v1686
      %v1801 = vadd.f32 %v1595, %v1689
      %v1802 = vadd.f32 %v1596, %v1694
      %v1803 = vadd.f32 %v1597, %v1697
      %v1804 = vadd.f32 %v1598, %v1702
      %v1805 = vadd.f32 %v1599, %v1705
      %v1806 = vadd.f32 %v1600, %v1710
      %v1807 = vadd.f32 %v1601, %v1713
      %v1808 = vadd.f32 %v1602, %v1718
      %v1809 = vadd.f32 %v1603, %v1721
      %v1810 = vadd.f32 %v1604, %v1726
      %v1811 = vadd.f32 %v1605, %v1729
      %v1812 = vadd.f32 %v1606, %v1734
      %v1813 = vadd.f32 %v1607, %v1737
      %v1814 = vadd.f32 %v1608, %v1742
      %v1815 = vadd.f32 %v1609, %v1745
      %v1816 = vadd.f32 %v1610, %v1750
      %v1817 = vadd.f32 %v1611, %v1753
      %v1818 = vadd.f32 %v1612, %v1758
      %v1819 = vadd.f32 %v1613, %v1761
      %v1820 = vadd.f32 %v1614, %v1766
      %v1821 = vadd.f32 %v1615, %v1769
      %v1822 = vadd.f32 %v1616, %v1774
      %v1823 = vadd.f32 %v1617, %v1777
      %v1824 = vadd.f32 %v1618, %v1782
      %v1825 = vadd.f32 %v1619, %v1785
      %v1826 = vadd.f32 %v1620, %v1790
      %v1827 = vadd.f32 %v1621, %v1793
      %v1829 = vshrl.u32 %v247, 16
      %v1831 = vrot.slane %v1829, 4
      %v1832 = vshll.u32 %v247, 16
      %v1834 = vrot.slane %v1832, 5
      %v1835 = vor.u32 %v1831, %v1834
      %v1836 = vrot.slane %v1835, 4
      %v1838 = vshll.u32 %v248, 16
      %v1840 = vrot.slane %v1838, 5
      %v1841 = vsel %vm256, %v1836, %v1840
      %v1842 = vshrl.u32 %v248, 16
      %v1844 = vrot.slane %v1842, 4
      %v1845 = vor.u32 %v1844, %v1840
      %v1846 = vrot.slane %v1845, 4
      %v1848 = vshll.u32 %v249, 16
      %v1850 = vrot.slane %v1848, 5
      %v1851 = vsel %vm256, %v1846, %v1850
      %s1852 = scalar_lea.vmem %s1, 8
      %v1853 = vld [vmem:[%s1852] sm:$0x3]
      %v1854 = vunpack.c.l.b16 %v1841
      %v1855 = vunpack.c.l.b16 %v1851
      %v1856 = vpack.c.b16 %v1855, %v1854
      %v1858 = vsel %vm691, %v1856, 0
      %v1861 = vsel %vm740, %v1853, 0
      %1863 = vmatprep.subr.bf16.mxu0 0
      %1864 = vmatpush1.bf16.msra.mxu0 %v1861
      %1865 = vmatprep.subr.bf16.mxu0 0
      %1866 = vmatpush1.bf16.msra.mxu0 0
      %1867 = vmatprep.subr.bf16.mxu0 0
      %1868 = vmatpush1.bf16.msra.mxu0 0
      %1869 = vmatprep.subr.bf16.mxu0 0
      %1870 = vmatpush1.bf16.msra.mxu0 0
      %1871 = vmatprep.subr.bf16.mxu0 0
      %1872 = vmatpush1.bf16.msra.mxu0 0
      %1873 = vmatprep.subr.bf16.mxu0 0
      %1874 = vmatpush1.bf16.msra.mxu0 0
      %1875 = vmatprep.subr.bf16.mxu0 0
      %1876 = vmatpush1.bf16.msra.mxu0 0
      %1877 = vmatprep.subr.bf16.mxu0 0
      %1878 = vmatpush1.bf16.msra.mxu0 0
      %1879 = vmatprep.subr.bf16.mxu0 0
      %1880 = vmatpush1.bf16.msra.mxu0 0
      %1881 = vmatprep.subr.bf16.mxu0 0
      %1882 = vmatpush1.bf16.msra.mxu0 0
      %1883 = vmatprep.subr.bf16.mxu0 0
      %1884 = vmatpush1.bf16.msra.mxu0 0
      %1885 = vmatprep.subr.bf16.mxu0 0
      %1886 = vmatpush1.bf16.msra.mxu0 0
      %1887 = vmatprep.subr.bf16.mxu0 0
      %1888 = vmatpush1.bf16.msra.mxu0 0
      %1889 = vmatprep.subr.bf16.mxu0 0
      %1890 = vmatpush1.bf16.msra.mxu0 0
      %1891 = vmatprep.subr.bf16.mxu0 0
      %1892 = vmatpush1.bf16.msra.mxu0 0
      %1893 = vmatprep.subr.bf16.mxu0 0
      %1894 = vmatpush1.bf16.msra.mxu0 0
      %1895 = vmatprep.mubr.bf16.mxu0 0
      %1896 = vmatmul.mubr.bf16.gmra.mrb[0].mxu0 %v696
      %v1897 = vpop.f32.mrb[0].mxu0
      %v1898 = vadd.f32 0.0, %v1897
      %v1899 = vpop.f32.mrb[0].mxu0
      %v1900 = vpop.f32.mrb[0].mxu0
      %v1901 = vadd.f32 0.0, %v1900
      %v1902 = vpop.f32.mrb[0].mxu0
      %1903 = vmatprep.mubr.bf16.mxu0 0
      %1904 = vmatmul.mubr.bf16.gmra.mrb[0].mxu0 %v699
      %v1905 = vpop.f32.mrb[0].mxu0
      %v1906 = vadd.f32 0.0, %v1905
      %v1907 = vpop.f32.mrb[0].mxu0
      %v1908 = vpop.f32.mrb[0].mxu0
      %v1909 = vadd.f32 0.0, %v1908
      %v1910 = vpop.f32.mrb[0].mxu0
      %1911 = vmatprep.mubr.bf16.mxu0 0
      %1912 = vmatmul.mubr.bf16.gmra.mrb[0].mxu0 %v702
      %v1913 = vpop.f32.mrb[0].mxu0
      %v1914 = vadd.f32 0.0, %v1913
      %v1915 = vpop.f32.mrb[0].mxu0
      %v1916 = vpop.f32.mrb[0].mxu0
      %v1917 = vadd.f32 0.0, %v1916
      %v1918 = vpop.f32.mrb[0].mxu0
      %1919 = vmatprep.mubr.bf16.mxu0 0
      %1920 = vmatmul.mubr.bf16.gmra.mrb[0].mxu0 %v705
      %v1921 = vpop.f32.mrb[0].mxu0
      %v1922 = vadd.f32 0.0, %v1921
      %v1923 = vpop.f32.mrb[0].mxu0
      %v1924 = vpop.f32.mrb[0].mxu0
      %v1925 = vadd.f32 0.0, %v1924
      %v1926 = vpop.f32.mrb[0].mxu0
      %1927 = vmatprep.mubr.bf16.mxu0 0
      %1928 = vmatmul.mubr.bf16.gmra.mrb[0].mxu0 %v708
      %v1929 = vpop.f32.mrb[0].mxu0
      %v1930 = vadd.f32 0.0, %v1929
      %v1931 = vpop.f32.mrb[0].mxu0
      %v1932 = vpop.f32.mrb[0].mxu0
      %v1933 = vadd.f32 0.0, %v1932
      %v1934 = vpop.f32.mrb[0].mxu0
      %1935 = vmatprep.mubr.bf16.mxu0 0
      %1936 = vmatmul.mubr.bf16.gmra.mrb[0].mxu0 %v711
      %v1937 = vpop.f32.mrb[0].mxu0
      %v1938 = vadd.f32 0.0, %v1937
      %v1939 = vpop.f32.mrb[0].mxu0
      %v1940 = vpop.f32.mrb[0].mxu0
      %v1941 = vadd.f32 0.0, %v1940
      %v1942 = vpop.f32.mrb[0].mxu0
      %1943 = vmatprep.mubr.bf16.mxu0 0
      %1944 = vmatmul.mubr.bf16.gmra.mrb[0].mxu0 %v714
      %v1945 = vpop.f32.mrb[0].mxu0
      %v1946 = vadd.f32 0.0, %v1945
      %v1947 = vpop.f32.mrb[0].mxu0
      %v1948 = vpop.f32.mrb[0].mxu0
      %v1949 = vadd.f32 0.0, %v1948
      %v1950 = vpop.f32.mrb[0].mxu0
      %1951 = vmatprep.mubr.bf16.mxu0 0
      %1952 = vmatmul.mubr.bf16.gmra.mrb[0].mxu0 %v717
      %v1953 = vpop.f32.mrb[0].mxu0
      %v1954 = vadd.f32 0.0, %v1953
      %v1955 = vpop.f32.mrb[0].mxu0
      %v1956 = vpop.f32.mrb[0].mxu0
      %v1957 = vadd.f32 0.0, %v1956
      %v1958 = vpop.f32.mrb[0].mxu0
      %1959 = vmatprep.mubr.bf16.mxu0 0
      %1960 = vmatmul.mubr.bf16.gmra.mrb[0].mxu0 %v720
      %v1961 = vpop.f32.mrb[0].mxu0
      %v1962 = vadd.f32 0.0, %v1961
      %v1963 = vpop.f32.mrb[0].mxu0
      %v1964 = vpop.f32.mrb[0].mxu0
      %v1965 = vadd.f32 0.0, %v1964
      %v1966 = vpop.f32.mrb[0].mxu0
      %1967 = vmatprep.mubr.bf16.mxu0 0
      %1968 = vmatmul.mubr.bf16.gmra.mrb[0].mxu0 %v723
      %v1969 = vpop.f32.mrb[0].mxu0
      %v1970 = vadd.f32 0.0, %v1969
      %v1971 = vpop.f32.mrb[0].mxu0
      %v1972 = vpop.f32.mrb[0].mxu0
      %v1973 = vadd.f32 0.0, %v1972
      %v1974 = vpop.f32.mrb[0].mxu0
      %1975 = vmatprep.mubr.bf16.mxu0 0
      %1976 = vmatmul.mubr.bf16.gmra.mrb[0].mxu0 %v726
      %v1977 = vpop.f32.mrb[0].mxu0
      %v1978 = vadd.f32 0.0, %v1977
      %v1979 = vpop.f32.mrb[0].mxu0
      %v1980 = vpop.f32.mrb[0].mxu0
      %v1981 = vadd.f32 0.0, %v1980
      %v1982 = vpop.f32.mrb[0].mxu0
      %1983 = vmatprep.mubr.bf16.mxu0 0
      %1984 = vmatmul.mubr.bf16.gmra.mrb[0].mxu0 %v729
      %v1985 = vpop.f32.mrb[0].mxu0
      %v1986 = vadd.f32 0.0, %v1985
      %v1987 = vpop.f32.mrb[0].mxu0
      %v1988 = vpop.f32.mrb[0].mxu0
      %v1989 = vadd.f32 0.0, %v1988
      %v1990 = vpop.f32.mrb[0].mxu0
      %1991 = vmatprep.mubr.bf16.mxu0 0
      %1992 = vmatmul.mubr.bf16.gmra.mrb[0].mxu0 %v732
      %v1993 = vpop.f32.mrb[0].mxu0
      %v1994 = vadd.f32 0.0, %v1993
      %v1995 = vpop.f32.mrb[0].mxu0
      %v1996 = vpop.f32.mrb[0].mxu0
      %v1997 = vadd.f32 0.0, %v1996
      %v1998 = vpop.f32.mrb[0].mxu0
      %1999 = vmatprep.mubr.bf16.mxu0 0
      %2000 = vmatmul.mubr.bf16.gmra.mrb[0].mxu0 %v735
      %v2001 = vpop.f32.mrb[0].mxu0
      %v2002 = vadd.f32 0.0, %v2001
      %v2003 = vpop.f32.mrb[0].mxu0
      %v2004 = vpop.f32.mrb[0].mxu0
      %v2005 = vadd.f32 0.0, %v2004
      %v2006 = vpop.f32.mrb[0].mxu0
      %2007 = vmatprep.mubr.bf16.mxu0 0
      %2008 = vmatmul.mubr.bf16.gmra.mrb[0].mxu0 %v738
      %v2009 = vpop.f32.mrb[0].mxu0
      %v2010 = vadd.f32 0.0, %v2009
      %v2011 = vpop.f32.mrb[0].mxu0
      %v2012 = vpop.f32.mrb[0].mxu0
      %v2013 = vadd.f32 0.0, %v2012
      %v2014 = vpop.f32.mrb[0].mxu0
      %2015 = vmatprep.mubr.bf16.mxu0 0
      %2016 = vmatmul.mubr.bf16.gmra.mrb[0].mxu0 %v1858
      %v2017 = vpop.f32.mrb[0].mxu0
      %v2018 = vadd.f32 0.0, %v2017
      %v2019 = vpop.f32.mrb[0].mxu0
      %v2020 = vpop.f32.mrb[0].mxu0
      %v2021 = vadd.f32 0.0, %v2020
      %v2022 = vpop.f32.mrb[0].mxu0
      %2023 = vdwg.mxu0
      %v2024 = vadd.f32 %v1796, %v1898
      %v2025 = vadd.f32 %v1797, %v1901
      %v2026 = vadd.f32 %v1798, %v1906
      %v2027 = vadd.f32 %v1799, %v1909
      %v2028 = vadd.f32 %v1800, %v1914
      %v2029 = vadd.f32 %v1801, %v1917
      %v2030 = vadd.f32 %v1802, %v1922
      %v2031 = vadd.f32 %v1803, %v1925
      %v2032 = vadd.f32 %v1804, %v1930
      %v2033 = vadd.f32 %v1805, %v1933
      %v2034 = vadd.f32 %v1806, %v1938
      %v2035 = vadd.f32 %v1807, %v1941
      %v2036 = vadd.f32 %v1808, %v1946
      %v2037 = vadd.f32 %v1809, %v1949
      %v2038 = vadd.f32 %v1810, %v1954
      %v2039 = vadd.f32 %v1811, %v1957
      %v2040 = vadd.f32 %v1812, %v1962
      %v2041 = vadd.f32 %v1813, %v1965
      %v2042 = vadd.f32 %v1814, %v1970
      %v2043 = vadd.f32 %v1815, %v1973
      %v2044 = vadd.f32 %v1816, %v1978
      %v2045 = vadd.f32 %v1817, %v1981
      %v2046 = vadd.f32 %v1818, %v1986
      %v2047 = vadd.f32 %v1819, %v1989
      %v2048 = vadd.f32 %v1820, %v1994
      %v2049 = vadd.f32 %v1821, %v1997
      %v2050 = vadd.f32 %v1822, %v2002
      %v2051 = vadd.f32 %v1823, %v2005
      %v2052 = vadd.f32 %v1824, %v2010
      %v2053 = vadd.f32 %v1825, %v2013
      %v2054 = vadd.f32 %v1826, %v2018
      %v2055 = vadd.f32 %v1827, %v2021
      %v2057 = vrot.slane %v247, 5
      %v2058 = vrot.slane %v2057, 4
      %v2059 = vrot.slane %v248, 5
      %v2060 = vsel %vm1215, %v2058, %v2059
      %v2061 = vrot.slane %v2059, 4
      %v2062 = vrot.slane %v249, 5
      %v2063 = vsel %vm1215, %v2061, %v2062
      %s2064 = scalar_lea.vmem %s1, 10
      %v2065 = vld [vmem:[%s2064] sm:$0x3]
      %v2066 = vunpack.c.l.b16 %v2060
      %v2067 = vunpack.c.l.b16 %v2063
      %v2068 = vpack.c.b16 %v2067, %v2066
      %v2070 = vsel %vm691, %v2068, 0
      %v2073 = vsel %vm740, %v2065, 0
      %2075 = vmatprep.subr.bf16.mxu0 0
      %2076 = vmatpush1.bf16.msra.mxu0 %v2073
      %2077 = vmatprep.subr.bf16.mxu0 0
      %2078 = vmatpush1.bf16.msra.mxu0 0
      %2079 = vmatprep.subr.bf16.mxu0 0
      %2080 = vmatpush1.bf16.msra.mxu0 0
      %2081 = vmatprep.subr.bf16.mxu0 0
      %2082 = vmatpush1.bf16.msra.mxu0 0
      %2083 = vmatprep.subr.bf16.mxu0 0
      %2084 = vmatpush1.bf16.msra.mxu0 0
      %2085 = vmatprep.subr.bf16.mxu0 0
      %2086 = vmatpush1.bf16.msra.mxu0 0
      %2087 = vmatprep.subr.bf16.mxu0 0
      %2088 = vmatpush1.bf16.msra.mxu0 0
      %2089 = vmatprep.subr.bf16.mxu0 0
      %2090 = vmatpush1.bf16.msra.mxu0 0
      %2091 = vmatprep.subr.bf16.mxu0 0
      %2092 = vmatpush1.bf16.msra.mxu0 0
      %2093 = vmatprep.subr.bf16.mxu0 0
      %2094 = vmatpush1.bf16.msra.mxu0 0
      %2095 = vmatprep.subr.bf16.mxu0 0
      %2096 = vmatpush1.bf16.msra.mxu0 0
      %2097 = vmatprep.subr.bf16.mxu0 0
      %2098 = vmatpush1.bf16.msra.mxu0 0
      %2099 = vmatprep.subr.bf16.mxu0 0
      %2100 = vmatpush1.bf16.msra.mxu0 0
      %2101 = vmatprep.subr.bf16.mxu0 0
      %2102 = vmatpush1.bf16.msra.mxu0 0
      %2103 = vmatprep.subr.bf16.mxu0 0
      %2104 = vmatpush1.bf16.msra.mxu0 0
      %2105 = vmatprep.subr.bf16.mxu0 0
      %2106 = vmatpush1.bf16.msra.mxu0 0
      %2107 = vmatprep.mubr.bf16.mxu0 0
      %2108 = vmatmul.mubr.bf16.gmra.mrb[0].mxu0 %v1382
      %v2109 = vpop.f32.mrb[0].mxu0
      %v2110 = vadd.f32 0.0, %v2109
      %v2111 = vpop.f32.mrb[0].mxu0
      %v2112 = vpop.f32.mrb[0].mxu0
      %v2113 = vadd.f32 0.0, %v2112
      %v2114 = vpop.f32.mrb[0].mxu0
      %2115 = vmatprep.mubr.bf16.mxu0 0
      %2116 = vmatmul.mubr.bf16.gmra.mrb[0].mxu0 %v1385
      %v2117 = vpop.f32.mrb[0].mxu0
      %v2118 = vadd.f32 0.0, %v2117
      %v2119 = vpop.f32.mrb[0].mxu0
      %v2120 = vpop.f32.mrb[0].mxu0
      %v2121 = vadd.f32 0.0, %v2120
      %v2122 = vpop.f32.mrb[0].mxu0
      %2123 = vmatprep.mubr.bf16.mxu0 0
      %2124 = vmatmul.mubr.bf16.gmra.mrb[0].mxu0 %v1388
      %v2125 = vpop.f32.mrb[0].mxu0
      %v2126 = vadd.f32 0.0, %v2125
      %v2127 = vpop.f32.mrb[0].mxu0
      %v2128 = vpop.f32.mrb[0].mxu0
      %v2129 = vadd.f32 0.0, %v2128
      %v2130 = vpop.f32.mrb[0].mxu0
      %2131 = vmatprep.mubr.bf16.mxu0 0
      %2132 = vmatmul.mubr.bf16.gmra.mrb[0].mxu0 %v1391
      %v2133 = vpop.f32.mrb[0].mxu0
      %v2134 = vadd.f32 0.0, %v2133
      %v2135 = vpop.f32.mrb[0].mxu0
      %v2136 = vpop.f32.mrb[0].mxu0
      %v2137 = vadd.f32 0.0, %v2136
      %v2138 = vpop.f32.mrb[0].mxu0
      %2139 = vmatprep.mubr.bf16.mxu0 0
      %2140 = vmatmul.mubr.bf16.gmra.mrb[0].mxu0 %v1394
      %v2141 = vpop.f32.mrb[0].mxu0
      %v2142 = vadd.f32 0.0, %v2141
      %v2143 = vpop.f32.mrb[0].mxu0
      %v2144 = vpop.f32.mrb[0].mxu0
      %v2145 = vadd.f32 0.0, %v2144
      %v2146 = vpop.f32.mrb[0].mxu0
      %2147 = vmatprep.mubr.bf16.mxu0 0
      %2148 = vmatmul.mubr.bf16.gmra.mrb[0].mxu0 %v1397
      %v2149 = vpop.f32.mrb[0].mxu0
      %v2150 = vadd.f32 0.0, %v2149
      %v2151 = vpop.f32.mrb[0].mxu0
      %v2152 = vpop.f32.mrb[0].mxu0
      %v2153 = vadd.f32 0.0, %v2152
      %v2154 = vpop.f32.mrb[0].mxu0
      %2155 = vmatprep.mubr.bf16.mxu0 0
      %2156 = vmatmul.mubr.bf16.gmra.mrb[0].mxu0 %v1400
      %v2157 = vpop.f32.mrb[0].mxu0
      %v2158 = vadd.f32 0.0, %v2157
      %v2159 = vpop.f32.mrb[0].mxu0
      %v2160 = vpop.f32.mrb[0].mxu0
      %v2161 = vadd.f32 0.0, %v2160
      %v2162 = vpop.f32.mrb[0].mxu0
      %2163 = vmatprep.mubr.bf16.mxu0 0
      %2164 = vmatmul.mubr.bf16.gmra.mrb[0].mxu0 %v1403
      %v2165 = vpop.f32.mrb[0].mxu0
      %v2166 = vadd.f32 0.0, %v2165
      %v2167 = vpop.f32.mrb[0].mxu0
      %v2168 = vpop.f32.mrb[0].mxu0
      %v2169 = vadd.f32 0.0, %v2168
      %v2170 = vpop.f32.mrb[0].mxu0
      %2171 = vmatprep.mubr.bf16.mxu0 0
      %2172 = vmatmul.mubr.bf16.gmra.mrb[0].mxu0 %v1406
      %v2173 = vpop.f32.mrb[0].mxu0
      %v2174 = vadd.f32 0.0, %v2173
      %v2175 = vpop.f32.mrb[0].mxu0
      %v2176 = vpop.f32.mrb[0].mxu0
      %v2177 = vadd.f32 0.0, %v2176
      %v2178 = vpop.f32.mrb[0].mxu0
      %2179 = vmatprep.mubr.bf16.mxu0 0
      %2180 = vmatmul.mubr.bf16.gmra.mrb[0].mxu0 %v1409
      %v2181 = vpop.f32.mrb[0].mxu0
      %v2182 = vadd.f32 0.0, %v2181
      %v2183 = vpop.f32.mrb[0].mxu0
      %v2184 = vpop.f32.mrb[0].mxu0
      %v2185 = vadd.f32 0.0, %v2184
      %v2186 = vpop.f32.mrb[0].mxu0
      %2187 = vmatprep.mubr.bf16.mxu0 0
      %2188 = vmatmul.mubr.bf16.gmra.mrb[0].mxu0 %v1412
      %v2189 = vpop.f32.mrb[0].mxu0
      %v2190 = vadd.f32 0.0, %v2189
      %v2191 = vpop.f32.mrb[0].mxu0
      %v2192 = vpop.f32.mrb[0].mxu0
      %v2193 = vadd.f32 0.0, %v2192
      %v2194 = vpop.f32.mrb[0].mxu0
      %2195 = vmatprep.mubr.bf16.mxu0 0
      %2196 = vmatmul.mubr.bf16.gmra.mrb[0].mxu0 %v1415
      %v2197 = vpop.f32.mrb[0].mxu0
      %v2198 = vadd.f32 0.0, %v2197
      %v2199 = vpop.f32.mrb[0].mxu0
      %v2200 = vpop.f32.mrb[0].mxu0
      %v2201 = vadd.f32 0.0, %v2200
      %v2202 = vpop.f32.mrb[0].mxu0
      %2203 = vmatprep.mubr.bf16.mxu0 0
      %2204 = vmatmul.mubr.bf16.gmra.mrb[0].mxu0 %v1418
      %v2205 = vpop.f32.mrb[0].mxu0
      %v2206 = vadd.f32 0.0, %v2205
      %v2207 = vpop.f32.mrb[0].mxu0
      %v2208 = vpop.f32.mrb[0].mxu0
      %v2209 = vadd.f32 0.0, %v2208
      %v2210 = vpop.f32.mrb[0].mxu0
      %2211 = vmatprep.mubr.bf16.mxu0 0
      %2212 = vmatmul.mubr.bf16.gmra.mrb[0].mxu0 %v1421
      %v2213 = vpop.f32.mrb[0].mxu0
      %v2214 = vadd.f32 0.0, %v2213
      %v2215 = vpop.f32.mrb[0].mxu0
      %v2216 = vpop.f32.mrb[0].mxu0
      %v2217 = vadd.f32 0.0, %v2216
      %v2218 = vpop.f32.mrb[0].mxu0
      %2219 = vmatprep.mubr.bf16.mxu0 0
      %2220 = vmatmul.mubr.bf16.gmra.mrb[0].mxu0 %v1424
      %v2221 = vpop.f32.mrb[0].mxu0
      %v2222 = vadd.f32 0.0, %v2221
      %v2223 = vpop.f32.mrb[0].mxu0
      %v2224 = vpop.f32.mrb[0].mxu0
      %v2225 = vadd.f32 0.0, %v2224
      %v2226 = vpop.f32.mrb[0].mxu0
      %2227 = vmatprep.mubr.bf16.mxu0 0
      %2228 = vmatmul.mubr.bf16.gmra.mrb[0].mxu0 %v2070
      %v2229 = vpop.f32.mrb[0].mxu0
      %v2230 = vadd.f32 0.0, %v2229
      %v2231 = vpop.f32.mrb[0].mxu0
      %v2232 = vpop.f32.mrb[0].mxu0
      %v2233 = vadd.f32 0.0, %v2232
      %v2234 = vpop.f32.mrb[0].mxu0
      %2235 = vdwg.mxu0
      %v2236 = vadd.f32 %v2024, %v2110
      %v2237 = vadd.f32 %v2025, %v2113
      %v2238 = vadd.f32 %v2026, %v2118
      %v2239 = vadd.f32 %v2027, %v2121
      %v2240 = vadd.f32 %v2028, %v2126
      %v2241 = vadd.f32 %v2029, %v2129
      %v2242 = vadd.f32 %v2030, %v2134
      %v2243 = vadd.f32 %v2031, %v2137
      %v2244 = vadd.f32 %v2032, %v2142
      %v2245 = vadd.f32 %v2033, %v2145
      %v2246 = vadd.f32 %v2034, %v2150
      %v2247 = vadd.f32 %v2035, %v2153
      %v2248 = vadd.f32 %v2036, %v2158
      %v2249 = vadd.f32 %v2037, %v2161
      %v2250 = vadd.f32 %v2038, %v2166
      %v2251 = vadd.f32 %v2039, %v2169
      %v2252 = vadd.f32 %v2040, %v2174
      %v2253 = vadd.f32 %v2041, %v2177
      %v2254 = vadd.f32 %v2042, %v2182
      %v2255 = vadd.f32 %v2043, %v2185
      %v2256 = vadd.f32 %v2044, %v2190
      %v2257 = vadd.f32 %v2045, %v2193
      %v2258 = vadd.f32 %v2046, %v2198
      %v2259 = vadd.f32 %v2047, %v2201
      %v2260 = vadd.f32 %v2048, %v2206
      %v2261 = vadd.f32 %v2049, %v2209
      %v2262 = vadd.f32 %v2050, %v2214
      %v2263 = vadd.f32 %v2051, %v2217
      %v2264 = vadd.f32 %v2052, %v2222
      %v2265 = vadd.f32 %v2053, %v2225
      %v2266 = vadd.f32 %v2054, %v2230
      %v2267 = vadd.f32 %v2055, %v2233
      %s2268 = scalar_lea.vmem %s1, 12
      %v2269 = vld [vmem:[%s2268] sm:$0x3]
      %v2272 = vunpack.c.l.b16 %v250
      %v2273 = vunpack.c.l.b16 %v251
      %v2274 = vpack.c.b16 %v2273, %v2272
      %v2276 = vsel %vm691, %v2274, 0
      %v2279 = vsel %vm740, %v2269, 0
      %2281 = vmatprep.subr.bf16.mxu0 0
      %2282 = vmatpush1.bf16.msra.mxu0 %v2279
      %2283 = vmatprep.subr.bf16.mxu0 0
      %2284 = vmatpush1.bf16.msra.mxu0 0
      %2285 = vmatprep.subr.bf16.mxu0 0
      %2286 = vmatpush1.bf16.msra.mxu0 0
      %2287 = vmatprep.subr.bf16.mxu0 0
      %2288 = vmatpush1.bf16.msra.mxu0 0
      %2289 = vmatprep.subr.bf16.mxu0 0
      %2290 = vmatpush1.bf16.msra.mxu0 0
      %2291 = vmatprep.subr.bf16.mxu0 0
      %2292 = vmatpush1.bf16.msra.mxu0 0
      %2293 = vmatprep.subr.bf16.mxu0 0
      %2294 = vmatpush1.bf16.msra.mxu0 0
      %2295 = vmatprep.subr.bf16.mxu0 0
      %2296 = vmatpush1.bf16.msra.mxu0 0
      %2297 = vmatprep.subr.bf16.mxu0 0
      %2298 = vmatpush1.bf16.msra.mxu0 0
      %2299 = vmatprep.subr.bf16.mxu0 0
      %2300 = vmatpush1.bf16.msra.mxu0 0
      %2301 = vmatprep.subr.bf16.mxu0 0
      %2302 = vmatpush1.bf16.msra.mxu0 0
      %2303 = vmatprep.subr.bf16.mxu0 0
      %2304 = vmatpush1.bf16.msra.mxu0 0
      %2305 = vmatprep.subr.bf16.mxu0 0
      %2306 = vmatpush1.bf16.msra.mxu0 0
      %2307 = vmatprep.subr.bf16.mxu0 0
      %2308 = vmatpush1.bf16.msra.mxu0 0
      %2309 = vmatprep.subr.bf16.mxu0 0
      %2310 = vmatpush1.bf16.msra.mxu0 0
      %2311 = vmatprep.subr.bf16.mxu0 0
      %2312 = vmatpush1.bf16.msra.mxu0 0
      %2313 = vmatprep.mubr.bf16.mxu0 0
      %2314 = vmatmul.mubr.bf16.gmra.mrb[0].mxu0 %v992
      %v2315 = vpop.f32.mrb[0].mxu0
      %v2316 = vadd.f32 0.0, %v2315
      %v2317 = vpop.f32.mrb[0].mxu0
      %v2318 = vpop.f32.mrb[0].mxu0
      %v2319 = vadd.f32 0.0, %v2318
      %v2320 = vpop.f32.mrb[0].mxu0
      %2321 = vmatprep.mubr.bf16.mxu0 0
      %2322 = vmatmul.mubr.bf16.gmra.mrb[0].mxu0 %v995
      %v2323 = vpop.f32.mrb[0].mxu0
      %v2324 = vadd.f32 0.0, %v2323
      %v2325 = vpop.f32.mrb[0].mxu0
      %v2326 = vpop.f32.mrb[0].mxu0
      %v2327 = vadd.f32 0.0, %v2326
      %v2328 = vpop.f32.mrb[0].mxu0
      %2329 = vmatprep.mubr.bf16.mxu0 0
      %2330 = vmatmul.mubr.bf16.gmra.mrb[0].mxu0 %v998
      %v2331 = vpop.f32.mrb[0].mxu0
      %v2332 = vadd.f32 0.0, %v2331
      %v2333 = vpop.f32.mrb[0].mxu0
      %v2334 = vpop.f32.mrb[0].mxu0
      %v2335 = vadd.f32 0.0, %v2334
      %v2336 = vpop.f32.mrb[0].mxu0
      %2337 = vmatprep.mubr.bf16.mxu0 0
      %2338 = vmatmul.mubr.bf16.gmra.mrb[0].mxu0 %v1001
      %v2339 = vpop.f32.mrb[0].mxu0
      %v2340 = vadd.f32 0.0, %v2339
      %v2341 = vpop.f32.mrb[0].mxu0
      %v2342 = vpop.f32.mrb[0].mxu0
      %v2343 = vadd.f32 0.0, %v2342
      %v2344 = vpop.f32.mrb[0].mxu0
      %2345 = vmatprep.mubr.bf16.mxu0 0
      %2346 = vmatmul.mubr.bf16.gmra.mrb[0].mxu0 %v1004
      %v2347 = vpop.f32.mrb[0].mxu0
      %v2348 = vadd.f32 0.0, %v2347
      %v2349 = vpop.f32.mrb[0].mxu0
      %v2350 = vpop.f32.mrb[0].mxu0
      %v2351 = vadd.f32 0.0, %v2350
      %v2352 = vpop.f32.mrb[0].mxu0
      %2353 = vmatprep.mubr.bf16.mxu0 0
      %2354 = vmatmul.mubr.bf16.gmra.mrb[0].mxu0 %v1007
      %v2355 = vpop.f32.mrb[0].mxu0
      %v2356 = vadd.f32 0.0, %v2355
      %v2357 = vpop.f32.mrb[0].mxu0
      %v2358 = vpop.f32.mrb[0].mxu0
      %v2359 = vadd.f32 0.0, %v2358
      %v2360 = vpop.f32.mrb[0].mxu0
      %2361 = vmatprep.mubr.bf16.mxu0 0
      %2362 = vmatmul.mubr.bf16.gmra.mrb[0].mxu0 %v1010
      %v2363 = vpop.f32.mrb[0].mxu0
      %v2364 = vadd.f32 0.0, %v2363
      %v2365 = vpop.f32.mrb[0].mxu0
      %v2366 = vpop.f32.mrb[0].mxu0
      %v2367 = vadd.f32 0.0, %v2366
      %v2368 = vpop.f32.mrb[0].mxu0
      %2369 = vmatprep.mubr.bf16.mxu0 0
      %2370 = vmatmul.mubr.bf16.gmra.mrb[0].mxu0 %v1013
      %v2371 = vpop.f32.mrb[0].mxu0
      %v2372 = vadd.f32 0.0, %v2371
      %v2373 = vpop.f32.mrb[0].mxu0
      %v2374 = vpop.f32.mrb[0].mxu0
      %v2375 = vadd.f32 0.0, %v2374
      %v2376 = vpop.f32.mrb[0].mxu0
      %2377 = vmatprep.mubr.bf16.mxu0 0
      %2378 = vmatmul.mubr.bf16.gmra.mrb[0].mxu0 %v1016
      %v2379 = vpop.f32.mrb[0].mxu0
      %v2380 = vadd.f32 0.0, %v2379
      %v2381 = vpop.f32.mrb[0].mxu0
      %v2382 = vpop.f32.mrb[0].mxu0
      %v2383 = vadd.f32 0.0, %v2382
      %v2384 = vpop.f32.mrb[0].mxu0
      %2385 = vmatprep.mubr.bf16.mxu0 0
      %2386 = vmatmul.mubr.bf16.gmra.mrb[0].mxu0 %v1019
      %v2387 = vpop.f32.mrb[0].mxu0
      %v2388 = vadd.f32 0.0, %v2387
      %v2389 = vpop.f32.mrb[0].mxu0
      %v2390 = vpop.f32.mrb[0].mxu0
      %v2391 = vadd.f32 0.0, %v2390
      %v2392 = vpop.f32.mrb[0].mxu0
      %2393 = vmatprep.mubr.bf16.mxu0 0
      %2394 = vmatmul.mubr.bf16.gmra.mrb[0].mxu0 %v1022
      %v2395 = vpop.f32.mrb[0].mxu0
      %v2396 = vadd.f32 0.0, %v2395
      %v2397 = vpop.f32.mrb[0].mxu0
      %v2398 = vpop.f32.mrb[0].mxu0
      %v2399 = vadd.f32 0.0, %v2398
      %v2400 = vpop.f32.mrb[0].mxu0
      %2401 = vmatprep.mubr.bf16.mxu0 0
      %2402 = vmatmul.mubr.bf16.gmra.mrb[0].mxu0 %v1025
      %v2403 = vpop.f32.mrb[0].mxu0
      %v2404 = vadd.f32 0.0, %v2403
      %v2405 = vpop.f32.mrb[0].mxu0
      %v2406 = vpop.f32.mrb[0].mxu0
      %v2407 = vadd.f32 0.0, %v2406
      %v2408 = vpop.f32.mrb[0].mxu0
      %2409 = vmatprep.mubr.bf16.mxu0 0
      %2410 = vmatmul.mubr.bf16.gmra.mrb[0].mxu0 %v1028
      %v2411 = vpop.f32.mrb[0].mxu0
      %v2412 = vadd.f32 0.0, %v2411
      %v2413 = vpop.f32.mrb[0].mxu0
      %v2414 = vpop.f32.mrb[0].mxu0
      %v2415 = vadd.f32 0.0, %v2414
      %v2416 = vpop.f32.mrb[0].mxu0
      %2417 = vmatprep.mubr.bf16.mxu0 0
      %2418 = vmatmul.mubr.bf16.gmra.mrb[0].mxu0 %v1031
      %v2419 = vpop.f32.mrb[0].mxu0
      %v2420 = vadd.f32 0.0, %v2419
      %v2421 = vpop.f32.mrb[0].mxu0
      %v2422 = vpop.f32.mrb[0].mxu0
      %v2423 = vadd.f32 0.0, %v2422
      %v2424 = vpop.f32.mrb[0].mxu0
      %2425 = vmatprep.mubr.bf16.mxu0 0
      %2426 = vmatmul.mubr.bf16.gmra.mrb[0].mxu0 %v1630
      %v2427 = vpop.f32.mrb[0].mxu0
      %v2428 = vadd.f32 0.0, %v2427
      %v2429 = vpop.f32.mrb[0].mxu0
      %v2430 = vpop.f32.mrb[0].mxu0
      %v2431 = vadd.f32 0.0, %v2430
      %v2432 = vpop.f32.mrb[0].mxu0
      %2433 = vmatprep.mubr.bf16.mxu0 0
      %2434 = vmatmul.mubr.bf16.gmra.mrb[0].mxu0 %v2276
      %v2435 = vpop.f32.mrb[0].mxu0
      %v2436 = vadd.f32 0.0, %v2435
      %v2437 = vpop.f32.mrb[0].mxu0
      %v2438 = vpop.f32.mrb[0].mxu0
      %v2439 = vadd.f32 0.0, %v2438
      %v2440 = vpop.f32.mrb[0].mxu0
      %2441 = vdwg.mxu0
      %v2442 = vadd.f32 %v2236, %v2316
      %v2443 = vadd.f32 %v2237, %v2319
      %v2444 = vadd.f32 %v2238, %v2324
      %v2445 = vadd.f32 %v2239, %v2327
      %v2446 = vadd.f32 %v2240, %v2332
      %v2447 = vadd.f32 %v2241, %v2335
      %v2448 = vadd.f32 %v2242, %v2340
      %v2449 = vadd.f32 %v2243, %v2343
      %v2450 = vadd.f32 %v2244, %v2348
      %v2451 = vadd.f32 %v2245, %v2351
      %v2452 = vadd.f32 %v2246, %v2356
      %v2453 = vadd.f32 %v2247, %v2359
      %v2454 = vadd.f32 %v2248, %v2364
      %v2455 = vadd.f32 %v2249, %v2367
      %v2456 = vadd.f32 %v2250, %v2372
      %v2457 = vadd.f32 %v2251, %v2375
      %v2458 = vadd.f32 %v2252, %v2380
      %v2459 = vadd.f32 %v2253, %v2383
      %v2460 = vadd.f32 %v2254, %v2388
      %v2461 = vadd.f32 %v2255, %v2391
      %v2462 = vadd.f32 %v2256, %v2396
      %v2463 = vadd.f32 %v2257, %v2399
      %v2464 = vadd.f32 %v2258, %v2404
      %v2465 = vadd.f32 %v2259, %v2407
      %v2466 = vadd.f32 %v2260, %v2412
      %v2467 = vadd.f32 %v2261, %v2415
      %v2468 = vadd.f32 %v2262, %v2420
      %v2469 = vadd.f32 %v2263, %v2423
      %v2470 = vadd.f32 %v2264, %v2428
      %v2471 = vadd.f32 %v2265, %v2431
      %v2472 = vadd.f32 %v2266, %v2436
      %v2473 = vadd.f32 %v2267, %v2439
      %v2475 = vshrl.u32 %v250, 16
      %v2477 = vrot.slane %v2475, 4
      %v2478 = vshll.u32 %v250, 16
      %v2480 = vrot.slane %v2478, 5
      %v2481 = vor.u32 %v2477, %v2480
      %v2482 = vrot.slane %v2481, 4
      %v2484 = vshll.u32 %v251, 16
      %v2486 = vrot.slane %v2484, 5
      %v2487 = vsel %vm256, %v2482, %v2486
      %v2488 = vshrl.u32 %v251, 16
      %v2490 = vrot.slane %v2488, 4
      %v2491 = vor.u32 %v2490, %v2486
      %v2492 = vrot.slane %v2491, 4
      %v2494 = vshll.u32 %v252, 16
      %v2496 = vrot.slane %v2494, 5
      %v2497 = vsel %vm256, %v2492, %v2496
      %s2498 = scalar_lea.vmem %s1, 14
      %v2499 = vld [vmem:[%s2498] sm:$0x3]
      %v2500 = vunpack.c.l.b16 %v2487
      %v2501 = vunpack.c.l.b16 %v2497
      %v2502 = vpack.c.b16 %v2501, %v2500
      %v2504 = vsel %vm691, %v2502, 0
      %v2507 = vsel %vm740, %v2499, 0
      %2509 = vmatprep.subr.bf16.mxu0 0
      %2510 = vmatpush1.bf16.msra.mxu0 %v2507
      %2511 = vmatprep.subr.bf16.mxu0 0
      %2512 = vmatpush1.bf16.msra.mxu0 0
      %2513 = vmatprep.subr.bf16.mxu0 0
      %2514 = vmatpush1.bf16.msra.mxu0 0
      %2515 = vmatprep.subr.bf16.mxu0 0
      %2516 = vmatpush1.bf16.msra.mxu0 0
      %2517 = vmatprep.subr.bf16.mxu0 0
      %2518 = vmatpush1.bf16.msra.mxu0 0
      %2519 = vmatprep.subr.bf16.mxu0 0
      %2520 = vmatpush1.bf16.msra.mxu0 0
      %2521 = vmatprep.subr.bf16.mxu0 0
      %2522 = vmatpush1.bf16.msra.mxu0 0
      %2523 = vmatprep.subr.bf16.mxu0 0
      %2524 = vmatpush1.bf16.msra.mxu0 0
      %2525 = vmatprep.subr.bf16.mxu0 0
      %2526 = vmatpush1.bf16.msra.mxu0 0
      %2527 = vmatprep.subr.bf16.mxu0 0
      %2528 = vmatpush1.bf16.msra.mxu0 0
      %2529 = vmatprep.subr.bf16.mxu0 0
      %2530 = vmatpush1.bf16.msra.mxu0 0
      %2531 = vmatprep.subr.bf16.mxu0 0
      %2532 = vmatpush1.bf16.msra.mxu0 0
      %2533 = vmatprep.subr.bf16.mxu0 0
      %2534 = vmatpush1.bf16.msra.mxu0 0
      %2535 = vmatprep.subr.bf16.mxu0 0
      %2536 = vmatpush1.bf16.msra.mxu0 0
      %2537 = vmatprep.subr.bf16.mxu0 0
      %2538 = vmatpush1.bf16.msra.mxu0 0
      %2539 = vmatprep.subr.bf16.mxu0 0
      %2540 = vmatpush1.bf16.msra.mxu0 0
      %2541 = vmatprep.mubr.bf16.mxu0 0
      %2542 = vmatmul.mubr.bf16.gmra.mrb[0].mxu0 %v699
      %v2543 = vpop.f32.mrb[0].mxu0
      %v2544 = vadd.f32 0.0, %v2543
      %v2545 = vpop.f32.mrb[0].mxu0
      %v2546 = vpop.f32.mrb[0].mxu0
      %v2547 = vadd.f32 0.0, %v2546
      %v2548 = vpop.f32.mrb[0].mxu0
      %2549 = vmatprep.mubr.bf16.mxu0 0
      %2550 = vmatmul.mubr.bf16.gmra.mrb[0].mxu0 %v702
      %v2551 = vpop.f32.mrb[0].mxu0
      %v2552 = vadd.f32 0.0, %v2551
      %v2553 = vpop.f32.mrb[0].mxu0
      %v2554 = vpop.f32.mrb[0].mxu0
      %v2555 = vadd.f32 0.0, %v2554
      %v2556 = vpop.f32.mrb[0].mxu0
      %2557 = vmatprep.mubr.bf16.mxu0 0
      %2558 = vmatmul.mubr.bf16.gmra.mrb[0].mxu0 %v705
      %v2559 = vpop.f32.mrb[0].mxu0
      %v2560 = vadd.f32 0.0, %v2559
      %v2561 = vpop.f32.mrb[0].mxu0
      %v2562 = vpop.f32.mrb[0].mxu0
      %v2563 = vadd.f32 0.0, %v2562
      %v2564 = vpop.f32.mrb[0].mxu0
      %2565 = vmatprep.mubr.bf16.mxu0 0
      %2566 = vmatmul.mubr.bf16.gmra.mrb[0].mxu0 %v708
      %v2567 = vpop.f32.mrb[0].mxu0
      %v2568 = vadd.f32 0.0, %v2567
      %v2569 = vpop.f32.mrb[0].mxu0
      %v2570 = vpop.f32.mrb[0].mxu0
      %v2571 = vadd.f32 0.0, %v2570
      %v2572 = vpop.f32.mrb[0].mxu0
      %2573 = vmatprep.mubr.bf16.mxu0 0
      %2574 = vmatmul.mubr.bf16.gmra.mrb[0].mxu0 %v711
      %v2575 = vpop.f32.mrb[0].mxu0
      %v2576 = vadd.f32 0.0, %v2575
      %v2577 = vpop.f32.mrb[0].mxu0
      %v2578 = vpop.f32.mrb[0].mxu0
      %v2579 = vadd.f32 0.0, %v2578
      %v2580 = vpop.f32.mrb[0].mxu0
      %2581 = vmatprep.mubr.bf16.mxu0 0
      %2582 = vmatmul.mubr.bf16.gmra.mrb[0].mxu0 %v714
      %v2583 = vpop.f32.mrb[0].mxu0
      %v2584 = vadd.f32 0.0, %v2583
      %v2585 = vpop.f32.mrb[0].mxu0
      %v2586 = vpop.f32.mrb[0].mxu0
      %v2587 = vadd.f32 0.0, %v2586
      %v2588 = vpop.f32.mrb[0].mxu0
      %2589 = vmatprep.mubr.bf16.mxu0 0
      %2590 = vmatmul.mubr.bf16.gmra.mrb[0].mxu0 %v717
      %v2591 = vpop.f32.mrb[0].mxu0
      %v2592 = vadd.f32 0.0, %v2591
      %v2593 = vpop.f32.mrb[0].mxu0
      %v2594 = vpop.f32.mrb[0].mxu0
      %v2595 = vadd.f32 0.0, %v2594
      %v2596 = vpop.f32.mrb[0].mxu0
      %2597 = vmatprep.mubr.bf16.mxu0 0
      %2598 = vmatmul.mubr.bf16.gmra.mrb[0].mxu0 %v720
      %v2599 = vpop.f32.mrb[0].mxu0
      %v2600 = vadd.f32 0.0, %v2599
      %v2601 = vpop.f32.mrb[0].mxu0
      %v2602 = vpop.f32.mrb[0].mxu0
      %v2603 = vadd.f32 0.0, %v2602
      %v2604 = vpop.f32.mrb[0].mxu0
      %2605 = vmatprep.mubr.bf16.mxu0 0
      %2606 = vmatmul.mubr.bf16.gmra.mrb[0].mxu0 %v723
      %v2607 = vpop.f32.mrb[0].mxu0
      %v2608 = vadd.f32 0.0, %v2607
      %v2609 = vpop.f32.mrb[0].mxu0
      %v2610 = vpop.f32.mrb[0].mxu0
      %v2611 = vadd.f32 0.0, %v2610
      %v2612 = vpop.f32.mrb[0].mxu0
      %2613 = vmatprep.mubr.bf16.mxu0 0
      %2614 = vmatmul.mubr.bf16.gmra.mrb[0].mxu0 %v726
      %v2615 = vpop.f32.mrb[0].mxu0
      %v2616 = vadd.f32 0.0, %v2615
      %v2617 = vpop.f32.mrb[0].mxu0
      %v2618 = vpop.f32.mrb[0].mxu0
      %v2619 = vadd.f32 0.0, %v2618
      %v2620 = vpop.f32.mrb[0].mxu0
      %2621 = vmatprep.mubr.bf16.mxu0 0
      %2622 = vmatmul.mubr.bf16.gmra.mrb[0].mxu0 %v729
      %v2623 = vpop.f32.mrb[0].mxu0
      %v2624 = vadd.f32 0.0, %v2623
      %v2625 = vpop.f32.mrb[0].mxu0
      %v2626 = vpop.f32.mrb[0].mxu0
      %v2627 = vadd.f32 0.0, %v2626
      %v2628 = vpop.f32.mrb[0].mxu0
      %2629 = vmatprep.mubr.bf16.mxu0 0
      %2630 = vmatmul.mubr.bf16.gmra.mrb[0].mxu0 %v732
      %v2631 = vpop.f32.mrb[0].mxu0
      %v2632 = vadd.f32 0.0, %v2631
      %v2633 = vpop.f32.mrb[0].mxu0
      %v2634 = vpop.f32.mrb[0].mxu0
      %v2635 = vadd.f32 0.0, %v2634
      %v2636 = vpop.f32.mrb[0].mxu0
      %2637 = vmatprep.mubr.bf16.mxu0 0
      %2638 = vmatmul.mubr.bf16.gmra.mrb[0].mxu0 %v735
      %v2639 = vpop.f32.mrb[0].mxu0
      %v2640 = vadd.f32 0.0, %v2639
      %v2641 = vpop.f32.mrb[0].mxu0
      %v2642 = vpop.f32.mrb[0].mxu0
      %v2643 = vadd.f32 0.0, %v2642
      %v2644 = vpop.f32.mrb[0].mxu0
      %2645 = vmatprep.mubr.bf16.mxu0 0
      %2646 = vmatmul.mubr.bf16.gmra.mrb[0].mxu0 %v738
      %v2647 = vpop.f32.mrb[0].mxu0
      %v2648 = vadd.f32 0.0, %v2647
      %v2649 = vpop.f32.mrb[0].mxu0
      %v2650 = vpop.f32.mrb[0].mxu0
      %v2651 = vadd.f32 0.0, %v2650
      %v2652 = vpop.f32.mrb[0].mxu0
      %2653 = vmatprep.mubr.bf16.mxu0 0
      %2654 = vmatmul.mubr.bf16.gmra.mrb[0].mxu0 %v1858
      %v2655 = vpop.f32.mrb[0].mxu0
      %v2656 = vadd.f32 0.0, %v2655
      %v2657 = vpop.f32.mrb[0].mxu0
      %v2658 = vpop.f32.mrb[0].mxu0
      %v2659 = vadd.f32 0.0, %v2658
      %v2660 = vpop.f32.mrb[0].mxu0
      %2661 = vmatprep.mubr.bf16.mxu0 0
      %2662 = vmatmul.mubr.bf16.gmra.mrb[0].mxu0 %v2504
      %v2663 = vpop.f32.mrb[0].mxu0
      %v2664 = vadd.f32 0.0, %v2663
      %v2665 = vpop.f32.mrb[0].mxu0
      %v2666 = vpop.f32.mrb[0].mxu0
      %v2667 = vadd.f32 0.0, %v2666
      %v2668 = vpop.f32.mrb[0].mxu0
      %2669 = vdwg.mxu0
      %v2670 = vadd.f32 %v2442, %v2544
      %v2671 = vadd.f32 %v2443, %v2547
      %v2672 = vadd.f32 %v2444, %v2552
      %v2673 = vadd.f32 %v2445, %v2555
      %v2674 = vadd.f32 %v2446, %v2560
      %v2675 = vadd.f32 %v2447, %v2563
      %v2676 = vadd.f32 %v2448, %v2568
      %v2677 = vadd.f32 %v2449, %v2571
      %v2678 = vadd.f32 %v2450, %v2576
      %v2679 = vadd.f32 %v2451, %v2579
      %v2680 = vadd.f32 %v2452, %v2584
      %v2681 = vadd.f32 %v2453, %v2587
      %v2682 = vadd.f32 %v2454, %v2592
      %v2683 = vadd.f32 %v2455, %v2595
      %v2684 = vadd.f32 %v2456, %v2600
      %v2685 = vadd.f32 %v2457, %v2603
      %v2686 = vadd.f32 %v2458, %v2608
      %v2687 = vadd.f32 %v2459, %v2611
      %v2688 = vadd.f32 %v2460, %v2616
      %v2689 = vadd.f32 %v2461, %v2619
      %v2690 = vadd.f32 %v2462, %v2624
      %v2691 = vadd.f32 %v2463, %v2627
      %v2692 = vadd.f32 %v2464, %v2632
      %v2693 = vadd.f32 %v2465, %v2635
      %v2694 = vadd.f32 %v2466, %v2640
      %v2695 = vadd.f32 %v2467, %v2643
      %v2696 = vadd.f32 %v2468, %v2648
      %v2697 = vadd.f32 %v2469, %v2651
      %v2698 = vadd.f32 %v2470, %v2656
      %v2699 = vadd.f32 %v2471, %v2659
      %v2700 = vadd.f32 %v2472, %v2664
      %v2701 = vadd.f32 %v2473, %v2667
      %v2703 = vrot.slane %v250, 5
      %v2704 = vrot.slane %v2703, 4
      %v2705 = vrot.slane %v251, 5
      %v2706 = vsel %vm1215, %v2704, %v2705
      %v2707 = vrot.slane %v2705, 4
      %v2708 = vrot.slane %v252, 5
      %v2709 = vsel %vm1215, %v2707, %v2708
      %s2710 = scalar_lea.vmem %s1, 16
      %v2711 = vld [vmem:[%s2710] sm:$0x3]
      %v2712 = vunpack.c.l.b16 %v2706
      %v2713 = vunpack.c.l.b16 %v2709
      %v2714 = vpack.c.b16 %v2713, %v2712
      %v2716 = vsel %vm691, %v2714, 0
      %v2719 = vsel %vm740, %v2711, 0
      %2721 = vmatprep.subr.bf16.mxu0 0
      %2722 = vmatpush1.bf16.msra.mxu0 %v2719
      %2723 = vmatprep.subr.bf16.mxu0 0
      %2724 = vmatpush1.bf16.msra.mxu0 0
      %2725 = vmatprep.subr.bf16.mxu0 0
      %2726 = vmatpush1.bf16.msra.mxu0 0
      %2727 = vmatprep.subr.bf16.mxu0 0
      %2728 = vmatpush1.bf16.msra.mxu0 0
      %2729 = vmatprep.subr.bf16.mxu0 0
      %2730 = vmatpush1.bf16.msra.mxu0 0
      %2731 = vmatprep.subr.bf16.mxu0 0
      %2732 = vmatpush1.bf16.msra.mxu0 0
      %2733 = vmatprep.subr.bf16.mxu0 0
      %2734 = vmatpush1.bf16.msra.mxu0 0
      %2735 = vmatprep.subr.bf16.mxu0 0
      %2736 = vmatpush1.bf16.msra.mxu0 0
      %2737 = vmatprep.subr.bf16.mxu0 0
      %2738 = vmatpush1.bf16.msra.mxu0 0
      %2739 = vmatprep.subr.bf16.mxu0 0
      %2740 = vmatpush1.bf16.msra.mxu0 0
      %2741 = vmatprep.subr.bf16.mxu0 0
      %2742 = vmatpush1.bf16.msra.mxu0 0
      %2743 = vmatprep.subr.bf16.mxu0 0
      %2744 = vmatpush1.bf16.msra.mxu0 0
      %2745 = vmatprep.subr.bf16.mxu0 0
      %2746 = vmatpush1.bf16.msra.mxu0 0
      %2747 = vmatprep.subr.bf16.mxu0 0
      %2748 = vmatpush1.bf16.msra.mxu0 0
      %2749 = vmatprep.subr.bf16.mxu0 0
      %2750 = vmatpush1.bf16.msra.mxu0 0
      %2751 = vmatprep.subr.bf16.mxu0 0
      %2752 = vmatpush1.bf16.msra.mxu0 0
      %2753 = vmatprep.mubr.bf16.mxu0 0
      %2754 = vmatmul.mubr.bf16.gmra.mrb[0].mxu0 %v1385
      %v2755 = vpop.f32.mrb[0].mxu0
      %v2756 = vadd.f32 0.0, %v2755
      %v2757 = vpop.f32.mrb[0].mxu0
      %v2758 = vpop.f32.mrb[0].mxu0
      %v2759 = vadd.f32 0.0, %v2758
      %v2760 = vpop.f32.mrb[0].mxu0
      %2761 = vmatprep.mubr.bf16.mxu0 0
      %2762 = vmatmul.mubr.bf16.gmra.mrb[0].mxu0 %v1388
      %v2763 = vpop.f32.mrb[0].mxu0
      %v2764 = vadd.f32 0.0, %v2763
      %v2765 = vpop.f32.mrb[0].mxu0
      %v2766 = vpop.f32.mrb[0].mxu0
      %v2767 = vadd.f32 0.0, %v2766
      %v2768 = vpop.f32.mrb[0].mxu0
      %2769 = vmatprep.mubr.bf16.mxu0 0
      %2770 = vmatmul.mubr.bf16.gmra.mrb[0].mxu0 %v1391
      %v2771 = vpop.f32.mrb[0].mxu0
      %v2772 = vadd.f32 0.0, %v2771
      %v2773 = vpop.f32.mrb[0].mxu0
      %v2774 = vpop.f32.mrb[0].mxu0
      %v2775 = vadd.f32 0.0, %v2774
      %v2776 = vpop.f32.mrb[0].mxu0
      %2777 = vmatprep.mubr.bf16.mxu0 0
      %2778 = vmatmul.mubr.bf16.gmra.mrb[0].mxu0 %v1394
      %v2779 = vpop.f32.mrb[0].mxu0
      %v2780 = vadd.f32 0.0, %v2779
      %v2781 = vpop.f32.mrb[0].mxu0
      %v2782 = vpop.f32.mrb[0].mxu0
      %v2783 = vadd.f32 0.0, %v2782
      %v2784 = vpop.f32.mrb[0].mxu0
      %2785 = vmatprep.mubr.bf16.mxu0 0
      %2786 = vmatmul.mubr.bf16.gmra.mrb[0].mxu0 %v1397
      %v2787 = vpop.f32.mrb[0].mxu0
      %v2788 = vadd.f32 0.0, %v2787
      %v2789 = vpop.f32.mrb[0].mxu0
      %v2790 = vpop.f32.mrb[0].mxu0
      %v2791 = vadd.f32 0.0, %v2790
      %v2792 = vpop.f32.mrb[0].mxu0
      %2793 = vmatprep.mubr.bf16.mxu0 0
      %2794 = vmatmul.mubr.bf16.gmra.mrb[0].mxu0 %v1400
      %v2795 = vpop.f32.mrb[0].mxu0
      %v2796 = vadd.f32 0.0, %v2795
      %v2797 = vpop.f32.mrb[0].mxu0
      %v2798 = vpop.f32.mrb[0].mxu0
      %v2799 = vadd.f32 0.0, %v2798
      %v2800 = vpop.f32.mrb[0].mxu0
      %2801 = vmatprep.mubr.bf16.mxu0 0
      %2802 = vmatmul.mubr.bf16.gmra.mrb[0].mxu0 %v1403
      %v2803 = vpop.f32.mrb[0].mxu0
      %v2804 = vadd.f32 0.0, %v2803
      %v2805 = vpop.f32.mrb[0].mxu0
      %v2806 = vpop.f32.mrb[0].mxu0
      %v2807 = vadd.f32 0.0, %v2806
      %v2808 = vpop.f32.mrb[0].mxu0
      %2809 = vmatprep.mubr.bf16.mxu0 0
      %2810 = vmatmul.mubr.bf16.gmra.mrb[0].mxu0 %v1406
      %v2811 = vpop.f32.mrb[0].mxu0
      %v2812 = vadd.f32 0.0, %v2811
      %v2813 = vpop.f32.mrb[0].mxu0
      %v2814 = vpop.f32.mrb[0].mxu0
      %v2815 = vadd.f32 0.0, %v2814
      %v2816 = vpop.f32.mrb[0].mxu0
      %2817 = vmatprep.mubr.bf16.mxu0 0
      %2818 = vmatmul.mubr.bf16.gmra.mrb[0].mxu0 %v1409
      %v2819 = vpop.f32.mrb[0].mxu0
      %v2820 = vadd.f32 0.0, %v2819
      %v2821 = vpop.f32.mrb[0].mxu0
      %v2822 = vpop.f32.mrb[0].mxu0
      %v2823 = vadd.f32 0.0, %v2822
      %v2824 = vpop.f32.mrb[0].mxu0
      %2825 = vmatprep.mubr.bf16.mxu0 0
      %2826 = vmatmul.mubr.bf16.gmra.mrb[0].mxu0 %v1412
      %v2827 = vpop.f32.mrb[0].mxu0
      %v2828 = vadd.f32 0.0, %v2827
      %v2829 = vpop.f32.mrb[0].mxu0
      %v2830 = vpop.f32.mrb[0].mxu0
      %v2831 = vadd.f32 0.0, %v2830
      %v2832 = vpop.f32.mrb[0].mxu0
      %2833 = vmatprep.mubr.bf16.mxu0 0
      %2834 = vmatmul.mubr.bf16.gmra.mrb[0].mxu0 %v1415
      %v2835 = vpop.f32.mrb[0].mxu0
      %v2836 = vadd.f32 0.0, %v2835
      %v2837 = vpop.f32.mrb[0].mxu0
      %v2838 = vpop.f32.mrb[0].mxu0
      %v2839 = vadd.f32 0.0, %v2838
      %v2840 = vpop.f32.mrb[0].mxu0
      %2841 = vmatprep.mubr.bf16.mxu0 0
      %2842 = vmatmul.mubr.bf16.gmra.mrb[0].mxu0 %v1418
      %v2843 = vpop.f32.mrb[0].mxu0
      %v2844 = vadd.f32 0.0, %v2843
      %v2845 = vpop.f32.mrb[0].mxu0
      %v2846 = vpop.f32.mrb[0].mxu0
      %v2847 = vadd.f32 0.0, %v2846
      %v2848 = vpop.f32.mrb[0].mxu0
      %2849 = vmatprep.mubr.bf16.mxu0 0
      %2850 = vmatmul.mubr.bf16.gmra.mrb[0].mxu0 %v1421
      %v2851 = vpop.f32.mrb[0].mxu0
      %v2852 = vadd.f32 0.0, %v2851
      %v2853 = vpop.f32.mrb[0].mxu0
      %v2854 = vpop.f32.mrb[0].mxu0
      %v2855 = vadd.f32 0.0, %v2854
      %v2856 = vpop.f32.mrb[0].mxu0
      %2857 = vmatprep.mubr.bf16.mxu0 0
      %2858 = vmatmul.mubr.bf16.gmra.mrb[0].mxu0 %v1424
      %v2859 = vpop.f32.mrb[0].mxu0
      %v2860 = vadd.f32 0.0, %v2859
      %v2861 = vpop.f32.mrb[0].mxu0
      %v2862 = vpop.f32.mrb[0].mxu0
      %v2863 = vadd.f32 0.0, %v2862
      %v2864 = vpop.f32.mrb[0].mxu0
      %2865 = vmatprep.mubr.bf16.mxu0 0
      %2866 = vmatmul.mubr.bf16.gmra.mrb[0].mxu0 %v2070
      %v2867 = vpop.f32.mrb[0].mxu0
      %v2868 = vadd.f32 0.0, %v2867
      %v2869 = vpop.f32.mrb[0].mxu0
      %v2870 = vpop.f32.mrb[0].mxu0
      %v2871 = vadd.f32 0.0, %v2870
      %v2872 = vpop.f32.mrb[0].mxu0
      %2873 = vmatprep.mubr.bf16.mxu0 0
      %2874 = vmatmul.mubr.bf16.gmra.mrb[0].mxu0 %v2716
      %v2875 = vpop.f32.mrb[0].mxu0
      %v2876 = vadd.f32 0.0, %v2875
      %v2877 = vpop.f32.mrb[0].mxu0
      %v2878 = vpop.f32.mrb[0].mxu0
      %v2879 = vadd.f32 0.0, %v2878
      %v2880 = vpop.f32.mrb[0].mxu0
      %2881 = vdwg.mxu0
      %v2882 = vadd.f32 %v2670, %v2756
      %v2883 = vadd.f32 %v2671, %v2759
      %v2884 = vadd.f32 %v2672, %v2764
      %v2885 = vadd.f32 %v2673, %v2767
      %v2886 = vadd.f32 %v2674, %v2772
      %v2887 = vadd.f32 %v2675, %v2775
      %v2888 = vadd.f32 %v2676, %v2780
      %v2889 = vadd.f32 %v2677, %v2783
      %v2890 = vadd.f32 %v2678, %v2788
      %v2891 = vadd.f32 %v2679, %v2791
      %v2892 = vadd.f32 %v2680, %v2796
      %v2893 = vadd.f32 %v2681, %v2799
      %v2894 = vadd.f32 %v2682, %v2804
      %v2895 = vadd.f32 %v2683, %v2807
      %v2896 = vadd.f32 %v2684, %v2812
      %v2897 = vadd.f32 %v2685, %v2815
      %v2898 = vadd.f32 %v2686, %v2820
      %v2899 = vadd.f32 %v2687, %v2823
      %v2900 = vadd.f32 %v2688, %v2828
      %v2901 = vadd.f32 %v2689, %v2831
      %v2902 = vadd.f32 %v2690, %v2836
      %v2903 = vadd.f32 %v2691, %v2839
      %v2904 = vadd.f32 %v2692, %v2844
      %v2905 = vadd.f32 %v2693, %v2847
      %v2906 = vadd.f32 %v2694, %v2852
      %v2907 = vadd.f32 %v2695, %v2855
      %v2908 = vadd.f32 %v2696, %v2860
      %v2909 = vadd.f32 %v2697, %v2863
      %v2910 = vadd.f32 %v2698, %v2868
      %v2911 = vadd.f32 %v2699, %v2871
      %v2912 = vadd.f32 %v2700, %v2876
      %v2913 = vadd.f32 %v2701, %v2879
      %v2914 = vld [vmem:[%s2] sm:$0x1]
      %v2916 = vlaneseq
      %v2917 = vshrl.u32 %v2916, 7
      %v2918 = vsub.s32 0, %v2917
      %v2919 = vrot.slane %v2914, %v2918
      %v2921 = vmul.f32 %v2882, %v2919
      %v2922 = vmul.f32 %v2883, %v2919
      %v2923 = vmul.f32 %v2884, %v2919
      %v2924 = vmul.f32 %v2885, %v2919
      %v2925 = vmul.f32 %v2886, %v2919
      %v2926 = vmul.f32 %v2887, %v2919
      %v2927 = vmul.f32 %v2888, %v2919
      %v2928 = vmul.f32 %v2889, %v2919
      %v2929 = vmul.f32 %v2890, %v2919
      %v2930 = vmul.f32 %v2891, %v2919
      %v2931 = vmul.f32 %v2892, %v2919
      %v2932 = vmul.f32 %v2893, %v2919
      %v2933 = vmul.f32 %v2894, %v2919
      %v2934 = vmul.f32 %v2895, %v2919
      %v2935 = vmul.f32 %v2896, %v2919
      %v2936 = vmul.f32 %v2897, %v2919
      %v2937 = vmul.f32 %v2898, %v2919
      %v2938 = vmul.f32 %v2899, %v2919
      %v2939 = vmul.f32 %v2900, %v2919
      %v2940 = vmul.f32 %v2901, %v2919
      %v2941 = vmul.f32 %v2902, %v2919
      %v2942 = vmul.f32 %v2903, %v2919
      %v2943 = vmul.f32 %v2904, %v2919
      %v2944 = vmul.f32 %v2905, %v2919
      %v2945 = vmul.f32 %v2906, %v2919
      %v2946 = vmul.f32 %v2907, %v2919
      %v2947 = vmul.f32 %v2908, %v2919
      %v2948 = vmul.f32 %v2909, %v2919
      %v2949 = vmul.f32 %v2910, %v2919
      %v2950 = vmul.f32 %v2911, %v2919
      %v2951 = vmul.f32 %v2912, %v2919
      %v2952 = vmul.f32 %v2913, %v2919
      %v2953 = vld [vmem:[%s3] sm:$0x1]
      %v2955 = vlaneseq
      %v2956 = vshrl.u32 %v2955, 7
      %v2957 = vsub.s32 0, %v2956
      %v2958 = vrot.slane %v2953, %v2957
      %v2960 = vadd.f32 %v2921, %v2958
      %v2961 = vadd.f32 %v2922, %v2958
      %v2962 = vadd.f32 %v2923, %v2958
      %v2963 = vadd.f32 %v2924, %v2958
      %v2964 = vadd.f32 %v2925, %v2958
      %v2965 = vadd.f32 %v2926, %v2958
      %v2966 = vadd.f32 %v2927, %v2958
      %v2967 = vadd.f32 %v2928, %v2958
      %v2968 = vadd.f32 %v2929, %v2958
      %v2969 = vadd.f32 %v2930, %v2958
      %v2970 = vadd.f32 %v2931, %v2958
      %v2971 = vadd.f32 %v2932, %v2958
      %v2972 = vadd.f32 %v2933, %v2958
      %v2973 = vadd.f32 %v2934, %v2958
      %v2974 = vadd.f32 %v2935, %v2958
      %v2975 = vadd.f32 %v2936, %v2958
      %v2976 = vadd.f32 %v2937, %v2958
      %v2977 = vadd.f32 %v2938, %v2958
      %v2978 = vadd.f32 %v2939, %v2958
      %v2979 = vadd.f32 %v2940, %v2958
      %v2980 = vadd.f32 %v2941, %v2958
      %v2981 = vadd.f32 %v2942, %v2958
      %v2982 = vadd.f32 %v2943, %v2958
      %v2983 = vadd.f32 %v2944, %v2958
      %v2984 = vadd.f32 %v2945, %v2958
      %v2985 = vadd.f32 %v2946, %v2958
      %v2986 = vadd.f32 %v2947, %v2958
      %v2987 = vadd.f32 %v2948, %v2958
      %v2988 = vadd.f32 %v2949, %v2958
      %v2989 = vadd.f32 %v2950, %v2958
      %v2990 = vadd.f32 %v2951, %v2958
      %v2991 = vadd.f32 %v2952, %v2958
      %v2992 = vmax.f32 %v2960, 0.0
      %v2993 = vmax.f32 %v2961, 0.0
      %v2994 = vmax.f32 %v2962, 0.0
      %v2995 = vmax.f32 %v2963, 0.0
      %v2996 = vmax.f32 %v2964, 0.0
      %v2997 = vmax.f32 %v2965, 0.0
      %v2998 = vmax.f32 %v2966, 0.0
      %v2999 = vmax.f32 %v2967, 0.0
      %v3000 = vmax.f32 %v2968, 0.0
      %v3001 = vmax.f32 %v2969, 0.0
      %v3002 = vmax.f32 %v2970, 0.0
      %v3003 = vmax.f32 %v2971, 0.0
      %v3004 = vmax.f32 %v2972, 0.0
      %v3005 = vmax.f32 %v2973, 0.0
      %v3006 = vmax.f32 %v2974, 0.0
      %v3007 = vmax.f32 %v2975, 0.0
      %v3008 = vmax.f32 %v2976, 0.0
      %v3009 = vmax.f32 %v2977, 0.0
      %v3010 = vmax.f32 %v2978, 0.0
      %v3011 = vmax.f32 %v2979, 0.0
      %v3012 = vmax.f32 %v2980, 0.0
      %v3013 = vmax.f32 %v2981, 0.0
      %v3014 = vmax.f32 %v2982, 0.0
      %v3015 = vmax.f32 %v2983, 0.0
      %v3016 = vmax.f32 %v2984, 0.0
      %v3017 = vmax.f32 %v2985, 0.0
      %v3018 = vmax.f32 %v2986, 0.0
      %v3019 = vmax.f32 %v2987, 0.0
      %v3020 = vmax.f32 %v2988, 0.0
      %v3021 = vmax.f32 %v2989, 0.0
      %v3022 = vmax.f32 %v2990, 0.0
      %v3023 = vmax.f32 %v2991, 0.0
      %3024 = vxpose.xlu0.b32.start [1/16] %v2992, 128
      %3025 = vxpose.xlu0.b32.cont [2/16] %v2993, 128
      %3026 = vxpose.xlu0.b32.cont [3/16] %v2994, 128
      %3027 = vxpose.xlu0.b32.cont [4/16] %v2995, 128
      %3028 = vxpose.xlu0.b32.cont [5/16] %v2996, 128
      %3029 = vxpose.xlu0.b32.cont [6/16] %v2997, 128
      %3030 = vxpose.xlu0.b32.cont [7/16] %v2998, 128
      %3031 = vxpose.xlu0.b32.cont [8/16] %v2999, 128
      %3032 = vxpose.xlu0.b32.cont [9/16] %v3000, 128
      %3033 = vxpose.xlu0.b32.cont [10/16] %v3001, 128
      %3034 = vxpose.xlu0.b32.cont [11/16] %v3002, 128
      %3035 = vxpose.xlu0.b32.cont [12/16] %v3003, 128
      %3036 = vxpose.xlu0.b32.cont [13/16] %v3004, 128
      %3037 = vxpose.xlu0.b32.cont [14/16] %v3005, 128
      %3038 = vxpose.xlu0.b32.cont [15/16] %v3006, 128
      %3039 = vxpose.xlu0.b32.end [16/16] %v3007, 128
      %v3040 = vpop.trf.xlu0
      %v3041 = vpop.trf.xlu0
      %v3042 = vpop.trf.xlu0
      %v3043 = vpop.trf.xlu0
      %v3044 = vpop.trf.xlu0
      %v3045 = vpop.trf.xlu0
      %v3046 = vpop.trf.xlu0
      %v3047 = vpop.trf.xlu0
      %v3048 = vpop.trf.xlu0
      %v3049 = vpop.trf.xlu0
      %v3050 = vpop.trf.xlu0
      %v3051 = vpop.trf.xlu0
      %v3052 = vpop.trf.xlu0
      %v3053 = vpop.trf.xlu0
      %v3054 = vpop.trf.xlu0
      %v3055 = vpop.trf.xlu0
      %3056 = vxpose.xlu0.b32.start [1/16] %v3008, 128
      %3057 = vxpose.xlu0.b32.cont [2/16] %v3009, 128
      %3058 = vxpose.xlu0.b32.cont [3/16] %v3010, 128
      %3059 = vxpose.xlu0.b32.cont [4/16] %v3011, 128
      %3060 = vxpose.xlu0.b32.cont [5/16] %v3012, 128
      %3061 = vxpose.xlu0.b32.cont [6/16] %v3013, 128
      %3062 = vxpose.xlu0.b32.cont [7/16] %v3014, 128
      %3063 = vxpose.xlu0.b32.cont [8/16] %v3015, 128
      %3064 = vxpose.xlu0.b32.cont [9/16] %v3016, 128
      %3065 = vxpose.xlu0.b32.cont [10/16] %v3017, 128
      %3066 = vxpose.xlu0.b32.cont [11/16] %v3018, 128
      %3067 = vxpose.xlu0.b32.cont [12/16] %v3019, 128
      %3068 = vxpose.xlu0.b32.cont [13/16] %v3020, 128
      %3069 = vxpose.xlu0.b32.cont [14/16] %v3021, 128
      %3070 = vxpose.xlu0.b32.cont [15/16] %v3022, 128
      %3071 = vxpose.xlu0.b32.end [16/16] %v3023, 128
      %v3072 = vpop.trf.xlu0
      %v3073 = vpop.trf.xlu0
      %v3074 = vpop.trf.xlu0
      %v3075 = vpop.trf.xlu0
      %v3076 = vpop.trf.xlu0
      %v3077 = vpop.trf.xlu0
      %v3078 = vpop.trf.xlu0
      %v3079 = vpop.trf.xlu0
      %v3080 = vpop.trf.xlu0
      %v3081 = vpop.trf.xlu0
      %v3082 = vpop.trf.xlu0
      %v3083 = vpop.trf.xlu0
      %v3084 = vpop.trf.xlu0
      %v3085 = vpop.trf.xlu0
      %v3086 = vpop.trf.xlu0
      %v3087 = vpop.trf.xlu0
      %3088 = vst [vmem:[%s197] sm:$0xff] %v3040
      %3089 = vst [vmem:[%s197 + $0x8] sm:$0xff] %v3072
      %p3090 = scmp.lt.s32.totalorder %s15, 1
      %s3091 = scalar_select %p3090, %s15, 1
      %s3092 = smul.addr %s3091, 2
      %s3093 = smul.addr %s3092, 8
      %s3094 = scalar_lea.vmem %s4, %s3093
      // Predicated region
      $region37: #{convolution_block.3} parent=35 // pred_check
        %p3095 = pneg %p122
      $region38: #{convolution_block.3} parent=35 // pred_check_branch
        %3097 = sbr.rel (%p3095) target = $region40
      $region39: #{convolution_block.3} parent=35 // pred_region
        _
      $region40: #{convolution_block.3} parent=35 // pred_fallthru
        _
    $region36: #{convolution_block.3} parent=5 // pred_fallthru
      _
    %p3098 = scmp.le.s32.totalorder 2, %s10
    // Predicated region
    $region41: #{convolution_block.3} parent=5 // pred_check
      %p3099 = pneg %p3098
    $region42: #{convolution_block.3} parent=5 // pred_check_branch
      %3101 = sbr.rel (%p3099) target = $region44
    $region43: #{convolution_block.3} parent=5 // pred_region
      %s3102 = ssub.s32 %s10, 2
      // Predicated region
      $region45: #{convolution_block.3} parent=43 // pred_check
        %p3103 = pneg %p128
      $region46: #{convolution_block.3} parent=43 // pred_check_branch
        %3105 = sbr.rel (%p3103) target = $region48
      $region47: #{convolution_block.3} parent=43 // pred_region
        %p3106 = scmp.lt.s32.totalorder %s16, 1
        %s3107 = scalar_select %p3106, %s16, 1
        %s3108 = smul.addr %s3107, 2
        %s3109 = smul.addr %s3108, 8
        %s3110 = scalar_lea.vmem %s4, %s3109
      $region48: #{convolution_block.3} parent=43 // pred_fallthru
        _
    $region44: #{convolution_block.3} parent=5 // pred_fallthru
      _
  $region6: #{convolution_block.3} parent=0 // loop_footer
    %s14 = sadd.s32 1, %s10
  $region7: #{convolution_block.3} parent=0 // loop_footer_branch
    %9 = sbr.rel target = $region3
  $region8: #{convolution_block.3} parent=0 // loop_exit
    _

</llo_original>
